<compile_context>
chip_gen: v7x
topology: tpu7x:2x2x1
jax: 0.10.0
libtpu: 0.0.40
codegen_flags: <defaults>
</compile_context>

<pallas_src>
import functools

import jax
import jax.numpy as jnp
from jax import lax
from jax.experimental import pallas as pl
from jax.experimental.pallas import tpu as pltpu

_LANE = 128
_SUB = 8


def _round_up(v, m):
    return (v + m - 1) // m * m


def _deeplift_kernel(x_ref, w1_ref, w1t_ref, b1_ref, w2_ref, w2t_ref, b2_ref,
                     z20_ref, p0_ref, sal_ref, accu_ref, z1_acc, m_z1_sc, *, kd):
    f32 = jnp.float32
    bf16 = jnp.bfloat16
    eps = jnp.float32(1e-7)

    k = pl.program_id(1)

    @pl.when(k == 0)
    def _init():
        z1_acc[...] = jnp.zeros_like(z1_acc)

    # ---------------- phase 0: forward accumulation over D tiles -----------
    @pl.when(k < kd)
    def _fwd_accum():
        z1_acc[...] += jnp.dot(x_ref[...], w1_ref[...],
                               preferred_element_type=f32)

    # --------- end of phase 0: finish forward pass, build multipliers ------
    @pl.when(k == kd - 1)
    def _fwd_finalize():
        b1 = b1_ref[...]                                    # (1, H)
        z1 = z1_acc[...] + b1                               # (TB, H)
        a1 = jnp.maximum(z1, 0.0)
        z2 = jnp.dot(a1.astype(bf16), w2_ref[...],
                     preferred_element_type=f32) + b2_ref[...]  # (TB, Cp)
        z2_max = jnp.max(z2, axis=1, keepdims=True)
        ez = jnp.exp(z2 - z2_max)
        p = ez * pl.reciprocal(jnp.sum(ez, axis=1, keepdims=True), approx=True)
        accu_ref[...] = p

        # target = per-row argmax of logits (module's target_cls=None branch).
        n_cls = z2.shape[1]
        iota = lax.broadcasted_iota(jnp.int32, z2.shape, 1)
        first_idx = jnp.min(jnp.where(z2 == z2_max, iota, jnp.int32(n_cls)),
                            axis=1, keepdims=True)
        onehot = (iota == first_idx).astype(f32)            # (TB, Cp)

        # Softmax layer: rescale against the precomputed zero-baseline forward.
        d_z2 = z2 - z20_ref[...]
        d_p = p - p0_ref[...]
        p_t = jnp.sum(onehot * p, axis=1, keepdims=True)
        grad_softmax = p * (onehot - p_t)                   # gradient fallback
        small2 = jnp.abs(d_z2) < eps
        safe_dz2 = jnp.where(small2, 1.0, d_z2)
        m_z2 = jnp.where(small2, grad_softmax, onehot * d_p / safe_dz2)

        # Linear2 backward: pre-transposed w2^T tile => natural MXU matmul.
        m_a1 = jnp.dot(m_z2.astype(bf16), w2t_ref[...],
                       preferred_element_type=f32)          # (TB, H)

        # ReLU rescale with gradient fallback (z1_0 = b1, a1_0 = relu(b1)).
        a1_0 = jnp.maximum(b1, 0.0)
        d_z1 = z1 - b1
        d_a1 = a1 - a1_0
        grad_relu = (z1 > 0.0).astype(f32)
        small1 = jnp.abs(d_z1) < eps
        safe_dz1 = jnp.where(small1, 1.0, d_z1)
        m_z1_sc[...] = jnp.where(small1, m_a1 * grad_relu,
                                 m_a1 * d_a1 / safe_dz1)

    # --------- phase 1: backward / attribution sweep over D tiles ----------
    @pl.when(k >= kd)
    def _bwd_attrib():
        # Linear1 backward: pre-transposed w1^T tile => natural MXU matmul.
        m_x = jnp.dot(m_z1_sc[...].astype(bf16), w1t_ref[...],
                      preferred_element_type=f32)           # (TB, TD)
        # Attribution = multiplier * (x - 0); bf16 store halves the HBM write.
        sal_ref[...] = (m_x * x_ref[...].astype(f32)).astype(sal_ref.dtype)


def _build_call(kernel, B8, D_pad, H_pad, C_pad, TB, TD, nb, kd,
                vmem_limit, cost, single_buffer_residents):
    def const_spec(shape):
        # Grid-invariant small inputs: single-buffer to halve their VMEM.
        if single_buffer_residents:
            return pl.BlockSpec(shape, lambda i, k: (0, 0),
                                pipeline_mode=pl.Buffered(1))
        return pl.BlockSpec(shape, lambda i, k: (0, 0))

    in_specs = [
        # x: streamed in both sweeps (forward accumulate, then attribution).
        pl.BlockSpec((TB, TD), lambda i, k: (i, k % kd)),
        # w1: only needed in phase 0; clamp so phase 1 does not re-DMA it.
        pl.BlockSpec((TD, H_pad), lambda i, k: (jnp.minimum(k, kd - 1), 0)),
        # w1^T: only needed in phase 1; parked on tile 0 during phase 0.
        pl.BlockSpec((H_pad, TD), lambda i, k: (0, jnp.maximum(k - kd, 0))),
        const_spec((1, H_pad)),       # b1
        const_spec((H_pad, C_pad)),   # w2
        const_spec((C_pad, H_pad)),   # w2^T
        const_spec((1, C_pad)),       # b2 (padded classes = -1e30)
        const_spec((1, C_pad)),       # z2_0 (baseline logits)
        const_spec((1, C_pad)),       # p0   (baseline softmax)
    ]
    out_specs = (
        pl.BlockSpec((TB, TD), lambda i, k: (i, jnp.maximum(k - kd, 0))),
        pl.BlockSpec((TB, C_pad), lambda i, k: (i, 0)),
    )
    return pl.pallas_call(
        kernel,
        out_shape=(
            jax.ShapeDtypeStruct((B8, D_pad), jnp.bfloat16),   # saliency (bf16)
            jax.ShapeDtypeStruct((B8, C_pad), jnp.float32),    # softmax probs
        ),
        grid=(nb, 2 * kd),
        in_specs=in_specs,
        out_specs=out_specs,
        scratch_shapes=[
            pltpu.VMEM((TB, H_pad), jnp.float32),   # z1 accumulator
            pltpu.VMEM((TB, H_pad), jnp.float32),   # m_z1 multipliers
        ],
        compiler_params=pltpu.CompilerParams(
            dimension_semantics=("parallel", "arbitrary"),
            vmem_limit_bytes=vmem_limit),
        cost_estimate=cost,
    )


def deeplift_forward(x_nchw, w1, b1, w2, b2, *, max_tb=256, max_td=2048):
    """DeepLIFT (rescale rule, zero baseline) attribution + softmax probs.

    Returns (saliency, bf16, same shape as x; softmax probabilities (B, C), f32).
    """
    f32, bf16 = jnp.float32, jnp.bfloat16
    B = int(x_nchw.shape[0])
    D = int(x_nchw.shape[1] * x_nchw.shape[2] * x_nchw.shape[3])
    H = int(w1.shape[1])
    C = int(w2.shape[1])

    # ---- tile geometry -----------------------------------------------------
    C_pad = _round_up(C, _LANE)
    H_pad = _round_up(H, _LANE)
    D_pad = _round_up(D, _LANE)

    B8 = _round_up(B, _SUB)            # sublane granule only (no TB-pad copy)
    if B8 >= 2 * _SUB:
        # >=2 batch tiles so v7x's two TensorCores both get work; cap at 256
        # rows to fill the 256-wide MXU on v6e/v7x (v5e tiles 128 internally).
        TB = min(max_tb, _round_up(-(-B8 // 2), _SUB))
    else:
        TB = B8
    nb = -(-B8 // TB)                  # last batch tile may be ragged

    if D_pad <= max_td:
        TD = D_pad
    else:
        TD = _LANE
        while TD * 2 <= max_td and D_pad % (TD * 2) == 0:
            TD *= 2
    kd = D_pad // TD

    # ---- operand prep (bf16 matmul operands, f32 biases, zero padding) -----
    x_p = jnp.pad(x_nchw.reshape(B, D).astype(bf16),
                  ((0, B8 - B), (0, D_pad - D)))
    w1_p = jnp.pad(w1.astype(bf16), ((0, D_pad - D), (0, H_pad - H)))
    w1t_p = w1_p.T                                            # (H_pad, D_pad)
    b1_p = jnp.pad(b1.reshape(1, H).astype(f32), ((0, 0), (0, H_pad - H)))
    w2_p = jnp.pad(w2.astype(bf16), ((0, H_pad - H), (0, C_pad - C)))
    w2t_p = w2_p.T                                            # (C_pad, H_pad)
    # Padded classes get a -1e30 bias so they never win max / softmax.
    b2_p = jnp.pad(b2.reshape(1, C).astype(f32), ((0, 0), (0, C_pad - C)),
                   constant_values=-1e30)

    # Baseline (x0 = 0) forward pass, hoisted out of the kernel: depends only
    # on the weights, so compute z2_0 / p0 once here in plain XLA.
    a1_0 = jnp.maximum(b1_p, 0.0)
    z2_0 = jnp.dot(a1_0.astype(bf16), w2_p, preferred_element_type=f32) + b2_p
    ez0 = jnp.exp(z2_0 - jnp.max(z2_0, axis=1, keepdims=True))
    p0 = ez0 / jnp.sum(ez0, axis=1, keepdims=True)

    # ---- cost estimate & explicit VMEM budget -------------------------------
    flops = 4 * B8 * H_pad * (D_pad + C_pad)
    transcendentals = B8 * (C_pad + 1)
    bytes_accessed = (2 * B8 * D_pad * 2            # x read in both sweeps
                      + 2 * nb * D_pad * H_pad * 2  # w1 + w1^T per batch tile
                      + 2 * nb * H_pad * C_pad * 2  # w2 + w2^T
                      + B8 * D_pad * 2              # bf16 saliency write
                      + B8 * C_pad * 4)             # softmax write
    cost = pl.CostEstimate(flops=flops, transcendentals=transcendentals,
                           bytes_accessed=bytes_accessed)

    stream = (2 * TB * TD * 2          # x, double-buffered bf16
              + 2 * TB * TD * 2        # sal, double-buffered bf16
              + 2 * TD * H_pad * 2     # w1 tiles, double-buffered
              + 2 * H_pad * TD * 2     # w1^T tiles, double-buffered
              + 2 * TB * C_pad * 4)    # accu
    resident = 2 * H_pad * C_pad * 2 + 8 * H_pad * 4 + 3 * 8 * C_pad * 4
    scratch = 2 * TB * H_pad * 4
    vmem_limit = int(1.5 * (stream + resident + scratch)) + (8 << 20)
    vmem_limit = max(32 << 20, min(vmem_limit, 56 << 20))   # stay <= v7x VMEM

    kernel = functools.partial(_deeplift_kernel, kd=kd)
    operands = (x_p, w1_p, w1t_p, b1_p, w2_p, w2t_p, b2_p, z2_0, p0)
    try:
        sal_p, accu_p = _build_call(kernel, B8, D_pad, H_pad, C_pad, TB, TD,
                                    nb, kd, vmem_limit, cost,
                                    single_buffer_residents=True)(*operands)
    except Exception:
        # pl.Buffered(1) unsupported on this jax/mosaic build: fall back to
        # default double buffering for the small grid-invariant inputs.
        sal_p, accu_p = _build_call(kernel, B8, D_pad, H_pad, C_pad, TB, TD,
                                    nb, kd, vmem_limit, cost,
                                    single_buffer_residents=False)(*operands)

    sal = sal_p[:B, :D].reshape(x_nchw.shape)      # bf16 attribution
    accu = accu_p[:B, :C]                          # f32 probabilities
    return sal, accu


def _deeplift_ref(x_nchw, w1, b1, w2, b2):
    """Pure-JAX reference of the same algorithm (bf16 casts emulated)."""
    f32, bf16 = jnp.float32, jnp.bfloat16
    eps = 1e-7
    B = x_nchw.shape[0]
    C = w2.shape[1]
    r = lambda a: a.astype(bf16).astype(f32)
    x = r(x_nchw.reshape(B, -1))
    w1f, w2f = r(w1), r(w2)
    b1f = b1.reshape(1, -1).astype(f32)
    b2f = b2.reshape(1, -1).astype(f32)

    z1 = x @ w1f + b1f
    a1 = jnp.maximum(z1, 0.0)
    z2 = r(a1) @ w2f + b2f
    p = jax.nn.softmax(z2, axis=1)

    z1_0 = b1f
    a1_0 = jnp.maximum(z1_0, 0.0)
    z2_0 = r(a1_0) @ w2f + b2f
    p0 = jax.nn.softmax(z2_0, axis=1)

    onehot = jax.nn.one_hot(jnp.argmax(z2, axis=1), C, dtype=f32)
    d_z2, d_p = z2 - z2_0, p - p0
    p_t = jnp.sum(onehot * p, axis=1, keepdims=True)
    grad_sm = p * (onehot - p_t)
    small2 = jnp.abs(d_z2) < eps
    m_z2 = jnp.where(small2, grad_sm,
                     onehot * d_p / jnp.where(small2, 1.0, d_z2))

    m_a1 = r(m_z2) @ w2f.T
    d_z1, d_a1 = z1 - z1_0, a1 - a1_0
    grad_relu = (z1 > 0.0).astype(f32)
    small1 = jnp.abs(d_z1) < eps
    m_z1 = jnp.where(small1, m_a1 * grad_relu,
                     m_a1 * d_a1 / jnp.where(small1, 1.0, d_z1))
    m_x = r(m_z1) @ w1f.T
    sal = m_x * x
    return sal.reshape(x_nchw.shape), p


def _run_case(key, B, C_in, HS, WS, HID, n_cls, **kw):
    kx, k1, k2, k3, k4 = jax.random.split(key, 5)
    D = C_in * HS * WS
    x = jax.random.normal(kx, (B, C_in, HS, WS), dtype=jnp.float32)
    w1 = jax.random.normal(k1, (D, HID), dtype=jnp.float32) * (1.0 / (D ** 0.5))
    b1 = jax.random.normal(k2, (HID,), dtype=jnp.float32) * 0.1
    w2 = jax.random.normal(k3, (HID, n_cls), dtype=jnp.float32) * (1.0 / (HID ** 0.5))
    b2 = jax.random.normal(k4, (n_cls,), dtype=jnp.float32) * 0.1

    sal, accu = deeplift_forward(x, w1, b1, w2, b2, **kw)
    jax.block_until_ready((sal, accu))

    assert sal.shape == x.shape and sal.dtype == jnp.bfloat16
    assert accu.shape == (B, n_cls) and accu.dtype == jnp.float32

    sal_f = sal.astype(jnp.float32)
    assert bool(jnp.all(jnp.isfinite(sal_f)))
    assert bool(jnp.all(jnp.isfinite(accu)))

    sal_ref, accu_ref = _deeplift_ref(x, w1, b1, w2, b2)
    scale = float(jnp.max(jnp.abs(sal_ref))) + 1e-6
    sal_err = float(jnp.max(jnp.abs(sal_f - sal_ref))) / scale
    accu_err = float(jnp.max(jnp.abs(accu - accu_ref)))
    row_sum_err = float(jnp.max(jnp.abs(jnp.sum(accu, axis=1) - 1.0)))
    assert sal_err < 5e-2, f"saliency mismatch: {sal_err}"
    assert accu_err < 1e-2, f"softmax mismatch: {accu_err}"
    assert row_sum_err < 1e-2, f"softmax rows do not sum to 1: {row_sum_err}"


if __name__ == "__main__":
    root = jax.random.PRNGKey(0)
    k_a, k_b = jax.random.split(root, 2)
    # Primary case (shapes implied by the module: NCHW image classifier input).
    # max_td=512 forces KD=2 so the D-accumulation / two-sweep path is exercised.
    _run_case(k_a, B=2, C_in=4, HS=16, WS=16, HID=128, n_cls=10, max_td=512)
    # Secondary case: two batch tiles (megacore split), ragged last batch tile,
    # non-128-multiple H / C / D padding paths, degenerate KD=1.
    _run_case(k_b, B=20, C_in=3, HS=8, WS=8, HID=96, n_cls=7)
    print("KERNEL_OK")
</pallas_src>

<mosaic_0001>
module attributes {stable_mosaic.version = 11 : i64} {
  func.func @_deeplift_kernel(%arg0: i32, %arg1: i32, %arg2: memref<8x512xbf16, #tpu.memory_space<vmem>>, %arg3: memref<512x128xbf16, #tpu.memory_space<vmem>>, %arg4: memref<128x512xbf16, #tpu.memory_space<vmem>>, %arg5: memref<1x128xf32, #tpu.memory_space<vmem>>, %arg6: memref<128x128xbf16, #tpu.memory_space<vmem>>, %arg7: memref<128x128xbf16, #tpu.memory_space<vmem>>, %arg8: memref<1x128xf32, #tpu.memory_space<vmem>>, %arg9: memref<1x128xf32, #tpu.memory_space<vmem>>, %arg10: memref<1x128xf32, #tpu.memory_space<vmem>>, %arg11: memref<8x512xbf16, #tpu.memory_space<vmem>>, %arg12: memref<8x128xf32, #tpu.memory_space<vmem>>, %arg13: memref<8x128xf32, #tpu.memory_space<vmem>>, %arg14: memref<8x128xf32, #tpu.memory_space<vmem>>) attributes {dimension_semantics = [#tpu.dimension_semantics<parallel>, #tpu.dimension_semantics<arbitrary>], iteration_bounds = array<i64: 1, 4>, scalar_prefetch = 0 : i64, scratch_operands = 2 : i64, tpu.core_type = #tpu.core_type<tc>, window_params = [{transform_indices = @transform_0, window_bounds = array<i64: 8, 512>}, {transform_indices = @transform_1, window_bounds = array<i64: 512, 128>}, {transform_indices = @transform_2, window_bounds = array<i64: 128, 512>}, {pipeline_mode = #tpu.pipeline_mode<synchronous>, transform_indices = @transform_3, window_bounds = array<i64: 1, 128>}, {pipeline_mode = #tpu.pipeline_mode<synchronous>, transform_indices = @transform_4, window_bounds = array<i64: 128, 128>}, {pipeline_mode = #tpu.pipeline_mode<synchronous>, transform_indices = @transform_5, window_bounds = array<i64: 128, 128>}, {pipeline_mode = #tpu.pipeline_mode<synchronous>, transform_indices = @transform_6, window_bounds = array<i64: 1, 128>}, {pipeline_mode = #tpu.pipeline_mode<synchronous>, transform_indices = @transform_7, window_bounds = array<i64: 1, 128>}, {pipeline_mode = #tpu.pipeline_mode<synchronous>, transform_indices = @transform_8, window_bounds = array<i64: 1, 128>}, {transform_indices = @transform_9, window_bounds = array<i64: 8, 512>}, {transform_indices = @transform_10, window_bounds = array<i64: 8, 128>}]} {
    %c0_i32 = arith.constant 0 : i32
    %0 = arith.cmpi eq, %arg1, %c0_i32 : i32
    %1 = arith.extui %0 : i1 to i32
    %c0_i32_0 = arith.constant 0 : i32
    %2 = arith.cmpi ne, %1, %c0_i32_0 : i32
    scf.if %2 {
      %cst_5 = arith.constant 0.000000e+00 : f32
      %12 = vector.broadcast %cst_5 : f32 to vector<8x128xf32>
      %c0 = arith.constant 0 : index
      %c0_6 = arith.constant 0 : index
      %13 = vector.load %arg13[%c0, %c0_6] : memref<8x128xf32, #tpu.memory_space<vmem>>, vector<8x128xf32>
      tpu.vector_store %arg13[%c0, %c0_6], %12 {strides = array<i32>} : memref<8x128xf32, #tpu.memory_space<vmem>>, vector<8x128xf32>,
    } else {
    }
    %c2_i32 = arith.constant 2 : i32
    %3 = arith.cmpi slt, %arg1, %c2_i32 : i32
    %4 = arith.extui %3 : i1 to i32
    %c0_i32_1 = arith.constant 0 : i32
    %5 = arith.cmpi ne, %4, %c0_i32_1 : i32
    scf.if %5 {
      %c0 = arith.constant 0 : index
      %c0_5 = arith.constant 0 : index
      %12 = vector.load %arg13[%c0, %c0_5] : memref<8x128xf32, #tpu.memory_space<vmem>>, vector<8x128xf32>
      %c0_6 = arith.constant 0 : index
      %c0_7 = arith.constant 0 : index
      %13 = vector.load %arg2[%c0_6, %c0_7] : memref<8x512xbf16, #tpu.memory_space<vmem>>, vector<8x512xbf16>
      %c0_8 = arith.constant 0 : index
      %c0_9 = arith.constant 0 : index
      %14 = vector.load %arg3[%c0_8, %c0_9] : memref<512x128xbf16, #tpu.memory_space<vmem>>, vector<512x128xbf16>
      %cst_10 = arith.constant dense<0.000000e+00> : vector<8x128xf32>
      %15 = tpu.matmul %13, %14, %cst_10 {dimension_numbers = #tpu.dot_dimension_numbers<[1], [0], [0], [1], [0, 0, 1, 1], [], []>} : vector<8x512xbf16>, vector<512x128xbf16>, vector<8x128xf32> -> vector<8x128xf32>
      %16 = arith.addf %12, %15 : vector<8x128xf32>
      %c0_11 = arith.constant 0 : index
      %c0_12 = arith.constant 0 : index
      %17 = vector.load %arg13[%c0_11, %c0_12] : memref<8x128xf32, #tpu.memory_space<vmem>>, vector<8x128xf32>
      tpu.vector_store %arg13[%c0_11, %c0_12], %16 {strides = array<i32>} : memref<8x128xf32, #tpu.memory_space<vmem>>, vector<8x128xf32>,
    } else {
    }
    %c1_i32 = arith.constant 1 : i32
    %6 = arith.cmpi eq, %arg1, %c1_i32 : i32
    %7 = arith.extui %6 : i1 to i32
    %cst = arith.constant 1.000000e-07 : f32
    %c0_i32_2 = arith.constant 0 : i32
    %8 = arith.cmpi ne, %7, %c0_i32_2 : i32
    scf.if %8 {
      %c0 = arith.constant 0 : index
      %c0_5 = arith.constant 0 : index
      %12 = vector.load %arg5[%c0, %c0_5] : memref<1x128xf32, #tpu.memory_space<vmem>>, vector<1x128xf32>
      %c0_6 = arith.constant 0 : index
      %c0_7 = arith.constant 0 : index
      %13 = vector.load %arg13[%c0_6, %c0_7] : memref<8x128xf32, #tpu.memory_space<vmem>>, vector<8x128xf32>
      %14 = vector.broadcast %12 : vector<1x128xf32> to vector<8x128xf32>
      %15 = arith.addf %13, %14 : vector<8x128xf32>
      %cst_8 = arith.constant 0.000000e+00 : f32
      %16 = vector.broadcast %cst_8 : f32 to vector<8x128xf32>
      %17 = arith.maximumf %15, %16 : vector<8x128xf32>
      %18 = arith.truncf %17 : vector<8x128xf32> to vector<8x128xbf16>
      %c0_9 = arith.constant 0 : index
      %c0_10 = arith.constant 0 : index
      %19 = vector.load %arg6[%c0_9, %c0_10] : memref<128x128xbf16, #tpu.memory_space<vmem>>, vector<128x128xbf16>
      %cst_11 = arith.constant dense<0.000000e+00> : vector<8x128xf32>
      %20 = tpu.matmul %18, %19, %cst_11 {dimension_numbers = #tpu.dot_dimension_numbers<[1], [0], [0], [1], [0, 0, 1, 1], [], []>} : vector<8x128xbf16>, vector<128x128xbf16>, vector<8x128xf32> -> vector<8x128xf32>
      %c0_12 = arith.constant 0 : index
      %c0_13 = arith.constant 0 : index
      %21 = vector.load %arg8[%c0_12, %c0_13] : memref<1x128xf32, #tpu.memory_space<vmem>>, vector<1x128xf32>
      %22 = vector.broadcast %21 : vector<1x128xf32> to vector<8x128xf32>
      %23 = arith.addf %20, %22 : vector<8x128xf32>
      %cst_14 = arith.constant dense<0xFF800000> : vector<8xf32>
      %24 = vector.multi_reduction <maximumf>, %23, %cst_14 [1] : vector<8x128xf32> to vector<8xf32>
      %25 = vector.shape_cast %24 : vector<8xf32> to vector<8x1xf32>
      %26 = vector.broadcast %25 : vector<8x1xf32> to vector<8x128xf32>
      %27 = arith.subf %23, %26 : vector<8x128xf32>
      %28 = math.exp %27 : vector<8x128xf32>
      %cst_15 = arith.constant dense<0.000000e+00> : vector<8xf32>
      %29 = vector.multi_reduction <add>, %28, %cst_15 [1] : vector<8x128xf32> to vector<8xf32>
      %30 = vector.shape_cast %29 : vector<8xf32> to vector<8x1xf32>
      %31 = tpu.reciprocal %30 {approx = true} : vector<8x1xf32> -> vector<8x1xf32>
      %32 = vector.broadcast %31 : vector<8x1xf32> to vector<8x128xf32>
      %33 = arith.mulf %28, %32 : vector<8x128xf32>
      %c0_16 = arith.constant 0 : index
      %c0_17 = arith.constant 0 : index
      %34 = vector.load %arg12[%c0_16, %c0_17] : memref<8x128xf32, #tpu.memory_space<vmem>>, vector<8x128xf32>
      tpu.vector_store %arg12[%c0_16, %c0_17], %33 {strides = array<i32>} : memref<8x128xf32, #tpu.memory_space<vmem>>, vector<8x128xf32>,
      %35 = tpu.iota {dimensions = array<i32: 1>} : vector<8x128xi32>
      %36 = vector.broadcast %25 : vector<8x1xf32> to vector<8x128xf32>
      %37 = arith.cmpf oeq, %23, %36 : vector<8x128xf32>
      %c128_i32 = arith.constant 128 : i32
      %38 = vector.broadcast %c128_i32 : i32 to vector<8x128xi32>
      %39 = arith.select %37, %35, %38 : vector<8x128xi1>, vector<8x128xi32>
      %cst_18 = arith.constant dense<2147483647> : vector<8xi32>
      %40 = vector.multi_reduction <minsi>, %39, %cst_18 [1] : vector<8x128xi32> to vector<8xi32>
      %41 = vector.shape_cast %40 : vector<8xi32> to vector<8x1xi32>
      %42 = vector.broadcast %41 : vector<8x1xi32> to vector<8x128xi32>
      %43 = arith.cmpi eq, %35, %42 : vector<8x128xi32>
      %44 = arith.extui %43 : vector<8x128xi1> to vector<8x128xi32>
      %45 = arith.sitofp %44 : vector<8x128xi32> to vector<8x128xf32>
      %c0_19 = arith.constant 0 : index
      %c0_20 = arith.constant 0 : index
      %46 = vector.load %arg9[%c0_19, %c0_20] : memref<1x128xf32, #tpu.memory_space<vmem>>, vector<1x128xf32>
      %47 = vector.broadcast %46 : vector<1x128xf32> to vector<8x128xf32>
      %48 = arith.subf %23, %47 : vector<8x128xf32>
      %c0_21 = arith.constant 0 : index
      %c0_22 = arith.constant 0 : index
      %49 = vector.load %arg10[%c0_21, %c0_22] : memref<1x128xf32, #tpu.memory_space<vmem>>, vector<1x128xf32>
      %50 = vector.broadcast %49 : vector<1x128xf32> to vector<8x128xf32>
      %51 = arith.subf %33, %50 : vector<8x128xf32>
      %52 = arith.mulf %45, %33 : vector<8x128xf32>
      %cst_23 = arith.constant dense<0.000000e+00> : vector<8xf32>
      %53 = vector.multi_reduction <add>, %52, %cst_23 [1] : vector<8x128xf32> to vector<8xf32>
      %54 = vector.shape_cast %53 : vector<8xf32> to vector<8x1xf32>
      %55 = vector.broadcast %54 : vector<8x1xf32> to vector<8x128xf32>
      %56 = arith.subf %45, %55 : vector<8x128xf32>
      %57 = arith.mulf %33, %56 : vector<8x128xf32>
      %58 = math.absf %48 : vector<8x128xf32>
      %59 = vector.broadcast %cst : f32 to vector<8x128xf32>
      %60 = arith.cmpf olt, %58, %59 : vector<8x128xf32>
      %cst_24 = arith.constant 1.000000e+00 : f32
      %61 = vector.broadcast %cst_24 : f32 to vector<8x128xf32>
      %62 = arith.select %60, %61, %48 : vector<8x128xi1>, vector<8x128xf32>
      %63 = arith.mulf %45, %51 : vector<8x128xf32>
      %64 = arith.divf %63, %62 : vector<8x128xf32>
      %65 = arith.select %60, %57, %64 : vector<8x128xi1>, vector<8x128xf32>
      %66 = arith.truncf %65 : vector<8x128xf32> to vector<8x128xbf16>
      %c0_25 = arith.constant 0 : index
      %c0_26 = arith.constant 0 : index
      %67 = vector.load %arg7[%c0_25, %c0_26] : memref<128x128xbf16, #tpu.memory_space<vmem>>, vector<128x128xbf16>
      %cst_27 = arith.constant dense<0.000000e+00> : vector<8x128xf32>
      %68 = tpu.matmul %66, %67, %cst_27 {dimension_numbers = #tpu.dot_dimension_numbers<[1], [0], [0], [1], [0, 0, 1, 1], [], []>} : vector<8x128xbf16>, vector<128x128xbf16>, vector<8x128xf32> -> vector<8x128xf32>
      %cst_28 = arith.constant 0.000000e+00 : f32
      %69 = vector.broadcast %cst_28 : f32 to vector<1x128xf32>
      %70 = arith.maximumf %12, %69 : vector<1x128xf32>
      %71 = vector.broadcast %12 : vector<1x128xf32> to vector<8x128xf32>
      %72 = arith.subf %15, %71 : vector<8x128xf32>
      %73 = vector.broadcast %70 : vector<1x128xf32> to vector<8x128xf32>
      %74 = arith.subf %17, %73 : vector<8x128xf32>
      %cst_29 = arith.constant 0.000000e+00 : f32
      %75 = vector.broadcast %cst_29 : f32 to vector<8x128xf32>
      %76 = arith.cmpf ogt, %15, %75 : vector<8x128xf32>
      %77 = arith.extui %76 : vector<8x128xi1> to vector<8x128xi32>
      %78 = arith.sitofp %77 : vector<8x128xi32> to vector<8x128xf32>
      %79 = math.absf %72 : vector<8x128xf32>
      %80 = vector.broadcast %cst : f32 to vector<8x128xf32>
      %81 = arith.cmpf olt, %79, %80 : vector<8x128xf32>
      %cst_30 = arith.constant 1.000000e+00 : f32
      %82 = vector.broadcast %cst_30 : f32 to vector<8x128xf32>
      %83 = arith.select %81, %82, %72 : vector<8x128xi1>, vector<8x128xf32>
      %84 = arith.mulf %68, %78 : vector<8x128xf32>
      %85 = arith.mulf %68, %74 : vector<8x128xf32>
      %86 = arith.divf %85, %83 : vector<8x128xf32>
      %87 = arith.select %81, %84, %86 : vector<8x128xi1>, vector<8x128xf32>
      %c0_31 = arith.constant 0 : index
      %c0_32 = arith.constant 0 : index
      %88 = vector.load %arg14[%c0_31, %c0_32] : memref<8x128xf32, #tpu.memory_space<vmem>>, vector<8x128xf32>
      tpu.vector_store %arg14[%c0_31, %c0_32], %87 {strides = array<i32>} : memref<8x128xf32, #tpu.memory_space<vmem>>, vector<8x128xf32>,
    } else {
    }
    %c2_i32_3 = arith.constant 2 : i32
    %9 = arith.cmpi sge, %arg1, %c2_i32_3 : i32
    %10 = arith.extui %9 : i1 to i32
    %c0_i32_4 = arith.constant 0 : i32
    %11 = arith.cmpi ne, %10, %c0_i32_4 : i32
    scf.if %11 {
      %c0 = arith.constant 0 : index
      %c0_5 = arith.constant 0 : index
      %12 = vector.load %arg14[%c0, %c0_5] : memref<8x128xf32, #tpu.memory_space<vmem>>, vector<8x128xf32>
      %13 = arith.truncf %12 : vector<8x128xf32> to vector<8x128xbf16>
      %c0_6 = arith.constant 0 : index
      %c0_7 = arith.constant 0 : index
      %14 = vector.load %arg4[%c0_6, %c0_7] : memref<128x512xbf16, #tpu.memory_space<vmem>>, vector<128x512xbf16>
      %cst_8 = arith.constant dense<0.000000e+00> : vector<8x512xf32>
      %15 = tpu.matmul %13, %14, %cst_8 {dimension_numbers = #tpu.dot_dimension_numbers<[1], [0], [0], [1], [0, 0, 1, 1], [], []>} : vector<8x128xbf16>, vector<128x512xbf16>, vector<8x512xf32> -> vector<8x512xf32>
      %c0_9 = arith.constant 0 : index
      %c0_10 = arith.constant 0 : index
      %16 = vector.load %arg2[%c0_9, %c0_10] : memref<8x512xbf16, #tpu.memory_space<vmem>>, vector<8x512xbf16>
      %17 = arith.extf %16 : vector<8x512xbf16> to vector<8x512xf32>
      %18 = arith.mulf %15, %17 : vector<8x512xf32>
      %19 = arith.truncf %18 : vector<8x512xf32> to vector<8x512xbf16>
      %c0_11 = arith.constant 0 : index
      %c0_12 = arith.constant 0 : index
      %20 = vector.load %arg11[%c0_11, %c0_12] : memref<8x512xbf16, #tpu.memory_space<vmem>>, vector<8x512xbf16>
      tpu.vector_store %arg11[%c0_11, %c0_12], %19 {strides = array<i32>} : memref<8x512xbf16, #tpu.memory_space<vmem>>, vector<8x512xbf16>,
    } else {
    }
    return
  }
  func.func @transform_0(%arg0: i32, %arg1: i32) -> (i32, i32) {
    %c2_i32 = arith.constant 2 : i32
    %c0_i32 = arith.constant 0 : i32
    %0 = arith.cmpi eq, %c2_i32, %c0_i32 : i32
    %c1_i32 = arith.constant 1 : i32
    %1 = arith.select %0, %c1_i32, %c2_i32 : i32
    %2 = arith.remsi %arg1, %1 : i32
    %c0_i32_0 = arith.constant 0 : i32
    %3 = arith.cmpi ne, %2, %c0_i32_0 : i32
    %c0_i32_1 = arith.constant 0 : i32
    %4 = arith.cmpi slt, %2, %c0_i32_1 : i32
    %c0_i32_2 = arith.constant 0 : i32
    %5 = arith.cmpi slt, %1, %c0_i32_2 : i32
    %6 = arith.xori %4, %5 : i1
    %7 = arith.andi %6, %3 : i1
    %8 = arith.addi %2, %1 : i32
    %9 = arith.select %7, %8, %2 : i32
    %c0_i32_3 = arith.constant 0 : i32
    return %arg0, %9 : i32, i32
  }
  func.func @transform_1(%arg0: i32, %arg1: i32) -> (i32, i32) {
    %c1_i32 = arith.constant 1 : i32
    %0 = arith.minsi %arg1, %c1_i32 : i32
    %c0_i32 = arith.constant 0 : i32
    %c0_i32_0 = arith.constant 0 : i32
    return %0, %c0_i32 : i32, i32
  }
  func.func @transform_2(%arg0: i32, %arg1: i32) -> (i32, i32) {
    %c2_i32 = arith.constant 2 : i32
    %0 = arith.subi %arg1, %c2_i32 : i32
    %c0_i32 = arith.constant 0 : i32
    %1 = arith.maxsi %0, %c0_i32 : i32
    %c0_i32_0 = arith.constant 0 : i32
    %c0_i32_1 = arith.constant 0 : i32
    return %c0_i32_0, %1 : i32, i32
  }
  func.func @transform_3(%arg0: i32, %arg1: i32) -> (i32, i32) {
    %c0_i32 = arith.constant 0 : i32
    %c0_i32_0 = arith.constant 0 : i32
    %c0_i32_1 = arith.constant 0 : i32
    return %c0_i32, %c0_i32_0 : i32, i32
  }
  func.func @transform_4(%arg0: i32, %arg1: i32) -> (i32, i32) {
    %c0_i32 = arith.constant 0 : i32
    %c0_i32_0 = arith.constant 0 : i32
    %c0_i32_1 = arith.constant 0 : i32
    return %c0_i32, %c0_i32_0 : i32, i32
  }
  func.func @transform_5(%arg0: i32, %arg1: i32) -> (i32, i32) {
    %c0_i32 = arith.constant 0 : i32
    %c0_i32_0 = arith.constant 0 : i32
    %c0_i32_1 = arith.constant 0 : i32
    return %c0_i32, %c0_i32_0 : i32, i32
  }
  func.func @transform_6(%arg0: i32, %arg1: i32) -> (i32, i32) {
    %c0_i32 = arith.constant 0 : i32
    %c0_i32_0 = arith.constant 0 : i32
    %c0_i32_1 = arith.constant 0 : i32
    return %c0_i32, %c0_i32_0 : i32, i32
  }
  func.func @transform_7(%arg0: i32, %arg1: i32) -> (i32, i32) {
    %c0_i32 = arith.constant 0 : i32
    %c0_i32_0 = arith.constant 0 : i32
    %c0_i32_1 = arith.constant 0 : i32
    return %c0_i32, %c0_i32_0 : i32, i32
  }
  func.func @transform_8(%arg0: i32, %arg1: i32) -> (i32, i32) {
    %c0_i32 = arith.constant 0 : i32
    %c0_i32_0 = arith.constant 0 : i32
    %c0_i32_1 = arith.constant 0 : i32
    return %c0_i32, %c0_i32_0 : i32, i32
  }
  func.func @transform_9(%arg0: i32, %arg1: i32) -> (i32, i32) {
    %c2_i32 = arith.constant 2 : i32
    %0 = arith.subi %arg1, %c2_i32 : i32
    %c0_i32 = arith.constant 0 : i32
    %1 = arith.maxsi %0, %c0_i32 : i32
    %c0_i32_0 = arith.constant 0 : i32
    return %arg0, %1 : i32, i32
  }
  func.func @transform_10(%arg0: i32, %arg1: i32) -> (i32, i32) {
    %c0_i32 = arith.constant 0 : i32
    %c0_i32_0 = arith.constant 0 : i32
    return %arg0, %c0_i32 : i32, i32
  }
}

module attributes {stable_mosaic.version = 11 : i64} {
  func.func @_deeplift_kernel(%arg0: i32, %arg1: i32, %arg2: memref<8x512xbf16, #tpu.memory_space<vmem>>, %arg3: memref<512x128xbf16, #tpu.memory_space<vmem>>, %arg4: memref<128x512xbf16, #tpu.memory_space<vmem>>, %arg5: memref<1x128xf32, #tpu.memory_space<vmem>>, %arg6: memref<128x128xbf16, #tpu.memory_space<vmem>>, %arg7: memref<128x128xbf16, #tpu.memory_space<vmem>>, %arg8: memref<1x128xf32, #tpu.memory_space<vmem>>, %arg9: memref<1x128xf32, #tpu.memory_space<vmem>>, %arg10: memref<1x128xf32, #tpu.memory_space<vmem>>, %arg11: memref<8x512xbf16, #tpu.memory_space<vmem>>, %arg12: memref<8x128xf32, #tpu.memory_space<vmem>>, %arg13: memref<8x128xf32, #tpu.memory_space<vmem>>, %arg14: memref<8x128xf32, #tpu.memory_space<vmem>>) attributes {dimension_semantics = [#tpu.dimension_semantics<parallel>, #tpu.dimension_semantics<arbitrary>], iteration_bounds = array<i64: 1, 4>, scalar_prefetch = 0 : i64, scratch_operands = 2 : i64, tpu.core_type = #tpu.core_type<tc>, window_params = [{transform_indices = @transform_0, window_bounds = array<i64: 8, 512>}, {transform_indices = @transform_1, window_bounds = array<i64: 512, 128>}, {transform_indices = @transform_2, window_bounds = array<i64: 128, 512>}, {pipeline_mode = #tpu.pipeline_mode<synchronous>, transform_indices = @transform_3, window_bounds = array<i64: 1, 128>}, {pipeline_mode = #tpu.pipeline_mode<synchronous>, transform_indices = @transform_4, window_bounds = array<i64: 128, 128>}, {pipeline_mode = #tpu.pipeline_mode<synchronous>, transform_indices = @transform_5, window_bounds = array<i64: 128, 128>}, {pipeline_mode = #tpu.pipeline_mode<synchronous>, transform_indices = @transform_6, window_bounds = array<i64: 1, 128>}, {pipeline_mode = #tpu.pipeline_mode<synchronous>, transform_indices = @transform_7, window_bounds = array<i64: 1, 128>}, {pipeline_mode = #tpu.pipeline_mode<synchronous>, transform_indices = @transform_8, window_bounds = array<i64: 1, 128>}, {transform_indices = @transform_9, window_bounds = array<i64: 8, 512>}, {transform_indices = @transform_10, window_bounds = array<i64: 8, 128>}]} {
    %c0_i32 = arith.constant 0 : i32
    %0 = arith.cmpi eq, %arg1, %c0_i32 : i32
    %1 = arith.extui %0 : i1 to i32
    %c0_i32_0 = arith.constant 0 : i32
    %2 = arith.cmpi ne, %1, %c0_i32_0 : i32
    scf.if %2 {
      %cst_5 = arith.constant 0.000000e+00 : f32
      %12 = vector.broadcast %cst_5 : f32 to vector<8x128xf32>
      %c0 = arith.constant 0 : index
      %c0_6 = arith.constant 0 : index
      %13 = vector.load %arg13[%c0, %c0_6] : memref<8x128xf32, #tpu.memory_space<vmem>>, vector<8x128xf32>
      tpu.vector_store %arg13[%c0, %c0_6], %12 {strides = array<i32>} : memref<8x128xf32, #tpu.memory_space<vmem>>, vector<8x128xf32>,
    } else {
    }
    %c2_i32 = arith.constant 2 : i32
    %3 = arith.cmpi slt, %arg1, %c2_i32 : i32
    %4 = arith.extui %3 : i1 to i32
    %c0_i32_1 = arith.constant 0 : i32
    %5 = arith.cmpi ne, %4, %c0_i32_1 : i32
    scf.if %5 {
      %c0 = arith.constant 0 : index
      %c0_5 = arith.constant 0 : index
      %12 = vector.load %arg13[%c0, %c0_5] : memref<8x128xf32, #tpu.memory_space<vmem>>, vector<8x128xf32>
      %c0_6 = arith.constant 0 : index
      %c0_7 = arith.constant 0 : index
      %13 = vector.load %arg2[%c0_6, %c0_7] : memref<8x512xbf16, #tpu.memory_space<vmem>>, vector<8x512xbf16>
      %c0_8 = arith.constant 0 : index
      %c0_9 = arith.constant 0 : index
      %14 = vector.load %arg3[%c0_8, %c0_9] : memref<512x128xbf16, #tpu.memory_space<vmem>>, vector<512x128xbf16>
      %cst_10 = arith.constant dense<0.000000e+00> : vector<8x128xf32>
      %15 = tpu.matmul %13, %14, %cst_10 {dimension_numbers = #tpu.dot_dimension_numbers<[1], [0], [0], [1], [0, 0, 1, 1], [], []>} : vector<8x512xbf16>, vector<512x128xbf16>, vector<8x128xf32> -> vector<8x128xf32>
      %16 = arith.addf %12, %15 : vector<8x128xf32>
      %c0_11 = arith.constant 0 : index
      %c0_12 = arith.constant 0 : index
      %17 = vector.load %arg13[%c0_11, %c0_12] : memref<8x128xf32, #tpu.memory_space<vmem>>, vector<8x128xf32>
      tpu.vector_store %arg13[%c0_11, %c0_12], %16 {strides = array<i32>} : memref<8x128xf32, #tpu.memory_space<vmem>>, vector<8x128xf32>,
    } else {
    }
    %c1_i32 = arith.constant 1 : i32
    %6 = arith.cmpi eq, %arg1, %c1_i32 : i32
    %7 = arith.extui %6 : i1 to i32
    %cst = arith.constant 1.000000e-07 : f32
    %c0_i32_2 = arith.constant 0 : i32
    %8 = arith.cmpi ne, %7, %c0_i32_2 : i32
    scf.if %8 {
      %c0 = arith.constant 0 : index
      %c0_5 = arith.constant 0 : index
      %12 = vector.load %arg5[%c0, %c0_5] : memref<1x128xf32, #tpu.memory_space<vmem>>, vector<1x128xf32>
      %c0_6 = arith.constant 0 : index
      %c0_7 = arith.constant 0 : index
      %13 = vector.load %arg13[%c0_6, %c0_7] : memref<8x128xf32, #tpu.memory_space<vmem>>, vector<8x128xf32>
      %14 = vector.broadcast %12 : vector<1x128xf32> to vector<8x128xf32>
      %15 = arith.addf %13, %14 : vector<8x128xf32>
      %cst_8 = arith.constant 0.000000e+00 : f32
      %16 = vector.broadcast %cst_8 : f32 to vector<8x128xf32>
      %17 = arith.maximumf %15, %16 : vector<8x128xf32>
      %18 = arith.truncf %17 : vector<8x128xf32> to vector<8x128xbf16>
      %c0_9 = arith.constant 0 : index
      %c0_10 = arith.constant 0 : index
      %19 = vector.load %arg6[%c0_9, %c0_10] : memref<128x128xbf16, #tpu.memory_space<vmem>>, vector<128x128xbf16>
      %cst_11 = arith.constant dense<0.000000e+00> : vector<8x128xf32>
      %20 = tpu.matmul %18, %19, %cst_11 {dimension_numbers = #tpu.dot_dimension_numbers<[1], [0], [0], [1], [0, 0, 1, 1], [], []>} : vector<8x128xbf16>, vector<128x128xbf16>, vector<8x128xf32> -> vector<8x128xf32>
      %c0_12 = arith.constant 0 : index
      %c0_13 = arith.constant 0 : index
      %21 = vector.load %arg8[%c0_12, %c0_13] : memref<1x128xf32, #tpu.memory_space<vmem>>, vector<1x128xf32>
      %22 = vector.broadcast %21 : vector<1x128xf32> to vector<8x128xf32>
      %23 = arith.addf %20, %22 : vector<8x128xf32>
      %cst_14 = arith.constant dense<0xFF800000> : vector<8xf32>
      %24 = vector.multi_reduction <maximumf>, %23, %cst_14 [1] : vector<8x128xf32> to vector<8xf32>
      %25 = vector.shape_cast %24 : vector<8xf32> to vector<8x1xf32>
      %26 = vector.broadcast %25 : vector<8x1xf32> to vector<8x128xf32>
      %27 = arith.subf %23, %26 : vector<8x128xf32>
      %28 = math.exp %27 : vector<8x128xf32>
      %cst_15 = arith.constant dense<0.000000e+00> : vector<8xf32>
      %29 = vector.multi_reduction <add>, %28, %cst_15 [1] : vector<8x128xf32> to vector<8xf32>
      %30 = vector.shape_cast %29 : vector<8xf32> to vector<8x1xf32>
      %31 = tpu.reciprocal %30 {approx = true} : vector<8x1xf32> -> vector<8x1xf32>
      %32 = vector.broadcast %31 : vector<8x1xf32> to vector<8x128xf32>
      %33 = arith.mulf %28, %32 : vector<8x128xf32>
      %c0_16 = arith.constant 0 : index
      %c0_17 = arith.constant 0 : index
      %34 = vector.load %arg12[%c0_16, %c0_17] : memref<8x128xf32, #tpu.memory_space<vmem>>, vector<8x128xf32>
      tpu.vector_store %arg12[%c0_16, %c0_17], %33 {strides = array<i32>} : memref<8x128xf32, #tpu.memory_space<vmem>>, vector<8x128xf32>,
      %35 = tpu.iota {dimensions = array<i32: 1>} : vector<8x128xi32>
      %36 = vector.broadcast %25 : vector<8x1xf32> to vector<8x128xf32>
      %37 = arith.cmpf oeq, %23, %36 : vector<8x128xf32>
      %c128_i32 = arith.constant 128 : i32
      %38 = vector.broadcast %c128_i32 : i32 to vector<8x128xi32>
      %39 = arith.select %37, %35, %38 : vector<8x128xi1>, vector<8x128xi32>
      %cst_18 = arith.constant dense<2147483647> : vector<8xi32>
      %40 = vector.multi_reduction <minsi>, %39, %cst_18 [1] : vector<8x128xi32> to vector<8xi32>
      %41 = vector.shape_cast %40 : vector<8xi32> to vector<8x1xi32>
      %42 = vector.broadcast %41 : vector<8x1xi32> to vector<8x128xi32>
      %43 = arith.cmpi eq, %35, %42 : vector<8x128xi32>
      %44 = arith.extui %43 : vector<8x128xi1> to vector<8x128xi32>
      %45 = arith.sitofp %44 : vector<8x128xi32> to vector<8x128xf32>
      %c0_19 = arith.constant 0 : index
      %c0_20 = arith.constant 0 : index
      %46 = vector.load %arg9[%c0_19, %c0_20] : memref<1x128xf32, #tpu.memory_space<vmem>>, vector<1x128xf32>
      %47 = vector.broadcast %46 : vector<1x128xf32> to vector<8x128xf32>
      %48 = arith.subf %23, %47 : vector<8x128xf32>
      %c0_21 = arith.constant 0 : index
      %c0_22 = arith.constant 0 : index
      %49 = vector.load %arg10[%c0_21, %c0_22] : memref<1x128xf32, #tpu.memory_space<vmem>>, vector<1x128xf32>
      %50 = vector.broadcast %49 : vector<1x128xf32> to vector<8x128xf32>
      %51 = arith.subf %33, %50 : vector<8x128xf32>
      %52 = arith.mulf %45, %33 : vector<8x128xf32>
      %cst_23 = arith.constant dense<0.000000e+00> : vector<8xf32>
      %53 = vector.multi_reduction <add>, %52, %cst_23 [1] : vector<8x128xf32> to vector<8xf32>
      %54 = vector.shape_cast %53 : vector<8xf32> to vector<8x1xf32>
      %55 = vector.broadcast %54 : vector<8x1xf32> to vector<8x128xf32>
      %56 = arith.subf %45, %55 : vector<8x128xf32>
      %57 = arith.mulf %33, %56 : vector<8x128xf32>
      %58 = math.absf %48 : vector<8x128xf32>
      %59 = vector.broadcast %cst : f32 to vector<8x128xf32>
      %60 = arith.cmpf olt, %58, %59 : vector<8x128xf32>
      %cst_24 = arith.constant 1.000000e+00 : f32
      %61 = vector.broadcast %cst_24 : f32 to vector<8x128xf32>
      %62 = arith.select %60, %61, %48 : vector<8x128xi1>, vector<8x128xf32>
      %63 = arith.mulf %45, %51 : vector<8x128xf32>
      %64 = arith.divf %63, %62 : vector<8x128xf32>
      %65 = arith.select %60, %57, %64 : vector<8x128xi1>, vector<8x128xf32>
      %66 = arith.truncf %65 : vector<8x128xf32> to vector<8x128xbf16>
      %c0_25 = arith.constant 0 : index
      %c0_26 = arith.constant 0 : index
      %67 = vector.load %arg7[%c0_25, %c0_26] : memref<128x128xbf16, #tpu.memory_space<vmem>>, vector<128x128xbf16>
      %cst_27 = arith.constant dense<0.000000e+00> : vector<8x128xf32>
      %68 = tpu.matmul %66, %67, %cst_27 {dimension_numbers = #tpu.dot_dimension_numbers<[1], [0], [0], [1], [0, 0, 1, 1], [], []>} : vector<8x128xbf16>, vector<128x128xbf16>, vector<8x128xf32> -> vector<8x128xf32>
      %cst_28 = arith.constant 0.000000e+00 : f32
      %69 = vector.broadcast %cst_28 : f32 to vector<1x128xf32>
      %70 = arith.maximumf %12, %69 : vector<1x128xf32>
      %71 = vector.broadcast %12 : vector<1x128xf32> to vector<8x128xf32>
      %72 = arith.subf %15, %71 : vector<8x128xf32>
      %73 = vector.broadcast %70 : vector<1x128xf32> to vector<8x128xf32>
      %74 = arith.subf %17, %73 : vector<8x128xf32>
      %cst_29 = arith.constant 0.000000e+00 : f32
      %75 = vector.broadcast %cst_29 : f32 to vector<8x128xf32>
      %76 = arith.cmpf ogt, %15, %75 : vector<8x128xf32>
      %77 = arith.extui %76 : vector<8x128xi1> to vector<8x128xi32>
      %78 = arith.sitofp %77 : vector<8x128xi32> to vector<8x128xf32>
      %79 = math.absf %72 : vector<8x128xf32>
      %80 = vector.broadcast %cst : f32 to vector<8x128xf32>
      %81 = arith.cmpf olt, %79, %80 : vector<8x128xf32>
      %cst_30 = arith.constant 1.000000e+00 : f32
      %82 = vector.broadcast %cst_30 : f32 to vector<8x128xf32>
      %83 = arith.select %81, %82, %72 : vector<8x128xi1>, vector<8x128xf32>
      %84 = arith.mulf %68, %78 : vector<8x128xf32>
      %85 = arith.mulf %68, %74 : vector<8x128xf32>
      %86 = arith.divf %85, %83 : vector<8x128xf32>
      %87 = arith.select %81, %84, %86 : vector<8x128xi1>, vector<8x128xf32>
      %c0_31 = arith.constant 0 : index
      %c0_32 = arith.constant 0 : index
      %88 = vector.load %arg14[%c0_31, %c0_32] : memref<8x128xf32, #tpu.memory_space<vmem>>, vector<8x128xf32>
      tpu.vector_store %arg14[%c0_31, %c0_32], %87 {strides = array<i32>} : memref<8x128xf32, #tpu.memory_space<vmem>>, vector<8x128xf32>,
    } else {
    }
    %c2_i32_3 = arith.constant 2 : i32
    %9 = arith.cmpi sge, %arg1, %c2_i32_3 : i32
    %10 = arith.extui %9 : i1 to i32
    %c0_i32_4 = arith.constant 0 : i32
    %11 = arith.cmpi ne, %10, %c0_i32_4 : i32
    scf.if %11 {
      %c0 = arith.constant 0 : index
      %c0_5 = arith.constant 0 : index
      %12 = vector.load %arg14[%c0, %c0_5] : memref<8x128xf32, #tpu.memory_space<vmem>>, vector<8x128xf32>
      %13 = arith.truncf %12 : vector<8x128xf32> to vector<8x128xbf16>
      %c0_6 = arith.constant 0 : index
      %c0_7 = arith.constant 0 : index
      %14 = vector.load %arg4[%c0_6, %c0_7] : memref<128x512xbf16, #tpu.memory_space<vmem>>, vector<128x512xbf16>
      %cst_8 = arith.constant dense<0.000000e+00> : vector<8x512xf32>
      %15 = tpu.matmul %13, %14, %cst_8 {dimension_numbers = #tpu.dot_dimension_numbers<[1], [0], [0], [1], [0, 0, 1, 1], [], []>} : vector<8x128xbf16>, vector<128x512xbf16>, vector<8x512xf32> -> vector<8x512xf32>
      %c0_9 = arith.constant 0 : index
      %c0_10 = arith.constant 0 : index
      %16 = vector.load %arg2[%c0_9, %c0_10] : memref<8x512xbf16, #tpu.memory_space<vmem>>, vector<8x512xbf16>
      %17 = arith.extf %16 : vector<8x512xbf16> to vector<8x512xf32>
      %18 = arith.mulf %15, %17 : vector<8x512xf32>
      %19 = arith.truncf %18 : vector<8x512xf32> to vector<8x512xbf16>
      %c0_11 = arith.constant 0 : index
      %c0_12 = arith.constant 0 : index
      %20 = vector.load %arg11[%c0_11, %c0_12] : memref<8x512xbf16, #tpu.memory_space<vmem>>, vector<8x512xbf16>
      tpu.vector_store %arg11[%c0_11, %c0_12], %19 {strides = array<i32>} : memref<8x512xbf16, #tpu.memory_space<vmem>>, vector<8x512xbf16>,
    } else {
    }
    return
  }
  func.func @transform_0(%arg0: i32, %arg1: i32) -> (i32, i32) {
    %c2_i32 = arith.constant 2 : i32
    %c0_i32 = arith.constant 0 : i32
    %0 = arith.cmpi eq, %c2_i32, %c0_i32 : i32
    %c1_i32 = arith.constant 1 : i32
    %1 = arith.select %0, %c1_i32, %c2_i32 : i32
    %2 = arith.remsi %arg1, %1 : i32
    %c0_i32_0 = arith.constant 0 : i32
    %3 = arith.cmpi ne, %2, %c0_i32_0 : i32
    %c0_i32_1 = arith.constant 0 : i32
    %4 = arith.cmpi slt, %2, %c0_i32_1 : i32
    %c0_i32_2 = arith.constant 0 : i32
    %5 = arith.cmpi slt, %1, %c0_i32_2 : i32
    %6 = arith.xori %4, %5 : i1
    %7 = arith.andi %6, %3 : i1
    %8 = arith.addi %2, %1 : i32
    %9 = arith.select %7, %8, %2 : i32
    %c0_i32_3 = arith.constant 0 : i32
    return %arg0, %9 : i32, i32
  }
  func.func @transform_1(%arg0: i32, %arg1: i32) -> (i32, i32) {
    %c1_i32 = arith.constant 1 : i32
    %0 = arith.minsi %arg1, %c1_i32 : i32
    %c0_i32 = arith.constant 0 : i32
    %c0_i32_0 = arith.constant 0 : i32
    return %0, %c0_i32 : i32, i32
  }
  func.func @transform_2(%arg0: i32, %arg1: i32) -> (i32, i32) {
    %c2_i32 = arith.constant 2 : i32
    %0 = arith.subi %arg1, %c2_i32 : i32
    %c0_i32 = arith.constant 0 : i32
    %1 = arith.maxsi %0, %c0_i32 : i32
    %c0_i32_0 = arith.constant 0 : i32
    %c0_i32_1 = arith.constant 0 : i32
    return %c0_i32_0, %1 : i32, i32
  }
  func.func @transform_3(%arg0: i32, %arg1: i32) -> (i32, i32) {
    %c0_i32 = arith.constant 0 : i32
    %c0_i32_0 = arith.constant 0 : i32
    %c0_i32_1 = arith.constant 0 : i32
    return %c0_i32, %c0_i32_0 : i32, i32
  }
  func.func @transform_4(%arg0: i32, %arg1: i32) -> (i32, i32) {
    %c0_i32 = arith.constant 0 : i32
    %c0_i32_0 = arith.constant 0 : i32
    %c0_i32_1 = arith.constant 0 : i32
    return %c0_i32, %c0_i32_0 : i32, i32
  }
  func.func @transform_5(%arg0: i32, %arg1: i32) -> (i32, i32) {
    %c0_i32 = arith.constant 0 : i32
    %c0_i32_0 = arith.constant 0 : i32
    %c0_i32_1 = arith.constant 0 : i32
    return %c0_i32, %c0_i32_0 : i32, i32
  }
  func.func @transform_6(%arg0: i32, %arg1: i32) -> (i32, i32) {
    %c0_i32 = arith.constant 0 : i32
    %c0_i32_0 = arith.constant 0 : i32
    %c0_i32_1 = arith.constant 0 : i32
    return %c0_i32, %c0_i32_0 : i32, i32
  }
  func.func @transform_7(%arg0: i32, %arg1: i32) -> (i32, i32) {
    %c0_i32 = arith.constant 0 : i32
    %c0_i32_0 = arith.constant 0 : i32
    %c0_i32_1 = arith.constant 0 : i32
    return %c0_i32, %c0_i32_0 : i32, i32
  }
  func.func @transform_8(%arg0: i32, %arg1: i32) -> (i32, i32) {
    %c0_i32 = arith.constant 0 : i32
    %c0_i32_0 = arith.constant 0 : i32
    %c0_i32_1 = arith.constant 0 : i32
    return %c0_i32, %c0_i32_0 : i32, i32
  }
  func.func @transform_9(%arg0: i32, %arg1: i32) -> (i32, i32) {
    %c2_i32 = arith.constant 2 : i32
    %0 = arith.subi %arg1, %c2_i32 : i32
    %c0_i32 = arith.constant 0 : i32
    %1 = arith.maxsi %0, %c0_i32 : i32
    %c0_i32_0 = arith.constant 0 : i32
    return %arg0, %1 : i32, i32
  }
  func.func @transform_10(%arg0: i32, %arg1: i32) -> (i32, i32) {
    %c0_i32 = arith.constant 0 : i32
    %c0_i32_0 = arith.constant 0 : i32
    return %arg0, %c0_i32 : i32, i32
  }
}

</mosaic_0001>

<llo_original>
// kernel: tpu_custom_call.1
$region0: #{tpu_custom_call.1}
  #allocation0 [shape = 'u32[]', space=smem, size = 0x4, offset = 0x4, fixed_abs, tag = 'smem constant byte address 0x4 - core index']
  #allocation1 [shape = 'u32[144,128]{1,0:T(1,128)}', space=vmem, size = 0x12000, scoped, tag = 'internal scratch']
  #allocation2 [shape = 'f32[8,128]{1,0:T(8,128)}', space=vmem, size = 0x1000, scoped, tag = 'scratch operand']
  #allocation3 [shape = 'f32[8,128]{1,0:T(8,128)}', space=vmem, size = 0x1000, scoped, tag = 'scratch operand']
  %s0 = inlined_call_operand.hbm [shape: bf16[8,1024], index: 0, kind: input, shape index: {}]
  %s1 = inlined_call_operand.hbm [shape: bf16[1024,128], index: 1, kind: input, shape index: {}]
  %s2 = inlined_call_operand.hbm [shape: bf16[128,1024], index: 2, kind: input, shape index: {}]
  %s3 = inlined_call_operand.vmem [shape: f32[1,128], index: 3, kind: input, shape index: {}]
  %s4 = inlined_call_operand.hbm [shape: bf16[128,128], index: 4, kind: input, shape index: {}]
  %s5 = inlined_call_operand.hbm [shape: bf16[128,128], index: 5, kind: input, shape index: {}]
  %s6 = inlined_call_operand.vmem [shape: f32[1,128], index: 6, kind: input, shape index: {}]
  %s7 = inlined_call_operand.vmem [shape: f32[1,128], index: 7, kind: input, shape index: {}]
  %s8 = inlined_call_operand.vmem [shape: f32[1,128], index: 8, kind: input, shape index: {}]
  %s9 = inlined_call_operand.hbm [shape: bf16[8,1024], index: 9, kind: output, shape index: {0}]
  %s10 = inlined_call_operand.hbm [shape: f32[8,128], index: 10, kind: output, shape index: {1}]
  %11 = xla_tuple %s9, %s10
  %s12 = sld [smem:[#allocation0]]
  $region113: #{tpu_custom_call.1} parent=0
    _
  %s14 = ssub.s32 1, %s12
  %s15 = scalar_select 0, %s14, %s12
  $region1: #{tpu_custom_call.1} parent=0
    #allocation4 [shape = 'u8[16384]{0}', space=vmem, size = 0x4000, scoped, tag = 'input window, operand 0']
    #allocation5 [shape = 's32[2]{0}', space=sflag, size = 0x8, scoped, tag = 'scoped memory for tpu_custom_call.1']
    #allocation6 [shape = 's32[2]{0}', space=sflag, size = 0x8, scoped, tag = 'scoped memory for tpu_custom_call.1']
    #allocation7 [shape = 'u8[262144]{0}', space=vmem, size = 0x40000, scoped, tag = 'input window, operand 1']
    #allocation8 [shape = 's32[2]{0}', space=sflag, size = 0x8, scoped, tag = 'scoped memory for tpu_custom_call.1']
    #allocation9 [shape = 'u8[262144]{0}', space=vmem, size = 0x40000, scoped, tag = 'input window, operand 2']
    #allocation10 [shape = 'u8[32768]{0}', space=vmem, size = 0x8000, scoped, tag = 'input window, operand 4, single buffered']
    #allocation11 [shape = 's32[1]{0}', space=sflag, size = 0x4, scoped, tag = 'scoped memory for tpu_custom_call.1']
    #allocation12 [shape = 'u8[32768]{0}', space=vmem, size = 0x8000, scoped, tag = 'input window, operand 5, single buffered']
    #allocation13 [shape = 'u8[16384]{0}', space=vmem, size = 0x4000, scoped, tag = 'output window, operand 0']
    #allocation14 [shape = 'u8[4096]{0}', space=vmem, size = 0x1000, scoped, tag = 'output window, operand 1, single buffered']
    #allocation15 [shape = 's32[1]{0}', space=sflag, size = 0x4, scoped, tag = 'scoped memory for tpu_custom_call.1']
    %16 = vsyncpa [#allocation5], 0
    %s17 = scalar_lea.sflag [#allocation5], 1
    %18 = vsyncpa %s17, 0
    %19 = vsyncpa [#allocation8], 0
    %s20 = scalar_lea.sflag [#allocation8], 1
    %21 = vsyncpa %s20, 0
    %22 = vsyncpa [#allocation11], 0
    %23 = vsyncpa [#allocation6], 0
    %s24 = scalar_lea.sflag [#allocation6], 1
    %25 = vsyncpa %s24, 0
    %26 = vsyncpa [#allocation15], 0
    loop: start=0, step=1, limit=6
    $region2: #{tpu_custom_call.1} parent=1 // loop_pre_header
      _
    $region3: #{tpu_custom_call.1} parent=1 // loop_header
      %s28 = sphi 0, %s32
      %p29 = scmp.ge.s32.totalorder %s28, 6
      %s35 = sphi 0, %s47
      %s36 = sphi 0, %s43
      %s37 = sphi 0, %s35
      %s38 = sphi 0, %s36
      %s39 = sphi 0, %s37
      %s40 = sphi 0, %s38
      %s76 = sphi 0, %s78
      %s79 = sphi 0, %s76
      %s80 = sphi 0, %s79
      %s96 = sphi 0, %s80
      %s106 = sphi 0, %s108
      %s109 = sphi 0, %s106
      %s110 = sphi 0, %s109
      %s126 = sphi 0, %s110
      %s138 = sphi 0, %s140
      %s141 = sphi 0, %s138
      %s142 = sphi 0, %s141
      %s158 = sphi 0, %s142
      %s162 = sphi 0, %s162
      %s164 = sphi 0, %s162
      %s165 = sphi 0, %s164
      %s179 = sphi 0, %s165
      %s183 = sphi 0, %s183
      %s185 = sphi 0, %s183
      %s186 = sphi 0, %s185
      %s200 = sphi 0, %s186
      %s204 = sphi 0, %s204
      %s206 = sphi 0, %s204
      %s207 = sphi 0, %s206
      %s221 = sphi 0, %s207
      %s225 = sphi 0, %s225
      %s227 = sphi 0, %s225
      %s228 = sphi 0, %s227
      %s242 = sphi 0, %s228
      %s246 = sphi 0, %s246
      %s248 = sphi 0, %s246
      %s249 = sphi 0, %s248
      %s263 = sphi 0, %s249
      %s267 = sphi 0, %s267
      %s269 = sphi 0, %s267
      %s270 = sphi 0, %s269
      %s284 = sphi 0, %s270
      %s298 = sphi 0, %s300
      %s301 = sphi 0, %s298
      %s302 = sphi 0, %s301
      %s318 = sphi 0, %s302
      %s324 = sphi 0, %s326
      %s327 = sphi 0, %s324
      %s328 = sphi 0, %s327
      %s344 = sphi 0, %s328
    $region4: #{tpu_custom_call.1} parent=1 // loop_header_branch
      %31 = sbr.rel (%p29) target = $region8
    $region5: #{tpu_custom_call.1} parent=1 // loop_body
      %s33 = ssub.s32 %s28, 1
      %s34 = ssub.s32 %s28, 2
      %s41 = sadd.s32 1, %s36
      %p42 = scmp.ge.s32.totalorder %s41, 4
      %s43 = scalar_select %p42, 0, %s41
      %s44 = sadd.s32 1, %s35
      %s45 = scalar_select %p42, %s44, %s35
      %p46 = scmp.ge.s32.totalorder %s45, 1
      %s47 = scalar_select %p46, 0, %s45
      %p48 = scmp.lt.s32.totalorder %s36, 0
      %s49 = ssub.s32 0, %s36
      %s50 = scalar_select %p48, %s49, %s36
      %s51 = sand.u32 %s50, 1
      %s52 = ssub.s32 0, %s51
      %s53 = scalar_select %p48, %s52, %s51
      %p54 = scmp.ne.s32.totalorder %s53, 0
      %p55 = scmp.lt.s32.totalorder %s53, 0
      %p56 = pnand %p55, %p54
      %p57 = pneg %p56
      %s58 = sadd.s32 %s53, 2
      %s59 = scalar_select %p57, %s58, %s53
      %p60 = scmp.lt.s32.totalorder %s43, 0
      %s61 = ssub.s32 0, %s43
      %s62 = scalar_select %p60, %s61, %s43
      %s63 = sand.u32 %s62, 1
      %s64 = ssub.s32 0, %s63
      %s65 = scalar_select %p60, %s64, %s63
      %p66 = scmp.ne.s32.totalorder %s65, 0
      %p67 = scmp.lt.s32.totalorder %s65, 0
      %p68 = pnand %p67, %p66
      %p69 = pneg %p68
      %s70 = sadd.s32 %s65, 2
      %s71 = scalar_select %p69, %s70, %s65
      %s72 = ssub.s32 %s35, %s47
      %s73 = ssub.s32 %s59, %s71
      %s74 = sor.u32 %s72, %s73
      %p75 = scmp.eq.s32.totalorder %s74, 0
      %s77 = sadd.s32 %s76, 1
      %s78 = scalar_select %p75, %s76, %s77
      %p81 = pneg %p75
      %p82 = scmp.eq.s32.totalorder %s28, 3
      %p83 = por %p81, %p82
      %p84 = scmp.ne.s32.totalorder %s76, %s79
      %p85 = scmp.eq.s32.totalorder %s28, 0
      %p86 = por %p84, %p85
      %p87 = scmp.ne.s32.totalorder %s76, %s79
      %p88 = scmp.eq.s32.totalorder %s33, 3
      %p89 = por %p87, %p88
      %p90 = scmp.ne.s32.totalorder %s79, %s80
      %p91 = scmp.eq.s32.totalorder %s33, 0
      %p92 = por %p90, %p91
      %p93 = scmp.ne.s32.totalorder %s79, %s80
      %p94 = scmp.eq.s32.totalorder %s34, 3
      %p95 = por %p93, %p94
      %p97 = scmp.ne.s32.totalorder %s80, %s96
      %p98 = scmp.eq.s32.totalorder %s34, 0
      %p99 = por %p97, %p98
      %p100 = scmp.lt.s32.totalorder %s36, 1
      %s101 = scalar_select %p100, %s36, 1
      %p102 = scmp.lt.s32.totalorder %s43, 1
      %s103 = scalar_select %p102, %s43, 1
      %s104 = ssub.s32 %s101, %s103
      %p105 = scmp.eq.s32.totalorder %s104, 0
      %s107 = sadd.s32 %s106, 1
      %s108 = scalar_select %p105, %s106, %s107
      %p111 = pneg %p105
      %p112 = scmp.eq.s32.totalorder %s28, 3
      %p113 = por %p111, %p112
      %p114 = scmp.ne.s32.totalorder %s106, %s109
      %p115 = scmp.eq.s32.totalorder %s28, 0
      %p116 = por %p114, %p115
      %p117 = scmp.ne.s32.totalorder %s106, %s109
      %p118 = scmp.eq.s32.totalorder %s33, 3
      %p119 = por %p117, %p118
      %p120 = scmp.ne.s32.totalorder %s109, %s110
      %p121 = scmp.eq.s32.totalorder %s33, 0
      %p122 = por %p120, %p121
      %p123 = scmp.ne.s32.totalorder %s109, %s110
      %p124 = scmp.eq.s32.totalorder %s34, 3
      %p125 = por %p123, %p124
      %p127 = scmp.ne.s32.totalorder %s110, %s126
      %p128 = scmp.eq.s32.totalorder %s34, 0
      %p129 = por %p127, %p128
      %s130 = ssub.s32 %s36, 2
      %p131 = scmp.gt.s32.totalorder %s130, 0
      %s132 = scalar_select %p131, %s130, 0
      %s133 = ssub.s32 %s43, 2
      %p134 = scmp.gt.s32.totalorder %s133, 0
      %s135 = scalar_select %p134, %s133, 0
      %s136 = ssub.s32 %s132, %s135
      %p137 = scmp.eq.s32.totalorder %s136, 0
      %s139 = sadd.s32 %s138, 1
      %s140 = scalar_select %p137, %s138, %s139
      %p143 = pneg %p137
      %p144 = scmp.eq.s32.totalorder %s28, 3
      %p145 = por %p143, %p144
      %p146 = scmp.ne.s32.totalorder %s138, %s141
      %p147 = scmp.eq.s32.totalorder %s28, 0
      %p148 = por %p146, %p147
      %p149 = scmp.ne.s32.totalorder %s138, %s141
      %p150 = scmp.eq.s32.totalorder %s33, 3
      %p151 = por %p149, %p150
      %p152 = scmp.ne.s32.totalorder %s141, %s142
      %p153 = scmp.eq.s32.totalorder %s33, 0
      %p154 = por %p152, %p153
      %p155 = scmp.ne.s32.totalorder %s141, %s142
      %p156 = scmp.eq.s32.totalorder %s34, 3
      %p157 = por %p155, %p156
      %p159 = scmp.ne.s32.totalorder %s142, %s158
      %p160 = scmp.eq.s32.totalorder %s34, 0
      %p161 = por %p159, %p160
      %s163 = sadd.s32 %s162, 1
      %p166 = scmp.eq.s32.totalorder %s28, 3
      %p167 = scmp.ne.s32.totalorder %s162, %s164
      %p168 = scmp.eq.s32.totalorder %s28, 0
      %p169 = por %p167, %p168
      %p170 = scmp.ne.s32.totalorder %s162, %s164
      %p171 = scmp.eq.s32.totalorder %s33, 3
      %p172 = por %p170, %p171
      %p173 = scmp.ne.s32.totalorder %s164, %s165
      %p174 = scmp.eq.s32.totalorder %s33, 0
      %p175 = por %p173, %p174
      %p176 = scmp.ne.s32.totalorder %s164, %s165
      %p177 = scmp.eq.s32.totalorder %s34, 3
      %p178 = por %p176, %p177
      %p180 = scmp.ne.s32.totalorder %s165, %s179
      %p181 = scmp.eq.s32.totalorder %s34, 0
      %p182 = por %p180, %p181
      %s184 = sadd.s32 %s183, 1
      %p187 = scmp.eq.s32.totalorder %s28, 3
      %p188 = scmp.ne.s32.totalorder %s183, %s185
      %p189 = scmp.eq.s32.totalorder %s28, 0
      %p190 = por %p188, %p189
      %p191 = scmp.ne.s32.totalorder %s183, %s185
      %p192 = scmp.eq.s32.totalorder %s33, 3
      %p193 = por %p191, %p192
      %p194 = scmp.ne.s32.totalorder %s185, %s186
      %p195 = scmp.eq.s32.totalorder %s33, 0
      %p196 = por %p194, %p195
      %p197 = scmp.ne.s32.totalorder %s185, %s186
      %p198 = scmp.eq.s32.totalorder %s34, 3
      %p199 = por %p197, %p198
      %p201 = scmp.ne.s32.totalorder %s186, %s200
      %p202 = scmp.eq.s32.totalorder %s34, 0
      %p203 = por %p201, %p202
      %s205 = sadd.s32 %s204, 1
      %p208 = scmp.eq.s32.totalorder %s28, 3
      %p209 = scmp.ne.s32.totalorder %s204, %s206
      %p210 = scmp.eq.s32.totalorder %s28, 0
      %p211 = por %p209, %p210
      %p212 = scmp.ne.s32.totalorder %s204, %s206
      %p213 = scmp.eq.s32.totalorder %s33, 3
      %p214 = por %p212, %p213
      %p215 = scmp.ne.s32.totalorder %s206, %s207
      %p216 = scmp.eq.s32.totalorder %s33, 0
      %p217 = por %p215, %p216
      %p218 = scmp.ne.s32.totalorder %s206, %s207
      %p219 = scmp.eq.s32.totalorder %s34, 3
      %p220 = por %p218, %p219
      %p222 = scmp.ne.s32.totalorder %s207, %s221
      %p223 = scmp.eq.s32.totalorder %s34, 0
      %p224 = por %p222, %p223
      %s226 = sadd.s32 %s225, 1
      %p229 = scmp.eq.s32.totalorder %s28, 3
      %p230 = scmp.ne.s32.totalorder %s225, %s227
      %p231 = scmp.eq.s32.totalorder %s28, 0
      %p232 = por %p230, %p231
      %p233 = scmp.ne.s32.totalorder %s225, %s227
      %p234 = scmp.eq.s32.totalorder %s33, 3
      %p235 = por %p233, %p234
      %p236 = scmp.ne.s32.totalorder %s227, %s228
      %p237 = scmp.eq.s32.totalorder %s33, 0
      %p238 = por %p236, %p237
      %p239 = scmp.ne.s32.totalorder %s227, %s228
      %p240 = scmp.eq.s32.totalorder %s34, 3
      %p241 = por %p239, %p240
      %p243 = scmp.ne.s32.totalorder %s228, %s242
      %p244 = scmp.eq.s32.totalorder %s34, 0
      %p245 = por %p243, %p244
      %s247 = sadd.s32 %s246, 1
      %p250 = scmp.eq.s32.totalorder %s28, 3
      %p251 = scmp.ne.s32.totalorder %s246, %s248
      %p252 = scmp.eq.s32.totalorder %s28, 0
      %p253 = por %p251, %p252
      %p254 = scmp.ne.s32.totalorder %s246, %s248
      %p255 = scmp.eq.s32.totalorder %s33, 3
      %p256 = por %p254, %p255
      %p257 = scmp.ne.s32.totalorder %s248, %s249
      %p258 = scmp.eq.s32.totalorder %s33, 0
      %p259 = por %p257, %p258
      %p260 = scmp.ne.s32.totalorder %s248, %s249
      %p261 = scmp.eq.s32.totalorder %s34, 3
      %p262 = por %p260, %p261
      %p264 = scmp.ne.s32.totalorder %s249, %s263
      %p265 = scmp.eq.s32.totalorder %s34, 0
      %p266 = por %p264, %p265
      %s268 = sadd.s32 %s267, 1
      %p271 = scmp.eq.s32.totalorder %s28, 3
      %p272 = scmp.ne.s32.totalorder %s267, %s269
      %p273 = scmp.eq.s32.totalorder %s28, 0
      %p274 = por %p272, %p273
      %p275 = scmp.ne.s32.totalorder %s267, %s269
      %p276 = scmp.eq.s32.totalorder %s33, 3
      %p277 = por %p275, %p276
      %p278 = scmp.ne.s32.totalorder %s269, %s270
      %p279 = scmp.eq.s32.totalorder %s33, 0
      %p280 = por %p278, %p279
      %p281 = scmp.ne.s32.totalorder %s269, %s270
      %p282 = scmp.eq.s32.totalorder %s34, 3
      %p283 = por %p281, %p282
      %p285 = scmp.ne.s32.totalorder %s270, %s284
      %p286 = scmp.eq.s32.totalorder %s34, 0
      %p287 = por %p285, %p286
      %s288 = ssub.s32 %s36, 2
      %p289 = scmp.gt.s32.totalorder %s288, 0
      %s290 = scalar_select %p289, %s288, 0
      %s291 = ssub.s32 %s43, 2
      %p292 = scmp.gt.s32.totalorder %s291, 0
      %s293 = scalar_select %p292, %s291, 0
      %s294 = ssub.s32 %s35, %s47
      %s295 = ssub.s32 %s290, %s293
      %s296 = sor.u32 %s294, %s295
      %p297 = scmp.eq.s32.totalorder %s296, 0
      %s299 = sadd.s32 %s298, 1
      %s300 = scalar_select %p297, %s298, %s299
      %p303 = pneg %p297
      %p304 = scmp.eq.s32.totalorder %s28, 3
      %p305 = por %p303, %p304
      %p306 = scmp.ne.s32.totalorder %s298, %s301
      %p307 = scmp.eq.s32.totalorder %s28, 0
      %p308 = por %p306, %p307
      %p309 = scmp.ne.s32.totalorder %s298, %s301
      %p310 = scmp.eq.s32.totalorder %s33, 3
      %p311 = por %p309, %p310
      %p312 = scmp.ne.s32.totalorder %s301, %s302
      %p313 = scmp.eq.s32.totalorder %s33, 0
      %p314 = por %p312, %p313
      %p315 = scmp.ne.s32.totalorder %s301, %s302
      %p316 = scmp.eq.s32.totalorder %s34, 3
      %p317 = por %p315, %p316
      %p319 = scmp.ne.s32.totalorder %s302, %s318
      %p320 = scmp.eq.s32.totalorder %s34, 0
      %p321 = por %p319, %p320
      %s322 = ssub.s32 %s35, %s47
      %p323 = scmp.eq.s32.totalorder %s322, 0
      %s325 = sadd.s32 %s324, 1
      %s326 = scalar_select %p323, %s324, %s325
      %p329 = pneg %p323
      %p330 = scmp.eq.s32.totalorder %s28, 3
      %p331 = por %p329, %p330
      %p332 = scmp.ne.s32.totalorder %s324, %s327
      %p333 = scmp.eq.s32.totalorder %s28, 0
      %p334 = por %p332, %p333
      %p335 = scmp.ne.s32.totalorder %s324, %s327
      %p336 = scmp.eq.s32.totalorder %s33, 3
      %p337 = por %p335, %p336
      %p338 = scmp.ne.s32.totalorder %s327, %s328
      %p339 = scmp.eq.s32.totalorder %s33, 0
      %p340 = por %p338, %p339
      %p341 = scmp.ne.s32.totalorder %s327, %s328
      %p342 = scmp.eq.s32.totalorder %s34, 3
      %p343 = por %p341, %p342
      %p345 = scmp.ne.s32.totalorder %s328, %s344
      %p346 = scmp.eq.s32.totalorder %s34, 0
      %p347 = por %p345, %p346
      %p348 = scmp.le.s32.totalorder 1, %s28
      %p349 = scmp.lt.s32.totalorder %s28, 5
      %p350 = pnand %p348, %p349
      %p351 = pneg %p350
      // Predicated region
      $region9: #{tpu_custom_call.1} parent=5 // pred_check
        _
      $region10: #{tpu_custom_call.1} parent=5 // pred_check_branch
        %353 = sbr.rel (%p350) target = $region12
      $region11: #{tpu_custom_call.1} parent=5 // pred_region
        %s354 = ssub.s32 %s28, 1
        // Predicated region
        $region13: #{tpu_custom_call.1} parent=11 // pred_check
          %p355 = pneg %p175
        $region14: #{tpu_custom_call.1} parent=11 // pred_check_branch
          %357 = sbr.rel (%p355) target = $region16
        $region15: #{tpu_custom_call.1} parent=11 // pred_region
          _
        $region16: #{tpu_custom_call.1} parent=11 // pred_fallthru
          _
        // Predicated region
        $region17: #{tpu_custom_call.1} parent=11 // pred_check
          %p358 = pneg %p196
        $region18: #{tpu_custom_call.1} parent=11 // pred_check_branch
          %360 = sbr.rel (%p358) target = $region20
        $region19: #{tpu_custom_call.1} parent=11 // pred_region
          %s362 = ssub.s32 1024, 1024
          %363 = vsyncadd [#allocation11], %s362
          %s364 = sshll.u32 [#allocation10], 4
          %s365 = int_to_ptr.vmem [resolvable:$true] %s364
          %370 = dma.hbm_to_vmem [thread:$0]  %s4, 1024, %s365, [#allocation11], 64, 64, 4
        $region20: #{tpu_custom_call.1} parent=11 // pred_fallthru
          _
        // Predicated region
        $region21: #{tpu_custom_call.1} parent=11 // pred_check
          %p371 = pneg %p217
        $region22: #{tpu_custom_call.1} parent=11 // pred_check_branch
          %373 = sbr.rel (%p371) target = $region24
        $region23: #{tpu_custom_call.1} parent=11 // pred_region
          %s375 = ssub.s32 1024, 1024
          %376 = vsyncadd [#allocation11], %s375
          %s377 = sshll.u32 [#allocation12], 4
          %s378 = int_to_ptr.vmem [resolvable:$true] %s377
          %383 = dma.hbm_to_vmem [thread:$0]  %s5, 1024, %s378, [#allocation11], 64, 64, 4
        $region24: #{tpu_custom_call.1} parent=11 // pred_fallthru
          _
        // Predicated region
        $region25: #{tpu_custom_call.1} parent=11 // pred_check
          %p384 = pneg %p238
        $region26: #{tpu_custom_call.1} parent=11 // pred_check_branch
          %386 = sbr.rel (%p384) target = $region28
        $region27: #{tpu_custom_call.1} parent=11 // pred_region
          _
        $region28: #{tpu_custom_call.1} parent=11 // pred_fallthru
          _
        // Predicated region
        $region29: #{tpu_custom_call.1} parent=11 // pred_check
          %p387 = pneg %p259
        $region30: #{tpu_custom_call.1} parent=11 // pred_check_branch
          %389 = sbr.rel (%p387) target = $region32
        $region31: #{tpu_custom_call.1} parent=11 // pred_region
          _
        $region32: #{tpu_custom_call.1} parent=11 // pred_fallthru
          _
        // Predicated region
        $region33: #{tpu_custom_call.1} parent=11 // pred_check
          %p390 = pneg %p280
        $region34: #{tpu_custom_call.1} parent=11 // pred_check_branch
          %392 = sbr.rel (%p390) target = $region36
        $region35: #{tpu_custom_call.1} parent=11 // pred_region
          _
        $region36: #{tpu_custom_call.1} parent=11 // pred_fallthru
          _
      $region12: #{tpu_custom_call.1} parent=5 // pred_fallthru
        _
      %p393 = scmp.lt.s32.totalorder %s28, 4
      // Predicated region
      $region37: #{tpu_custom_call.1} parent=5 // pred_check
        %p394 = pneg %p393
      $region38: #{tpu_custom_call.1} parent=5 // pred_check_branch
        %396 = sbr.rel (%p394) target = $region40
      $region39: #{tpu_custom_call.1} parent=5 // pred_region
        // Predicated region
        $region41: #{tpu_custom_call.1} parent=39 // pred_check
          %p397 = pneg %p86
        $region42: #{tpu_custom_call.1} parent=39 // pred_check_branch
          %399 = sbr.rel (%p397) target = $region44
        $region43: #{tpu_custom_call.1} parent=39 // pred_region
          %s400 = sand.u32 %s76, 1
          %s401 = scalar_lea.sflag [#allocation5], %s400
          %s402 = sand.u32 %s76, 1
          %s403 = smul.addr %s402, 16
          %s404 = scalar_lea.vmem [#allocation4], %s403
          %p405 = scmp.lt.s32.totalorder %s36, 0
          %s406 = ssub.s32 0, %s36
          %s407 = scalar_select %p405, %s406, %s36
          %s408 = sand.u32 %s407, 1
          %s409 = ssub.s32 0, %s408
          %s410 = scalar_select %p405, %s409, %s408
          %p411 = scmp.ne.s32.totalorder %s410, 0
          %p412 = scmp.lt.s32.totalorder %s410, 0
          %p413 = pnand %p412, %p411
          %p414 = pneg %p413
          %s415 = sadd.s32 %s410, 2
          %s416 = scalar_select %p414, %s415, %s410
          %s417 = smul.u32 4, %s416
          %s419 = ssub.s32 256, 256
          %420 = vsyncadd %s401, %s419
          %s421 = smul.addr %s35, 8
          %s422 = sadd.s32 %s417, %s421
          %s423 = smul.addr %s422, 64
          %s424 = scalar_lea.hbm %s0, %s423
          %s426 = sshll.u32 %s404, 4
          %s427 = int_to_ptr.vmem [resolvable:$true] %s426
          %429 = dma.hbm_to_vmem [thread:$0]  %s424, 256, %s427, %s401
        $region44: #{tpu_custom_call.1} parent=39 // pred_fallthru
          _
        // Predicated region
        $region45: #{tpu_custom_call.1} parent=39 // pred_check
          %p430 = pneg %p116
        $region46: #{tpu_custom_call.1} parent=39 // pred_check_branch
          %432 = sbr.rel (%p430) target = $region48
        $region47: #{tpu_custom_call.1} parent=39 // pred_region
          %s433 = sand.u32 %s28, 1
          %s434 = scalar_lea.sflag [#allocation8], %s433
          %s435 = sand.u32 %s106, 1
          %s436 = smul.addr %s435, 256
          %s437 = scalar_lea.vmem [#allocation7], %s436
          %p438 = scmp.lt.s32.totalorder %s36, 1
          %s439 = scalar_select %p438, %s36, 1
          %s440 = smul.u32 64, %s439
          %s442 = ssub.s32 4096, 4096
          %443 = vsyncadd %s434, %s442
          %s444 = smul.addr %s440, 64
          %s445 = scalar_lea.hbm %s1, %s444
          %s446 = sshll.u32 %s437, 4
          %s447 = int_to_ptr.vmem [resolvable:$true] %s446
          %452 = dma.hbm_to_vmem [thread:$0]  %s445, 4096, %s447, %s434, 64, 64, 4
        $region48: #{tpu_custom_call.1} parent=39 // pred_fallthru
          _
        // Predicated region
        $region49: #{tpu_custom_call.1} parent=39 // pred_check
          %p453 = pneg %p148
        $region50: #{tpu_custom_call.1} parent=39 // pred_check_branch
          %455 = sbr.rel (%p453) target = $region52
        $region51: #{tpu_custom_call.1} parent=39 // pred_region
          %s456 = sand.u32 %s28, 1
          %s457 = scalar_lea.sflag [#allocation8], %s456
          %s458 = sand.u32 %s138, 1
          %s459 = smul.addr %s458, 256
          %s460 = scalar_lea.vmem [#allocation9], %s459
          %s461 = ssub.s32 %s36, 2
          %p462 = scmp.gt.s32.totalorder %s461, 0
          %s463 = scalar_select %p462, %s461, 0
          %s464 = smul.u32 4, %s463
          %s466 = ssub.s32 4096, 4096
          %467 = vsyncadd %s457, %s466
          %s468 = smul.addr %s464, 64
          %s469 = scalar_lea.hbm %s2, %s468
          %s470 = sshll.u32 %s460, 4
          %s471 = int_to_ptr.vmem [resolvable:$true] %s470
          %476 = dma.hbm_to_vmem [thread:$0]  %s469, 4096, %s471, %s457, 512, 256, 16
        $region52: #{tpu_custom_call.1} parent=39 // pred_fallthru
          _
      $region40: #{tpu_custom_call.1} parent=5 // pred_fallthru
        _
      %p477 = scmp.le.s32.totalorder 1, %s28
      %p478 = scmp.lt.s32.totalorder %s28, 5
      %p479 = pnand %p477, %p478
      %p480 = pneg %p479
      // Predicated region
      $region53: #{tpu_custom_call.1} parent=5 // pred_check
        _
      $region54: #{tpu_custom_call.1} parent=5 // pred_check_branch
        %482 = sbr.rel (%p479) target = $region56
      $region55: #{tpu_custom_call.1} parent=5 // pred_region
        %s483 = ssub.s32 %s28, 1
        %s484 = sand.u32 %s79, 1
        %s485 = scalar_lea.sflag [#allocation5], %s484
        %s486 = sand.u32 %s79, 1
        %s487 = smul.addr %s486, 16
        %s488 = scalar_lea.vmem [#allocation4], %s487
        // Predicated region
        $region57: #{tpu_custom_call.1} parent=55 // pred_check
          %p489 = pneg %p92
        $region58: #{tpu_custom_call.1} parent=55 // pred_check_branch
          %491 = sbr.rel (%p489) target = $region60
        $region59: #{tpu_custom_call.1} parent=55 // pred_region
          %492 = dma.done %s485, 256
        $region60: #{tpu_custom_call.1} parent=55 // pred_fallthru
          _
        %s493 = sand.u32 %s33, 1
        %s494 = scalar_lea.sflag [#allocation8], %s493
        %s495 = sand.u32 %s109, 1
        %s496 = smul.addr %s495, 256
        %s497 = scalar_lea.vmem [#allocation7], %s496
        // Predicated region
        $region61: #{tpu_custom_call.1} parent=55 // pred_check
          %p498 = pneg %p122
        $region62: #{tpu_custom_call.1} parent=55 // pred_check_branch
          %500 = sbr.rel (%p498) target = $region64
        $region63: #{tpu_custom_call.1} parent=55 // pred_region
          %501 = dma.done %s494, 4096
        $region64: #{tpu_custom_call.1} parent=55 // pred_fallthru
          _
        %s502 = sand.u32 %s33, 1
        %s503 = scalar_lea.sflag [#allocation8], %s502
        %s504 = sand.u32 %s141, 1
        %s505 = smul.addr %s504, 256
        %s506 = scalar_lea.vmem [#allocation9], %s505
        // Predicated region
        $region65: #{tpu_custom_call.1} parent=55 // pred_check
          %p507 = pneg %p154
        $region66: #{tpu_custom_call.1} parent=55 // pred_check_branch
          %509 = sbr.rel (%p507) target = $region68
        $region67: #{tpu_custom_call.1} parent=55 // pred_region
          %510 = dma.done %s503, 4096
        $region68: #{tpu_custom_call.1} parent=55 // pred_fallthru
          _
        // Predicated region
        $region69: #{tpu_custom_call.1} parent=55 // pred_check
          %p511 = pneg %p196
        $region70: #{tpu_custom_call.1} parent=55 // pred_check_branch
          %513 = sbr.rel (%p511) target = $region72
        $region71: #{tpu_custom_call.1} parent=55 // pred_region
          %514 = dma.done [#allocation11], 1024
        $region72: #{tpu_custom_call.1} parent=55 // pred_fallthru
          _
        // Predicated region
        $region73: #{tpu_custom_call.1} parent=55 // pred_check
          %p515 = pneg %p217
        $region74: #{tpu_custom_call.1} parent=55 // pred_check_branch
          %517 = sbr.rel (%p515) target = $region76
        $region75: #{tpu_custom_call.1} parent=55 // pred_region
          %518 = dma.done [#allocation11], 1024
        $region76: #{tpu_custom_call.1} parent=55 // pred_fallthru
          _
        %s519 = sand.u32 %s79, 1
        %s520 = scalar_lea.sflag [#allocation5], %s519
        %s521 = sand.u32 %s79, 1
        %s522 = smul.addr %s521, 16
        %s523 = scalar_lea.vmem [#allocation4], %s522
        %p524 = pneg %p92
        %p525 = pneg %p89
        %s526 = sand.u32 %s33, 1
        %s527 = scalar_lea.sflag [#allocation8], %s526
        %s528 = sand.u32 %s109, 1
        %s529 = smul.addr %s528, 256
        %s530 = scalar_lea.vmem [#allocation7], %s529
        %p531 = pneg %p122
        %p532 = pneg %p119
        %s533 = sand.u32 %s33, 1
        %s534 = scalar_lea.sflag [#allocation8], %s533
        %s535 = sand.u32 %s141, 1
        %s536 = smul.addr %s535, 256
        %s537 = scalar_lea.vmem [#allocation9], %s536
        %p538 = pneg %p154
        %p539 = pneg %p151
        %p540 = pneg %p175
        %p541 = pneg %p172
        %p542 = pneg %p196
        %p543 = pneg %p193
        %p544 = pneg %p217
        %p545 = pneg %p214
        %p546 = pneg %p238
        %p547 = pneg %p235
        %p548 = pneg %p259
        %p549 = pneg %p256
        %p550 = pneg %p280
        %p551 = pneg %p277
        %p552 = pneg %p314
        %p553 = pneg %p311
        %s554 = sand.u32 %s301, 1
        %s555 = scalar_lea.sflag [#allocation6], %s554
        %s556 = sand.u32 %s301, 1
        %s557 = smul.addr %s556, 16
        %s558 = scalar_lea.vmem [#allocation13], %s557
        %p559 = pneg %p340
        %p560 = pneg %p337
        %p561 = scmp.lt.s32.totalorder %s38, 0
        %s562 = ssub.s32 0, %s38
        %s563 = scalar_select %p561, %s562, %s38
        %s564 = sand.u32 %s563, 1
        %s565 = ssub.s32 0, %s564
        %s566 = scalar_select %p561, %s565, %s564
        %p567 = scmp.ne.s32.totalorder %s566, 0
        %p568 = scmp.lt.s32.totalorder %s566, 0
        %p569 = pnand %p568, %p567
        %p570 = pneg %p569
        %s571 = sadd.s32 %s566, 2
        %s572 = scalar_select %p570, %s571, %s566
        %s573 = smul.u32 4, %s572
        %p574 = scmp.lt.s32.totalorder %s38, 1
        %s575 = scalar_select %p574, %s38, 1
        %s576 = smul.u32 64, %s575
        %s577 = ssub.s32 %s38, 2
        %p578 = scmp.gt.s32.totalorder %s577, 0
        %s579 = scalar_select %p578, %s577, 0
        %s580 = smul.u32 4, %s579
        %s581 = ssub.s32 %s38, 2
        %p582 = scmp.gt.s32.totalorder %s581, 0
        %s583 = scalar_select %p582, %s581, 0
        %s584 = smul.u32 4, %s583
        %p586 = scmp.eq.s32.totalorder %s38, 0
        // Predicated region
        $region77: #{tpu_custom_call.1} parent=55 // pred_check
          %p587 = pneg %p586
        $region78: #{tpu_custom_call.1} parent=55 // pred_check_branch
          %589 = sbr.rel (%p587) target = $region80
        $region79: #{tpu_custom_call.1} parent=55 // pred_region
          %590 = vst [vmem:[#allocation2] sm:$0xff] 0.0
        $region80: #{tpu_custom_call.1} parent=55 // pred_fallthru
          _
        %p591 = scmp.lt.s32.totalorder %s38, 2
        // Predicated region
        $region81: #{tpu_custom_call.1} parent=55 // pred_check
          %p592 = pneg %p591
        $region82: #{tpu_custom_call.1} parent=55 // pred_check_branch
          %594 = sbr.rel (%p592) target = $region84
        $region83: #{tpu_custom_call.1} parent=55 // pred_region
          %v595 = vld [vmem:[#allocation2] sm:$0xff]
          %v596 = vld [vmem:[%s488] sm:$0xff]
          %v597 = vld [vmem:[%s488 + $0x8] sm:$0xff]
          %v598 = vld [vmem:[%s497] sm:$0xf]
          %v599 = vld [vmem:[%s497 + $0x4] sm:$0xf]
          %v600 = vld [vmem:[%s497 + $0x8] sm:$0xf]
          %v601 = vld [vmem:[%s497 + $0xc] sm:$0xf]
          %v602 = vld [vmem:[%s497 + $0x10] sm:$0xf]
          %v603 = vld [vmem:[%s497 + $0x14] sm:$0xf]
          %v604 = vld [vmem:[%s497 + $0x18] sm:$0xf]
          %v605 = vld [vmem:[%s497 + $0x1c] sm:$0xf]
          %v606 = vld [vmem:[%s497 + $0x20] sm:$0xf]
          %v607 = vld [vmem:[%s497 + $0x24] sm:$0xf]
          %v608 = vld [vmem:[%s497 + $0x28] sm:$0xf]
          %v609 = vld [vmem:[%s497 + $0x2c] sm:$0xf]
          %v610 = vld [vmem:[%s497 + $0x30] sm:$0xf]
          %v611 = vld [vmem:[%s497 + $0x34] sm:$0xf]
          %v612 = vld [vmem:[%s497 + $0x38] sm:$0xf]
          %v613 = vld [vmem:[%s497 + $0x3c] sm:$0xf]
          %v614 = vld [vmem:[%s497 + $0x40] sm:$0xf]
          %v615 = vld [vmem:[%s497 + $0x44] sm:$0xf]
          %v616 = vld [vmem:[%s497 + $0x48] sm:$0xf]
          %v617 = vld [vmem:[%s497 + $0x4c] sm:$0xf]
          %v618 = vld [vmem:[%s497 + $0x50] sm:$0xf]
          %v619 = vld [vmem:[%s497 + $0x54] sm:$0xf]
          %v620 = vld [vmem:[%s497 + $0x58] sm:$0xf]
          %v621 = vld [vmem:[%s497 + $0x5c] sm:$0xf]
          %v622 = vld [vmem:[%s497 + $0x60] sm:$0xf]
          %v623 = vld [vmem:[%s497 + $0x64] sm:$0xf]
          %v624 = vld [vmem:[%s497 + $0x68] sm:$0xf]
          %v625 = vld [vmem:[%s497 + $0x6c] sm:$0xf]
          %v626 = vld [vmem:[%s497 + $0x70] sm:$0xf]
          %v627 = vld [vmem:[%s497 + $0x74] sm:$0xf]
          %v628 = vld [vmem:[%s497 + $0x78] sm:$0xf]
          %v629 = vld [vmem:[%s497 + $0x7c] sm:$0xf]
          %v630 = vld [vmem:[%s497 + $0x80] sm:$0xf]
          %v631 = vld [vmem:[%s497 + $0x84] sm:$0xf]
          %v632 = vld [vmem:[%s497 + $0x88] sm:$0xf]
          %v633 = vld [vmem:[%s497 + $0x8c] sm:$0xf]
          %v634 = vld [vmem:[%s497 + $0x90] sm:$0xf]
          %v635 = vld [vmem:[%s497 + $0x94] sm:$0xf]
          %v636 = vld [vmem:[%s497 + $0x98] sm:$0xf]
          %v637 = vld [vmem:[%s497 + $0x9c] sm:$0xf]
          %v638 = vld [vmem:[%s497 + $0xa0] sm:$0xf]
          %v639 = vld [vmem:[%s497 + $0xa4] sm:$0xf]
          %v640 = vld [vmem:[%s497 + $0xa8] sm:$0xf]
          %v641 = vld [vmem:[%s497 + $0xac] sm:$0xf]
          %v642 = vld [vmem:[%s497 + $0xb0] sm:$0xf]
          %v643 = vld [vmem:[%s497 + $0xb4] sm:$0xf]
          %v644 = vld [vmem:[%s497 + $0xb8] sm:$0xf]
          %v645 = vld [vmem:[%s497 + $0xbc] sm:$0xf]
          %v646 = vld [vmem:[%s497 + $0xc0] sm:$0xf]
          %v647 = vld [vmem:[%s497 + $0xc4] sm:$0xf]
          %v648 = vld [vmem:[%s497 + $0xc8] sm:$0xf]
          %v649 = vld [vmem:[%s497 + $0xcc] sm:$0xf]
          %v650 = vld [vmem:[%s497 + $0xd0] sm:$0xf]
          %v651 = vld [vmem:[%s497 + $0xd4] sm:$0xf]
          %v652 = vld [vmem:[%s497 + $0xd8] sm:$0xf]
          %v653 = vld [vmem:[%s497 + $0xdc] sm:$0xf]
          %v654 = vld [vmem:[%s497 + $0xe0] sm:$0xf]
          %v655 = vld [vmem:[%s497 + $0xe4] sm:$0xf]
          %v656 = vld [vmem:[%s497 + $0xe8] sm:$0xf]
          %v657 = vld [vmem:[%s497 + $0xec] sm:$0xf]
          %v658 = vld [vmem:[%s497 + $0xf0] sm:$0xf]
          %v659 = vld [vmem:[%s497 + $0xf4] sm:$0xf]
          %v660 = vld [vmem:[%s497 + $0xf8] sm:$0xf]
          %v661 = vld [vmem:[%s497 + $0xfc] sm:$0xf]
          %v664 = vunpack.c.l.b16 %v596
          %v665 = vunpack.c.h.b16 %v596
          %v666 = vunpack.c.l.b16 %v597
          %v667 = vunpack.c.h.b16 %v597
          %v668 = vpack.c.b16 %v664, %v664
          %v669 = vpack.c.b16 %v665, %v665
          %v670 = vpack.c.b16 %v666, %v666
          %v671 = vpack.c.b16 %v667, %v667
          %v740 = vunpack.c.l.b16 %v598
          %v741 = vunpack.c.l.b16 %v599
          %v742 = vunpack.c.l.b16 %v600
          %v743 = vunpack.c.l.b16 %v601
          %v744 = vunpack.c.l.b16 %v602
          %v745 = vunpack.c.l.b16 %v603
          %v746 = vunpack.c.l.b16 %v604
          %v747 = vunpack.c.l.b16 %v605
          %v748 = vunpack.c.l.b16 %v606
          %v749 = vunpack.c.l.b16 %v607
          %v750 = vunpack.c.l.b16 %v608
          %v751 = vunpack.c.l.b16 %v609
          %v752 = vunpack.c.l.b16 %v610
          %v753 = vunpack.c.l.b16 %v611
          %v754 = vunpack.c.l.b16 %v612
          %v755 = vunpack.c.l.b16 %v613
          %v756 = vunpack.c.l.b16 %v614
          %v757 = vunpack.c.l.b16 %v615
          %v758 = vunpack.c.l.b16 %v616
          %v759 = vunpack.c.l.b16 %v617
          %v760 = vunpack.c.l.b16 %v618
          %v761 = vunpack.c.l.b16 %v619
          %v762 = vunpack.c.l.b16 %v620
          %v763 = vunpack.c.l.b16 %v621
          %v764 = vunpack.c.l.b16 %v622
          %v765 = vunpack.c.l.b16 %v623
          %v766 = vunpack.c.l.b16 %v624
          %v767 = vunpack.c.l.b16 %v625
          %v768 = vunpack.c.l.b16 %v626
          %v769 = vunpack.c.l.b16 %v627
          %v770 = vunpack.c.l.b16 %v628
          %v771 = vunpack.c.l.b16 %v629
          %v772 = vunpack.c.l.b16 %v630
          %v773 = vunpack.c.l.b16 %v631
          %v774 = vunpack.c.l.b16 %v632
          %v775 = vunpack.c.l.b16 %v633
          %v776 = vunpack.c.l.b16 %v634
          %v777 = vunpack.c.l.b16 %v635
          %v778 = vunpack.c.l.b16 %v636
          %v779 = vunpack.c.l.b16 %v637
          %v780 = vunpack.c.l.b16 %v638
          %v781 = vunpack.c.l.b16 %v639
          %v782 = vunpack.c.l.b16 %v640
          %v783 = vunpack.c.l.b16 %v641
          %v784 = vunpack.c.l.b16 %v642
          %v785 = vunpack.c.l.b16 %v643
          %v786 = vunpack.c.l.b16 %v644
          %v787 = vunpack.c.l.b16 %v645
          %v788 = vunpack.c.l.b16 %v646
          %v789 = vunpack.c.l.b16 %v647
          %v790 = vunpack.c.l.b16 %v648
          %v791 = vunpack.c.l.b16 %v649
          %v792 = vunpack.c.l.b16 %v650
          %v793 = vunpack.c.l.b16 %v651
          %v794 = vunpack.c.l.b16 %v652
          %v795 = vunpack.c.l.b16 %v653
          %v796 = vunpack.c.l.b16 %v654
          %v797 = vunpack.c.l.b16 %v655
          %v798 = vunpack.c.l.b16 %v656
          %v799 = vunpack.c.l.b16 %v657
          %v800 = vunpack.c.l.b16 %v658
          %v801 = vunpack.c.l.b16 %v659
          %v802 = vunpack.c.l.b16 %v660
          %v803 = vunpack.c.l.b16 %v661
          %v804 = vpack.c.b16 %v741, %v740
          %v805 = vpack.c.b16 %v743, %v742
          %v806 = vpack.c.b16 %v745, %v744
          %v807 = vpack.c.b16 %v747, %v746
          %v808 = vpack.c.b16 %v749, %v748
          %v809 = vpack.c.b16 %v751, %v750
          %v810 = vpack.c.b16 %v753, %v752
          %v811 = vpack.c.b16 %v755, %v754
          %v812 = vpack.c.b16 %v757, %v756
          %v813 = vpack.c.b16 %v759, %v758
          %v814 = vpack.c.b16 %v761, %v760
          %v815 = vpack.c.b16 %v763, %v762
          %v816 = vpack.c.b16 %v765, %v764
          %v817 = vpack.c.b16 %v767, %v766
          %v818 = vpack.c.b16 %v769, %v768
          %v819 = vpack.c.b16 %v771, %v770
          %v820 = vpack.c.b16 %v773, %v772
          %v821 = vpack.c.b16 %v775, %v774
          %v822 = vpack.c.b16 %v777, %v776
          %v823 = vpack.c.b16 %v779, %v778
          %v824 = vpack.c.b16 %v781, %v780
          %v825 = vpack.c.b16 %v783, %v782
          %v826 = vpack.c.b16 %v785, %v784
          %v827 = vpack.c.b16 %v787, %v786
          %v828 = vpack.c.b16 %v789, %v788
          %v829 = vpack.c.b16 %v791, %v790
          %v830 = vpack.c.b16 %v793, %v792
          %v831 = vpack.c.b16 %v795, %v794
          %v832 = vpack.c.b16 %v797, %v796
          %v833 = vpack.c.b16 %v799, %v798
          %v834 = vpack.c.b16 %v801, %v800
          %v835 = vpack.c.b16 %v803, %v802
          %868 = vmatprep.subr.bf16.mxu0 0
          %869 = vmatpush1.bf16.msra.mxu0 %v804
          %870 = vmatprep.subr.bf16.mxu0 0
          %871 = vmatpush1.bf16.msra.mxu0 %v805
          %872 = vmatprep.subr.bf16.mxu0 0
          %873 = vmatpush1.bf16.msra.mxu0 %v806
          %874 = vmatprep.subr.bf16.mxu0 0
          %875 = vmatpush1.bf16.msra.mxu0 %v807
          %876 = vmatprep.subr.bf16.mxu0 0
          %877 = vmatpush1.bf16.msra.mxu0 %v808
          %878 = vmatprep.subr.bf16.mxu0 0
          %879 = vmatpush1.bf16.msra.mxu0 %v809
          %880 = vmatprep.subr.bf16.mxu0 0
          %881 = vmatpush1.bf16.msra.mxu0 %v810
          %882 = vmatprep.subr.bf16.mxu0 0
          %883 = vmatpush1.bf16.msra.mxu0 %v811
          %884 = vmatprep.subr.bf16.mxu0 0
          %885 = vmatpush1.bf16.msra.mxu0 %v812
          %886 = vmatprep.subr.bf16.mxu0 0
          %887 = vmatpush1.bf16.msra.mxu0 %v813
          %888 = vmatprep.subr.bf16.mxu0 0
          %889 = vmatpush1.bf16.msra.mxu0 %v814
          %890 = vmatprep.subr.bf16.mxu0 0
          %891 = vmatpush1.bf16.msra.mxu0 %v815
          %892 = vmatprep.subr.bf16.mxu0 0
          %893 = vmatpush1.bf16.msra.mxu0 %v816
          %894 = vmatprep.subr.bf16.mxu0 0
          %895 = vmatpush1.bf16.msra.mxu0 %v817
          %896 = vmatprep.subr.bf16.mxu0 0
          %897 = vmatpush1.bf16.msra.mxu0 %v818
          %898 = vmatprep.subr.bf16.mxu0 0
          %899 = vmatpush1.bf16.msra.mxu0 %v819
          %900 = vmatprep.mubr.bf16.mxu0 %v669
          %901 = vmatmul.mubr.bf16.gmra.mrb[0].mxu0 %v668
          %v902 = vpop.f32.mrb[0].mxu0
          %v903 = vadd.f32 0.0, %v902
          %v904 = vpop.f32.mrb[0].mxu0
          %v905 = vpop.f32.mrb[0].mxu0
          %v906 = vpop.f32.mrb[0].mxu0
          %907 = vdwg.mxu0
          %908 = vmatprep.subr.bf16.mxu0 0
          %909 = vmatpush1.bf16.msra.mxu0 %v820
          %910 = vmatprep.subr.bf16.mxu0 0
          %911 = vmatpush1.bf16.msra.mxu0 %v821
          %912 = vmatprep.subr.bf16.mxu0 0
          %913 = vmatpush1.bf16.msra.mxu0 %v822
          %914 = vmatprep.subr.bf16.mxu0 0
          %915 = vmatpush1.bf16.msra.mxu0 %v823
          %916 = vmatprep.subr.bf16.mxu0 0
          %917 = vmatpush1.bf16.msra.mxu0 %v824
          %918 = vmatprep.subr.bf16.mxu0 0
          %919 = vmatpush1.bf16.msra.mxu0 %v825
          %920 = vmatprep.subr.bf16.mxu0 0
          %921 = vmatpush1.bf16.msra.mxu0 %v826
          %922 = vmatprep.subr.bf16.mxu0 0
          %923 = vmatpush1.bf16.msra.mxu0 %v827
          %924 = vmatprep.subr.bf16.mxu0 0
          %925 = vmatpush1.bf16.msra.mxu0 %v828
          %926 = vmatprep.subr.bf16.mxu0 0
          %927 = vmatpush1.bf16.msra.mxu0 %v829
          %928 = vmatprep.subr.bf16.mxu0 0
          %929 = vmatpush1.bf16.msra.mxu0 %v830
          %930 = vmatprep.subr.bf16.mxu0 0
          %931 = vmatpush1.bf16.msra.mxu0 %v831
          %932 = vmatprep.subr.bf16.mxu0 0
          %933 = vmatpush1.bf16.msra.mxu0 %v832
          %934 = vmatprep.subr.bf16.mxu0 0
          %935 = vmatpush1.bf16.msra.mxu0 %v833
          %936 = vmatprep.subr.bf16.mxu0 0
          %937 = vmatpush1.bf16.msra.mxu0 %v834
          %938 = vmatprep.subr.bf16.mxu0 0
          %939 = vmatpush1.bf16.msra.mxu0 %v835
          %940 = vmatprep.mubr.bf16.mxu0 %v671
          %941 = vmatmul.mubr.bf16.gmra.mrb[0].mxu0 %v670
          %v942 = vpop.f32.mrb[0].mxu0
          %v943 = vadd.f32 %v903, %v942
          %v944 = vpop.f32.mrb[0].mxu0
          %v945 = vpop.f32.mrb[0].mxu0
          %v946 = vpop.f32.mrb[0].mxu0
          %947 = vdwg.mxu0
          %v948 = vadd.f32 %v595, %v943
          %949 = vst [vmem:[#allocation2] sm:$0xff] %v948
        $region84: #{tpu_custom_call.1} parent=55 // pred_fallthru
          _
        %p950 = scmp.eq.s32.totalorder %s38, 1
        // Predicated region
        $region85: #{tpu_custom_call.1} parent=55 // pred_check
          %p951 = pneg %p950
        $region86: #{tpu_custom_call.1} parent=55 // pred_check_branch
          %953 = sbr.rel (%p951) target = $region88
        $region87: #{tpu_custom_call.1} parent=55 // pred_region
          %v954 = vld [vmem:[%s3] sm:$0x1]
          %v955 = vld [vmem:[#allocation2] sm:$0xff]
          %v957 = vlaneseq
          %v958 = vshrl.u32 %v957, 7
          %v959 = vsub.s32 0, %v958
          %v960 = vrot.slane %v954, %v959
          %v962 = vadd.f32 %v955, %v960
          %v963 = vmax.f32 %v962, 0.0
          %v964 = vpack.c.bf16 %v963, %v963
          %v965 = vld [vmem:[#allocation10] sm:$0xf]
          %v966 = vld [vmem:[#allocation10 + $0x4] sm:$0xf]
          %v967 = vld [vmem:[#allocation10 + $0x8] sm:$0xf]
          %v968 = vld [vmem:[#allocation10 + $0xc] sm:$0xf]
          %v969 = vld [vmem:[#allocation10 + $0x10] sm:$0xf]
          %v970 = vld [vmem:[#allocation10 + $0x14] sm:$0xf]
          %v971 = vld [vmem:[#allocation10 + $0x18] sm:$0xf]
          %v972 = vld [vmem:[#allocation10 + $0x1c] sm:$0xf]
          %v973 = vld [vmem:[#allocation10 + $0x20] sm:$0xf]
          %v974 = vld [vmem:[#allocation10 + $0x24] sm:$0xf]
          %v975 = vld [vmem:[#allocation10 + $0x28] sm:$0xf]
          %v976 = vld [vmem:[#allocation10 + $0x2c] sm:$0xf]
          %v977 = vld [vmem:[#allocation10 + $0x30] sm:$0xf]
          %v978 = vld [vmem:[#allocation10 + $0x34] sm:$0xf]
          %v979 = vld [vmem:[#allocation10 + $0x38] sm:$0xf]
          %v980 = vld [vmem:[#allocation10 + $0x3c] sm:$0xf]
          %v981 = vld [vmem:[%s6] sm:$0x1]
          %v983 = vlaneseq
          %v984 = vshrl.u32 %v983, 7
          %v985 = vsub.s32 0, %v984
          %v986 = vrot.slane %v981, %v985
          %v1004 = vunpack.c.l.b16 %v965
          %v1005 = vunpack.c.l.b16 %v966
          %v1006 = vunpack.c.l.b16 %v967
          %v1007 = vunpack.c.l.b16 %v968
          %v1008 = vunpack.c.l.b16 %v969
          %v1009 = vunpack.c.l.b16 %v970
          %v1010 = vunpack.c.l.b16 %v971
          %v1011 = vunpack.c.l.b16 %v972
          %v1012 = vunpack.c.l.b16 %v973
          %v1013 = vunpack.c.l.b16 %v974
          %v1014 = vunpack.c.l.b16 %v975
          %v1015 = vunpack.c.l.b16 %v976
          %v1016 = vunpack.c.l.b16 %v977
          %v1017 = vunpack.c.l.b16 %v978
          %v1018 = vunpack.c.l.b16 %v979
          %v1019 = vunpack.c.l.b16 %v980
          %v1020 = vpack.c.b16 %v1005, %v1004
          %v1021 = vpack.c.b16 %v1007, %v1006
          %v1022 = vpack.c.b16 %v1009, %v1008
          %v1023 = vpack.c.b16 %v1011, %v1010
          %v1024 = vpack.c.b16 %v1013, %v1012
          %v1025 = vpack.c.b16 %v1015, %v1014
          %v1026 = vpack.c.b16 %v1017, %v1016
          %v1027 = vpack.c.b16 %v1019, %v1018
          %1036 = vmatprep.subr.bf16.mxu0 0
          %1037 = vmatpush1.bf16.msra.mxu0 %v1020
          %1038 = vmatprep.subr.bf16.mxu0 0
          %1039 = vmatpush1.bf16.msra.mxu0 %v1021
          %1040 = vmatprep.subr.bf16.mxu0 0
          %1041 = vmatpush1.bf16.msra.mxu0 %v1022
          %1042 = vmatprep.subr.bf16.mxu0 0
          %1043 = vmatpush1.bf16.msra.mxu0 %v1023
          %1044 = vmatprep.subr.bf16.mxu0 0
          %1045 = vmatpush1.bf16.msra.mxu0 %v1024
          %1046 = vmatprep.subr.bf16.mxu0 0
          %1047 = vmatpush1.bf16.msra.mxu0 %v1025
          %1048 = vmatprep.subr.bf16.mxu0 0
          %1049 = vmatpush1.bf16.msra.mxu0 %v1026
          %1050 = vmatprep.subr.bf16.mxu0 0
          %1051 = vmatpush1.bf16.msra.mxu0 %v1027
          %1052 = vmatprep.subr.bf16.mxu0 0
          %1053 = vmatpush1.bf16.msra.mxu0 0
          %1054 = vmatprep.subr.bf16.mxu0 0
          %1055 = vmatpush1.bf16.msra.mxu0 0
          %1056 = vmatprep.subr.bf16.mxu0 0
          %1057 = vmatpush1.bf16.msra.mxu0 0
          %1058 = vmatprep.subr.bf16.mxu0 0
          %1059 = vmatpush1.bf16.msra.mxu0 0
          %1060 = vmatprep.subr.bf16.mxu0 0
          %1061 = vmatpush1.bf16.msra.mxu0 0
          %1062 = vmatprep.subr.bf16.mxu0 0
          %1063 = vmatpush1.bf16.msra.mxu0 0
          %1064 = vmatprep.subr.bf16.mxu0 0
          %1065 = vmatpush1.bf16.msra.mxu0 0
          %1066 = vmatprep.subr.bf16.mxu0 0
          %1067 = vmatpush1.bf16.msra.mxu0 0
          %1068 = vmatprep.mubr.bf16.mxu0 0
          %1069 = vmatmul.mubr.bf16.gmra.mrb[0].mxu0 %v964
          %v1070 = vpop.f32.mrb[0].mxu0
          %v1071 = vadd.f32 %v986, %v1070
          %v1072 = vpop.f32.mrb[0].mxu0
          %v1073 = vpop.f32.mrb[0].mxu0
          %v1074 = vpop.f32.mrb[0].mxu0
          %1075 = vdwg.mxu0
          %1076 = vmax.xlane.f32.xlu0 %v1071
          %v1077 = vpop.xlane.xlu0 %1076
          %v1078 = vsub.f32 %v1071, %v1077
          %v1079 = vmul.f32 %v1078, 1.442695
          %v1080 = vpow.pop %v1079
          %1081 = vadd.xlane.f32.xlu0 %v1080
          %v1082 = vpop.xlane.xlu0 %1081
          %v1083 = vrcp.pop %v1082
          %v1084 = vmul.f32 %v1080, %v1083
          %1085 = vst [vmem:[#allocation14] sm:$0xff] %v1084
          %v1086 = vlaneseq
          %v1087 = vand.u32 %v1086, 127
          %vm1088 = vcmp.eq.f32.partialorder %v1071, %v1077
          %v1089 = vsel %vm1088, %v1087, 128
          %v1090 = vand.u32 %v1089, 65535
          %v1091 = vshra.s32 %v1089, 16
          %v1092 = vcvt.s32.f32 %v1090
          %v1093 = vcvt.s32.f32 %v1091
          %1094 = vmin.xlane.f32.xlu0 %v1093
          %v1095 = vpop.xlane.xlu0 %1094
          %vm1096 = vcmp.eq.f32.partialorder %v1093, %v1095
          %v1097 = vsel %vm1096, %v1092, inf
          %1098 = vmin.xlane.f32.xlu0 %v1097
          %v1099 = vpop.xlane.xlu0 %1098
          %v1100 = vcvt.f32.s32 %v1099
          %v1101 = vcvt.f32.s32 %v1095
          %v1102 = vshll.u32 %v1101, 16
          %v1103 = vadd.s32 %v1102, %v1100
          %vm1104 = vcmp.eq.s32.totalorder %v1087, %v1103
          %v1105 = vsel %vm1104, 1, 0
          %v1106 = vcvt.s32.f32 %v1105
          %v1107 = vld [vmem:[%s7] sm:$0x1]
          %v1109 = vlaneseq
          %v1110 = vshrl.u32 %v1109, 7
          %v1111 = vsub.s32 0, %v1110
          %v1112 = vrot.slane %v1107, %v1111
          %v1114 = vsub.f32 %v1071, %v1112
          %v1115 = vld [vmem:[%s8] sm:$0x1]
          %v1117 = vlaneseq
          %v1118 = vshrl.u32 %v1117, 7
          %v1119 = vsub.s32 0, %v1118
          %v1120 = vrot.slane %v1115, %v1119
          %v1122 = vsub.f32 %v1084, %v1120
          %v1123 = vmul.f32 %v1106, %v1084
          %1124 = vadd.xlane.f32.xlu0 %v1123
          %v1125 = vpop.xlane.xlu0 %1124
          %v1126 = vsub.f32 %v1106, %v1125
          %v1127 = vmul.f32 %v1084, %v1126
          %v1128 = vand.u32 2147483647, %v1114
          %vm1129 = vcmp.lt.f32.partialorder %v1128, 1e-07
          %v1130 = vsel %vm1129, 1.0, %v1114
          %v1131 = vmul.f32 %v1106, %v1122
          %v1132 = vrcp.pop %v1130
          %v1133 = vmul.f32 %v1131, %v1132
          %v1134 = vsel %vm1129, %v1127, %v1133
          %v1135 = vpack.c.bf16 %v1134, %v1134
          %v1136 = vld [vmem:[#allocation12] sm:$0xf]
          %v1137 = vld [vmem:[#allocation12 + $0x4] sm:$0xf]
          %v1138 = vld [vmem:[#allocation12 + $0x8] sm:$0xf]
          %v1139 = vld [vmem:[#allocation12 + $0xc] sm:$0xf]
          %v1140 = vld [vmem:[#allocation12 + $0x10] sm:$0xf]
          %v1141 = vld [vmem:[#allocation12 + $0x14] sm:$0xf]
          %v1142 = vld [vmem:[#allocation12 + $0x18] sm:$0xf]
          %v1143 = vld [vmem:[#allocation12 + $0x1c] sm:$0xf]
          %v1144 = vld [vmem:[#allocation12 + $0x20] sm:$0xf]
          %v1145 = vld [vmem:[#allocation12 + $0x24] sm:$0xf]
          %v1146 = vld [vmem:[#allocation12 + $0x28] sm:$0xf]
          %v1147 = vld [vmem:[#allocation12 + $0x2c] sm:$0xf]
          %v1148 = vld [vmem:[#allocation12 + $0x30] sm:$0xf]
          %v1149 = vld [vmem:[#allocation12 + $0x34] sm:$0xf]
          %v1150 = vld [vmem:[#allocation12 + $0x38] sm:$0xf]
          %v1151 = vld [vmem:[#allocation12 + $0x3c] sm:$0xf]
          %v1168 = vunpack.c.l.b16 %v1136
          %v1169 = vunpack.c.l.b16 %v1137
          %v1170 = vunpack.c.l.b16 %v1138
          %v1171 = vunpack.c.l.b16 %v1139
          %v1172 = vunpack.c.l.b16 %v1140
          %v1173 = vunpack.c.l.b16 %v1141
          %v1174 = vunpack.c.l.b16 %v1142
          %v1175 = vunpack.c.l.b16 %v1143
          %v1176 = vunpack.c.l.b16 %v1144
          %v1177 = vunpack.c.l.b16 %v1145
          %v1178 = vunpack.c.l.b16 %v1146
          %v1179 = vunpack.c.l.b16 %v1147
          %v1180 = vunpack.c.l.b16 %v1148
          %v1181 = vunpack.c.l.b16 %v1149
          %v1182 = vunpack.c.l.b16 %v1150
          %v1183 = vunpack.c.l.b16 %v1151
          %v1184 = vpack.c.b16 %v1169, %v1168
          %v1185 = vpack.c.b16 %v1171, %v1170
          %v1186 = vpack.c.b16 %v1173, %v1172
          %v1187 = vpack.c.b16 %v1175, %v1174
          %v1188 = vpack.c.b16 %v1177, %v1176
          %v1189 = vpack.c.b16 %v1179, %v1178
          %v1190 = vpack.c.b16 %v1181, %v1180
          %v1191 = vpack.c.b16 %v1183, %v1182
          %1200 = vmatprep.subr.bf16.mxu0 0
          %1201 = vmatpush1.bf16.msra.mxu0 %v1184
          %1202 = vmatprep.subr.bf16.mxu0 0
          %1203 = vmatpush1.bf16.msra.mxu0 %v1185
          %1204 = vmatprep.subr.bf16.mxu0 0
          %1205 = vmatpush1.bf16.msra.mxu0 %v1186
          %1206 = vmatprep.subr.bf16.mxu0 0
          %1207 = vmatpush1.bf16.msra.mxu0 %v1187
          %1208 = vmatprep.subr.bf16.mxu0 0
          %1209 = vmatpush1.bf16.msra.mxu0 %v1188
          %1210 = vmatprep.subr.bf16.mxu0 0
          %1211 = vmatpush1.bf16.msra.mxu0 %v1189
          %1212 = vmatprep.subr.bf16.mxu0 0
          %1213 = vmatpush1.bf16.msra.mxu0 %v1190
          %1214 = vmatprep.subr.bf16.mxu0 0
          %1215 = vmatpush1.bf16.msra.mxu0 %v1191
          %1216 = vmatprep.subr.bf16.mxu0 0
          %1217 = vmatpush1.bf16.msra.mxu0 0
          %1218 = vmatprep.subr.bf16.mxu0 0
          %1219 = vmatpush1.bf16.msra.mxu0 0
          %1220 = vmatprep.subr.bf16.mxu0 0
          %1221 = vmatpush1.bf16.msra.mxu0 0
          %1222 = vmatprep.subr.bf16.mxu0 0
          %1223 = vmatpush1.bf16.msra.mxu0 0
          %1224 = vmatprep.subr.bf16.mxu0 0
          %1225 = vmatpush1.bf16.msra.mxu0 0
          %1226 = vmatprep.subr.bf16.mxu0 0
          %1227 = vmatpush1.bf16.msra.mxu0 0
          %1228 = vmatprep.subr.bf16.mxu0 0
          %1229 = vmatpush1.bf16.msra.mxu0 0
          %1230 = vmatprep.subr.bf16.mxu0 0
          %1231 = vmatpush1.bf16.msra.mxu0 0
          %1232 = vmatprep.mubr.bf16.mxu0 0
          %1233 = vmatmul.mubr.bf16.gmra.mrb[0].mxu0 %v1135
          %v1234 = vpop.f32.mrb[0].mxu0
          %v1235 = vadd.f32 0.0, %v1234
          %v1236 = vpop.f32.mrb[0].mxu0
          %v1237 = vpop.f32.mrb[0].mxu0
          %v1238 = vpop.f32.mrb[0].mxu0
          %1239 = vdwg.mxu0
          %v1240 = vmax.f32 %v954, 0.0
          %v1241 = vsub.f32 %v962, %v960
          %v1243 = vlaneseq
          %v1244 = vshrl.u32 %v1243, 7
          %v1245 = vsub.s32 0, %v1244
          %v1246 = vrot.slane %v1240, %v1245
          %v1248 = vsub.f32 %v963, %v1246
          %vm1249 = vcmp.gt.f32.partialorder %v962, 0.0
          %v1250 = vsel %vm1249, 1, 0
          %v1251 = vcvt.s32.f32 %v1250
          %v1252 = vand.u32 2147483647, %v1241
          %vm1253 = vcmp.lt.f32.partialorder %v1252, 1e-07
          %v1254 = vsel %vm1253, 1.0, %v1241
          %v1255 = vmul.f32 %v1235, %v1251
          %v1256 = vmul.f32 %v1235, %v1248
          %v1257 = vrcp.pop %v1254
          %v1258 = vmul.f32 %v1256, %v1257
          %v1259 = vsel %vm1253, %v1255, %v1258
          %1260 = vst [vmem:[#allocation3] sm:$0xff] %v1259
        $region88: #{tpu_custom_call.1} parent=55 // pred_fallthru
          _
        %p1261 = scmp.ge.s32.totalorder %s38, 2
        // Predicated region
        $region89: #{tpu_custom_call.1} parent=55 // pred_check
          %p1262 = pneg %p1261
        $region90: #{tpu_custom_call.1} parent=55 // pred_check_branch
          %1264 = sbr.rel (%p1262) target = $region92
        $region91: #{tpu_custom_call.1} parent=55 // pred_region
          %v1265 = vld [vmem:[#allocation3] sm:$0xff]
          %v1266 = vpack.c.bf16 %v1265, %v1265
          %v1267 = vld [vmem:[%s506] sm:$0xff]
          %v1268 = vld [vmem:[%s506 + $0x8] sm:$0xff]
          %v1269 = vld [vmem:[%s506 + $0x10] sm:$0xff]
          %v1270 = vld [vmem:[%s506 + $0x18] sm:$0xff]
          %v1271 = vld [vmem:[%s506 + $0x20] sm:$0xff]
          %v1272 = vld [vmem:[%s506 + $0x28] sm:$0xff]
          %v1273 = vld [vmem:[%s506 + $0x30] sm:$0xff]
          %v1274 = vld [vmem:[%s506 + $0x38] sm:$0xff]
          %v1275 = vld [vmem:[%s506 + $0x40] sm:$0xff]
          %v1276 = vld [vmem:[%s506 + $0x48] sm:$0xff]
          %v1277 = vld [vmem:[%s506 + $0x50] sm:$0xff]
          %v1278 = vld [vmem:[%s506 + $0x58] sm:$0xff]
          %v1279 = vld [vmem:[%s506 + $0x60] sm:$0xff]
          %v1280 = vld [vmem:[%s506 + $0x68] sm:$0xff]
          %v1281 = vld [vmem:[%s506 + $0x70] sm:$0xff]
          %v1282 = vld [vmem:[%s506 + $0x78] sm:$0xff]
          %v1283 = vld [vmem:[%s506 + $0x80] sm:$0xff]
          %v1284 = vld [vmem:[%s506 + $0x88] sm:$0xff]
          %v1285 = vld [vmem:[%s506 + $0x90] sm:$0xff]
          %v1286 = vld [vmem:[%s506 + $0x98] sm:$0xff]
          %v1287 = vld [vmem:[%s506 + $0xa0] sm:$0xff]
          %v1288 = vld [vmem:[%s506 + $0xa8] sm:$0xff]
          %v1289 = vld [vmem:[%s506 + $0xb0] sm:$0xff]
          %v1290 = vld [vmem:[%s506 + $0xb8] sm:$0xff]
          %v1291 = vld [vmem:[%s506 + $0xc0] sm:$0xff]
          %v1292 = vld [vmem:[%s506 + $0xc8] sm:$0xff]
          %v1293 = vld [vmem:[%s506 + $0xd0] sm:$0xff]
          %v1294 = vld [vmem:[%s506 + $0xd8] sm:$0xff]
          %v1295 = vld [vmem:[%s506 + $0xe0] sm:$0xff]
          %v1296 = vld [vmem:[%s506 + $0xe8] sm:$0xff]
          %v1297 = vld [vmem:[%s506 + $0xf0] sm:$0xff]
          %v1298 = vld [vmem:[%s506 + $0xf8] sm:$0xff]
          %v1331 = vunpack.c.l.b16 %v1267
          %v1332 = vunpack.c.h.b16 %v1267
          %v1333 = vunpack.c.l.b16 %v1268
          %v1334 = vunpack.c.h.b16 %v1268
          %v1335 = vunpack.c.l.b16 %v1269
          %v1336 = vunpack.c.h.b16 %v1269
          %v1337 = vunpack.c.l.b16 %v1270
          %v1338 = vunpack.c.h.b16 %v1270
          %v1339 = vunpack.c.l.b16 %v1271
          %v1340 = vunpack.c.h.b16 %v1271
          %v1341 = vunpack.c.l.b16 %v1272
          %v1342 = vunpack.c.h.b16 %v1272
          %v1343 = vunpack.c.l.b16 %v1273
          %v1344 = vunpack.c.h.b16 %v1273
          %v1345 = vunpack.c.l.b16 %v1274
          %v1346 = vunpack.c.h.b16 %v1274
          %v1347 = vunpack.c.l.b16 %v1275
          %v1348 = vunpack.c.h.b16 %v1275
          %v1349 = vunpack.c.l.b16 %v1276
          %v1350 = vunpack.c.h.b16 %v1276
          %v1351 = vunpack.c.l.b16 %v1277
          %v1352 = vunpack.c.h.b16 %v1277
          %v1353 = vunpack.c.l.b16 %v1278
          %v1354 = vunpack.c.h.b16 %v1278
          %v1355 = vunpack.c.l.b16 %v1279
          %v1356 = vunpack.c.h.b16 %v1279
          %v1357 = vunpack.c.l.b16 %v1280
          %v1358 = vunpack.c.h.b16 %v1280
          %v1359 = vunpack.c.l.b16 %v1281
          %v1360 = vunpack.c.h.b16 %v1281
          %v1361 = vunpack.c.l.b16 %v1282
          %v1362 = vunpack.c.h.b16 %v1282
          %v1363 = vunpack.c.l.b16 %v1283
          %v1364 = vunpack.c.h.b16 %v1283
          %v1365 = vunpack.c.l.b16 %v1284
          %v1366 = vunpack.c.h.b16 %v1284
          %v1367 = vunpack.c.l.b16 %v1285
          %v1368 = vunpack.c.h.b16 %v1285
          %v1369 = vunpack.c.l.b16 %v1286
          %v1370 = vunpack.c.h.b16 %v1286
          %v1371 = vunpack.c.l.b16 %v1287
          %v1372 = vunpack.c.h.b16 %v1287
          %v1373 = vunpack.c.l.b16 %v1288
          %v1374 = vunpack.c.h.b16 %v1288
          %v1375 = vunpack.c.l.b16 %v1289
          %v1376 = vunpack.c.h.b16 %v1289
          %v1377 = vunpack.c.l.b16 %v1290
          %v1378 = vunpack.c.h.b16 %v1290
          %v1379 = vunpack.c.l.b16 %v1291
          %v1380 = vunpack.c.h.b16 %v1291
          %v1381 = vunpack.c.l.b16 %v1292
          %v1382 = vunpack.c.h.b16 %v1292
          %v1383 = vunpack.c.l.b16 %v1293
          %v1384 = vunpack.c.h.b16 %v1293
          %v1385 = vunpack.c.l.b16 %v1294
          %v1386 = vunpack.c.h.b16 %v1294
          %v1387 = vunpack.c.l.b16 %v1295
          %v1388 = vunpack.c.h.b16 %v1295
          %v1389 = vunpack.c.l.b16 %v1296
          %v1390 = vunpack.c.h.b16 %v1296
          %v1391 = vunpack.c.l.b16 %v1297
          %v1392 = vunpack.c.h.b16 %v1297
          %v1393 = vunpack.c.l.b16 %v1298
          %v1394 = vunpack.c.h.b16 %v1298
          %v1395 = vpack.c.b16 %v1335, %v1331
          %v1396 = vpack.c.b16 %v1336, %v1332
          %v1397 = vpack.c.b16 %v1337, %v1333
          %v1398 = vpack.c.b16 %v1338, %v1334
          %v1399 = vpack.c.b16 %v1343, %v1339
          %v1400 = vpack.c.b16 %v1344, %v1340
          %v1401 = vpack.c.b16 %v1345, %v1341
          %v1402 = vpack.c.b16 %v1346, %v1342
          %v1403 = vpack.c.b16 %v1351, %v1347
          %v1404 = vpack.c.b16 %v1352, %v1348
          %v1405 = vpack.c.b16 %v1353, %v1349
          %v1406 = vpack.c.b16 %v1354, %v1350
          %v1407 = vpack.c.b16 %v1359, %v1355
          %v1408 = vpack.c.b16 %v1360, %v1356
          %v1409 = vpack.c.b16 %v1361, %v1357
          %v1410 = vpack.c.b16 %v1362, %v1358
          %v1411 = vpack.c.b16 %v1367, %v1363
          %v1412 = vpack.c.b16 %v1368, %v1364
          %v1413 = vpack.c.b16 %v1369, %v1365
          %v1414 = vpack.c.b16 %v1370, %v1366
          %v1415 = vpack.c.b16 %v1375, %v1371
          %v1416 = vpack.c.b16 %v1376, %v1372
          %v1417 = vpack.c.b16 %v1377, %v1373
          %v1418 = vpack.c.b16 %v1378, %v1374
          %v1419 = vpack.c.b16 %v1383, %v1379
          %v1420 = vpack.c.b16 %v1384, %v1380
          %v1421 = vpack.c.b16 %v1385, %v1381
          %v1422 = vpack.c.b16 %v1386, %v1382
          %v1423 = vpack.c.b16 %v1391, %v1387
          %v1424 = vpack.c.b16 %v1392, %v1388
          %v1425 = vpack.c.b16 %v1393, %v1389
          %v1426 = vpack.c.b16 %v1394, %v1390
          %1459 = vmatprep.subr.bf16.mxu0 %v1396
          %1460 = vmatpush1.bf16.msra.mxu0 %v1395
          %1461 = vmatprep.subr.bf16.mxu0 %v1400
          %1462 = vmatpush1.bf16.msra.mxu0 %v1399
          %1463 = vmatprep.subr.bf16.mxu0 %v1404
          %1464 = vmatpush1.bf16.msra.mxu0 %v1403
          %1465 = vmatprep.subr.bf16.mxu0 %v1408
          %1466 = vmatpush1.bf16.msra.mxu0 %v1407
          %1467 = vmatprep.subr.bf16.mxu0 %v1412
          %1468 = vmatpush1.bf16.msra.mxu0 %v1411
          %1469 = vmatprep.subr.bf16.mxu0 %v1416
          %1470 = vmatpush1.bf16.msra.mxu0 %v1415
          %1471 = vmatprep.subr.bf16.mxu0 %v1420
          %1472 = vmatpush1.bf16.msra.mxu0 %v1419
          %1473 = vmatprep.subr.bf16.mxu0 %v1424
          %1474 = vmatpush1.bf16.msra.mxu0 %v1423
          %1475 = vmatprep.subr.bf16.mxu0 0
          %1476 = vmatpush1.bf16.msra.mxu0 0
          %1477 = vmatprep.subr.bf16.mxu0 0
          %1478 = vmatpush1.bf16.msra.mxu0 0
          %1479 = vmatprep.subr.bf16.mxu0 0
          %1480 = vmatpush1.bf16.msra.mxu0 0
          %1481 = vmatprep.subr.bf16.mxu0 0
          %1482 = vmatpush1.bf16.msra.mxu0 0
          %1483 = vmatprep.subr.bf16.mxu0 0
          %1484 = vmatpush1.bf16.msra.mxu0 0
          %1485 = vmatprep.subr.bf16.mxu0 0
          %1486 = vmatpush1.bf16.msra.mxu0 0
          %1487 = vmatprep.subr.bf16.mxu0 0
          %1488 = vmatpush1.bf16.msra.mxu0 0
          %1489 = vmatprep.subr.bf16.mxu0 0
          %1490 = vmatpush1.bf16.msra.mxu0 0
          %1491 = vmatprep.mubr.bf16.mxu0 0
          %1492 = vmatmul.mubr.bf16.gmra.mrb[0].mxu0 %v1266
          %v1493 = vpop.f32.mrb[0].mxu0
          %v1494 = vadd.f32 0.0, %v1493
          %v1495 = vpop.f32.mrb[0].mxu0
          %v1496 = vadd.f32 0.0, %v1495
          %v1497 = vpop.f32.mrb[0].mxu0
          %v1498 = vpop.f32.mrb[0].mxu0
          %1499 = vdwg.mxu0
          %1500 = vmatprep.subr.bf16.mxu0 %v1398
          %1501 = vmatpush1.bf16.msra.mxu0 %v1397
          %1502 = vmatprep.subr.bf16.mxu0 %v1402
          %1503 = vmatpush1.bf16.msra.mxu0 %v1401
          %1504 = vmatprep.subr.bf16.mxu0 %v1406
          %1505 = vmatpush1.bf16.msra.mxu0 %v1405
          %1506 = vmatprep.subr.bf16.mxu0 %v1410
          %1507 = vmatpush1.bf16.msra.mxu0 %v1409
          %1508 = vmatprep.subr.bf16.mxu0 %v1414
          %1509 = vmatpush1.bf16.msra.mxu0 %v1413
          %1510 = vmatprep.subr.bf16.mxu0 %v1418
          %1511 = vmatpush1.bf16.msra.mxu0 %v1417
          %1512 = vmatprep.subr.bf16.mxu0 %v1422
          %1513 = vmatpush1.bf16.msra.mxu0 %v1421
          %1514 = vmatprep.subr.bf16.mxu0 %v1426
          %1515 = vmatpush1.bf16.msra.mxu0 %v1425
          %1516 = vmatprep.subr.bf16.mxu0 0
          %1517 = vmatpush1.bf16.msra.mxu0 0
          %1518 = vmatprep.subr.bf16.mxu0 0
          %1519 = vmatpush1.bf16.msra.mxu0 0
          %1520 = vmatprep.subr.bf16.mxu0 0
          %1521 = vmatpush1.bf16.msra.mxu0 0
          %1522 = vmatprep.subr.bf16.mxu0 0
          %1523 = vmatpush1.bf16.msra.mxu0 0
          %1524 = vmatprep.subr.bf16.mxu0 0
          %1525 = vmatpush1.bf16.msra.mxu0 0
          %1526 = vmatprep.subr.bf16.mxu0 0
          %1527 = vmatpush1.bf16.msra.mxu0 0
          %1528 = vmatprep.subr.bf16.mxu0 0
          %1529 = vmatpush1.bf16.msra.mxu0 0
          %1530 = vmatprep.subr.bf16.mxu0 0
          %1531 = vmatpush1.bf16.msra.mxu0 0
          %1532 = vmatprep.mubr.bf16.mxu0 0
          %1533 = vmatmul.mubr.bf16.gmra.mrb[0].mxu0 %v1266
          %v1534 = vpop.f32.mrb[0].mxu0
          %v1535 = vadd.f32 0.0, %v1534
          %v1536 = vpop.f32.mrb[0].mxu0
          %v1537 = vadd.f32 0.0, %v1536
          %v1538 = vpop.f32.mrb[0].mxu0
          %v1539 = vpop.f32.mrb[0].mxu0
          %1540 = vdwg.mxu0
          %v1541 = vld [vmem:[%s488] sm:$0xff]
          %v1542 = vld [vmem:[%s488 + $0x8] sm:$0xff]
          %v1543 = vunpack.c.l.bf16 %v1541
          %v1544 = vunpack.c.h.bf16 %v1541
          %v1545 = vunpack.c.l.bf16 %v1542
          %v1546 = vunpack.c.h.bf16 %v1542
          %v1547 = vmul.f32 %v1494, %v1543
          %v1548 = vmul.f32 %v1496, %v1544
          %v1549 = vmul.f32 %v1535, %v1545
          %v1550 = vmul.f32 %v1537, %v1546
          %v1551 = vpack.c.bf16 %v1547, %v1547
          %v1552 = vpack.c.bf16 %v1548, %v1548
          %v1553 = vpack.c.bf16 %v1549, %v1549
          %v1554 = vpack.c.bf16 %v1550, %v1550
          %v1559 = vunpack.c.l.b16 %v1551
          %v1560 = vunpack.c.l.b16 %v1552
          %v1561 = vunpack.c.l.b16 %v1553
          %v1562 = vunpack.c.l.b16 %v1554
          %v1563 = vpack.c.b16 %v1560, %v1559
          %v1564 = vpack.c.b16 %v1562, %v1561
          %1567 = vst [vmem:[%s558] sm:$0xff] %v1563
          %1568 = vst [vmem:[%s558 + $0x8] sm:$0xff] %v1564
        $region92: #{tpu_custom_call.1} parent=55 // pred_fallthru
          _
        %s1569 = sand.u32 %s301, 1
        %s1570 = scalar_lea.sflag [#allocation6], %s1569
        %s1571 = sand.u32 %s301, 1
        %s1572 = smul.addr %s1571, 16
        %s1573 = scalar_lea.vmem [#allocation13], %s1572
        // Predicated region
        $region93: #{tpu_custom_call.1} parent=55 // pred_check
          %p1574 = pneg %p311
        $region94: #{tpu_custom_call.1} parent=55 // pred_check_branch
          %1576 = sbr.rel (%p1574) target = $region96
        $region95: #{tpu_custom_call.1} parent=55 // pred_region
          %s1577 = ssub.s32 %s38, 2
          %p1578 = scmp.gt.s32.totalorder %s1577, 0
          %s1579 = scalar_select %p1578, %s1577, 0
          %s1580 = smul.u32 4, %s1579
          %s1582 = ssub.s32 256, 256
          %1583 = vsyncadd %s1570, %s1582
          %s1584 = smul.addr %s37, 8
          %s1585 = sadd.s32 %s1580, %s1584
          %s1586 = smul.addr %s1585, 64
          %s1587 = scalar_lea.hbm %s9, %s1586
          %s1589 = sshll.u32 %s1573, 4
          %s1590 = int_to_ptr.vmem [resolvable:$true] %s1589
          %1592 = dma.vmem_to_hbm [thread:$0]  %s1590, 256, %s1587, %s1570
        $region96: #{tpu_custom_call.1} parent=55 // pred_fallthru
          _
        // Predicated region
        $region97: #{tpu_custom_call.1} parent=55 // pred_check
          %p1593 = pneg %p337
        $region98: #{tpu_custom_call.1} parent=55 // pred_check_branch
          %1595 = sbr.rel (%p1593) target = $region100
        $region99: #{tpu_custom_call.1} parent=55 // pred_region
          %s1597 = ssub.s32 128, 128
          %1598 = vsyncadd [#allocation15], %s1597
          %s1599 = smul.addr %s37, 128
          %s1600 = scalar_lea.hbm %s10, %s1599
          %s1602 = sshll.u32 [#allocation14], 4
          %s1603 = int_to_ptr.vmem [resolvable:$true] %s1602
          %1605 = dma.vmem_to_hbm [thread:$0]  %s1603, 128, %s1600, [#allocation15]
        $region100: #{tpu_custom_call.1} parent=55 // pred_fallthru
          _
        // Predicated region
        $region101: #{tpu_custom_call.1} parent=55 // pred_check
          %p1606 = pneg %p337
        $region102: #{tpu_custom_call.1} parent=55 // pred_check_branch
          %1608 = sbr.rel (%p1606) target = $region104
        $region103: #{tpu_custom_call.1} parent=55 // pred_region
          %1609 = dma.done [#allocation15], 128
        $region104: #{tpu_custom_call.1} parent=55 // pred_fallthru
          _
      $region56: #{tpu_custom_call.1} parent=5 // pred_fallthru
        _
      %p1610 = scmp.le.s32.totalorder 2, %s28
      // Predicated region
      $region105: #{tpu_custom_call.1} parent=5 // pred_check
        %p1611 = pneg %p1610
      $region106: #{tpu_custom_call.1} parent=5 // pred_check_branch
        %1613 = sbr.rel (%p1611) target = $region108
      $region107: #{tpu_custom_call.1} parent=5 // pred_region
        %s1614 = ssub.s32 %s28, 2
        // Predicated region
        $region109: #{tpu_custom_call.1} parent=107 // pred_check
          %p1615 = pneg %p317
        $region110: #{tpu_custom_call.1} parent=107 // pred_check_branch
          %1617 = sbr.rel (%p1615) target = $region112
        $region111: #{tpu_custom_call.1} parent=107 // pred_region
          %s1618 = sand.u32 %s302, 1
          %s1619 = scalar_lea.sflag [#allocation6], %s1618
          %s1620 = sand.u32 %s302, 1
          %s1621 = smul.addr %s1620, 16
          %s1622 = scalar_lea.vmem [#allocation13], %s1621
          %1623 = dma.done %s1619, 256
        $region112: #{tpu_custom_call.1} parent=107 // pred_fallthru
          _
      $region108: #{tpu_custom_call.1} parent=5 // pred_fallthru
        _
    $region6: #{tpu_custom_call.1} parent=1 // loop_footer
      %s32 = sadd.s32 1, %s28
    $region7: #{tpu_custom_call.1} parent=1 // loop_footer_branch
      %27 = sbr.rel target = $region3
    $region8: #{tpu_custom_call.1} parent=1 // loop_exit
      _
    %1624 = vsyncpa [#allocation5], 1
    %s1625 = scalar_lea.sflag [#allocation5], 1
    %1626 = vsyncpa %s1625, 1
    %1627 = vsyncpa [#allocation8], 1
    %s1628 = scalar_lea.sflag [#allocation8], 1
    %1629 = vsyncpa %s1628, 1
    %1630 = vsyncpa [#allocation11], 1
    %1631 = vsyncpa [#allocation6], 1
    %s1632 = scalar_lea.sflag [#allocation6], 1
    %1633 = vsyncpa %s1632, 1
    %1634 = vsyncpa [#allocation15], 1

// kernel: tpu_custom_call.1
$region0: #{tpu_custom_call.1}
  #allocation0 [shape = 'u32[]', space=smem, size = 0x4, offset = 0x4, fixed_abs, tag = 'smem constant byte address 0x4 - core index']
  #allocation1 [shape = 'u32[144,128]{1,0:T(1,128)}', space=vmem, size = 0x12000, scoped, tag = 'internal scratch']
  #allocation2 [shape = 'f32[8,128]{1,0:T(8,128)}', space=vmem, size = 0x1000, scoped, tag = 'scratch operand']
  #allocation3 [shape = 'f32[8,128]{1,0:T(8,128)}', space=vmem, size = 0x1000, scoped, tag = 'scratch operand']
  %s0 = inlined_call_operand.hbm [shape: bf16[8,1024], index: 0, kind: input, shape index: {}]
  %s1 = inlined_call_operand.hbm [shape: bf16[1024,128], index: 1, kind: input, shape index: {}]
  %s2 = inlined_call_operand.hbm [shape: bf16[128,1024], index: 2, kind: input, shape index: {}]
  %s3 = inlined_call_operand.vmem [shape: f32[1,128], index: 3, kind: input, shape index: {}]
  %s4 = inlined_call_operand.hbm [shape: bf16[128,128], index: 4, kind: input, shape index: {}]
  %s5 = inlined_call_operand.hbm [shape: bf16[128,128], index: 5, kind: input, shape index: {}]
  %s6 = inlined_call_operand.vmem [shape: f32[1,128], index: 6, kind: input, shape index: {}]
  %s7 = inlined_call_operand.vmem [shape: f32[1,128], index: 7, kind: input, shape index: {}]
  %s8 = inlined_call_operand.vmem [shape: f32[1,128], index: 8, kind: input, shape index: {}]
  %s9 = inlined_call_operand.hbm [shape: bf16[8,1024], index: 9, kind: output, shape index: {0}]
  %s10 = inlined_call_operand.hbm [shape: f32[8,128], index: 10, kind: output, shape index: {1}]
  %11 = xla_tuple %s9, %s10
  %s12 = sld [smem:[#allocation0]]
  $region113: #{tpu_custom_call.1} parent=0
    _
  %s14 = ssub.s32 1, %s12
  %s15 = scalar_select 0, %s14, %s12
  $region1: #{tpu_custom_call.1} parent=0
    #allocation4 [shape = 'u8[16384]{0}', space=vmem, size = 0x4000, scoped, tag = 'input window, operand 0']
    #allocation5 [shape = 's32[2]{0}', space=sflag, size = 0x8, scoped, tag = 'scoped memory for tpu_custom_call.1']
    #allocation6 [shape = 's32[2]{0}', space=sflag, size = 0x8, scoped, tag = 'scoped memory for tpu_custom_call.1']
    #allocation7 [shape = 'u8[262144]{0}', space=vmem, size = 0x40000, scoped, tag = 'input window, operand 1']
    #allocation8 [shape = 's32[2]{0}', space=sflag, size = 0x8, scoped, tag = 'scoped memory for tpu_custom_call.1']
    #allocation9 [shape = 'u8[262144]{0}', space=vmem, size = 0x40000, scoped, tag = 'input window, operand 2']
    #allocation10 [shape = 'u8[32768]{0}', space=vmem, size = 0x8000, scoped, tag = 'input window, operand 4, single buffered']
    #allocation11 [shape = 's32[1]{0}', space=sflag, size = 0x4, scoped, tag = 'scoped memory for tpu_custom_call.1']
    #allocation12 [shape = 'u8[32768]{0}', space=vmem, size = 0x8000, scoped, tag = 'input window, operand 5, single buffered']
    #allocation13 [shape = 'u8[16384]{0}', space=vmem, size = 0x4000, scoped, tag = 'output window, operand 0']
    #allocation14 [shape = 'u8[4096]{0}', space=vmem, size = 0x1000, scoped, tag = 'output window, operand 1, single buffered']
    #allocation15 [shape = 's32[1]{0}', space=sflag, size = 0x4, scoped, tag = 'scoped memory for tpu_custom_call.1']
    %16 = vsyncpa [#allocation5], 0
    %s17 = scalar_lea.sflag [#allocation5], 1
    %18 = vsyncpa %s17, 0
    %19 = vsyncpa [#allocation8], 0
    %s20 = scalar_lea.sflag [#allocation8], 1
    %21 = vsyncpa %s20, 0
    %22 = vsyncpa [#allocation11], 0
    %23 = vsyncpa [#allocation6], 0
    %s24 = scalar_lea.sflag [#allocation6], 1
    %25 = vsyncpa %s24, 0
    %26 = vsyncpa [#allocation15], 0
    loop: start=0, step=1, limit=6
    $region2: #{tpu_custom_call.1} parent=1 // loop_pre_header
      _
    $region3: #{tpu_custom_call.1} parent=1 // loop_header
      %s28 = sphi 0, %s32
      %p29 = scmp.ge.s32.totalorder %s28, 6
      %s35 = sphi 0, %s47
      %s36 = sphi 0, %s43
      %s37 = sphi 0, %s35
      %s38 = sphi 0, %s36
      %s39 = sphi 0, %s37
      %s40 = sphi 0, %s38
      %s76 = sphi 0, %s78
      %s79 = sphi 0, %s76
      %s80 = sphi 0, %s79
      %s96 = sphi 0, %s80
      %s106 = sphi 0, %s108
      %s109 = sphi 0, %s106
      %s110 = sphi 0, %s109
      %s126 = sphi 0, %s110
      %s138 = sphi 0, %s140
      %s141 = sphi 0, %s138
      %s142 = sphi 0, %s141
      %s158 = sphi 0, %s142
      %s162 = sphi 0, %s162
      %s164 = sphi 0, %s162
      %s165 = sphi 0, %s164
      %s179 = sphi 0, %s165
      %s183 = sphi 0, %s183
      %s185 = sphi 0, %s183
      %s186 = sphi 0, %s185
      %s200 = sphi 0, %s186
      %s204 = sphi 0, %s204
      %s206 = sphi 0, %s204
      %s207 = sphi 0, %s206
      %s221 = sphi 0, %s207
      %s225 = sphi 0, %s225
      %s227 = sphi 0, %s225
      %s228 = sphi 0, %s227
      %s242 = sphi 0, %s228
      %s246 = sphi 0, %s246
      %s248 = sphi 0, %s246
      %s249 = sphi 0, %s248
      %s263 = sphi 0, %s249
      %s267 = sphi 0, %s267
      %s269 = sphi 0, %s267
      %s270 = sphi 0, %s269
      %s284 = sphi 0, %s270
      %s298 = sphi 0, %s300
      %s301 = sphi 0, %s298
      %s302 = sphi 0, %s301
      %s318 = sphi 0, %s302
      %s324 = sphi 0, %s326
      %s327 = sphi 0, %s324
      %s328 = sphi 0, %s327
      %s344 = sphi 0, %s328
    $region4: #{tpu_custom_call.1} parent=1 // loop_header_branch
      %31 = sbr.rel (%p29) target = $region8
    $region5: #{tpu_custom_call.1} parent=1 // loop_body
      %s33 = ssub.s32 %s28, 1
      %s34 = ssub.s32 %s28, 2
      %s41 = sadd.s32 1, %s36
      %p42 = scmp.ge.s32.totalorder %s41, 4
      %s43 = scalar_select %p42, 0, %s41
      %s44 = sadd.s32 1, %s35
      %s45 = scalar_select %p42, %s44, %s35
      %p46 = scmp.ge.s32.totalorder %s45, 1
      %s47 = scalar_select %p46, 0, %s45
      %p48 = scmp.lt.s32.totalorder %s36, 0
      %s49 = ssub.s32 0, %s36
      %s50 = scalar_select %p48, %s49, %s36
      %s51 = sand.u32 %s50, 1
      %s52 = ssub.s32 0, %s51
      %s53 = scalar_select %p48, %s52, %s51
      %p54 = scmp.ne.s32.totalorder %s53, 0
      %p55 = scmp.lt.s32.totalorder %s53, 0
      %p56 = pnand %p55, %p54
      %p57 = pneg %p56
      %s58 = sadd.s32 %s53, 2
      %s59 = scalar_select %p57, %s58, %s53
      %p60 = scmp.lt.s32.totalorder %s43, 0
      %s61 = ssub.s32 0, %s43
      %s62 = scalar_select %p60, %s61, %s43
      %s63 = sand.u32 %s62, 1
      %s64 = ssub.s32 0, %s63
      %s65 = scalar_select %p60, %s64, %s63
      %p66 = scmp.ne.s32.totalorder %s65, 0
      %p67 = scmp.lt.s32.totalorder %s65, 0
      %p68 = pnand %p67, %p66
      %p69 = pneg %p68
      %s70 = sadd.s32 %s65, 2
      %s71 = scalar_select %p69, %s70, %s65
      %s72 = ssub.s32 %s35, %s47
      %s73 = ssub.s32 %s59, %s71
      %s74 = sor.u32 %s72, %s73
      %p75 = scmp.eq.s32.totalorder %s74, 0
      %s77 = sadd.s32 %s76, 1
      %s78 = scalar_select %p75, %s76, %s77
      %p81 = pneg %p75
      %p82 = scmp.eq.s32.totalorder %s28, 3
      %p83 = por %p81, %p82
      %p84 = scmp.ne.s32.totalorder %s76, %s79
      %p85 = scmp.eq.s32.totalorder %s28, 0
      %p86 = por %p84, %p85
      %p87 = scmp.ne.s32.totalorder %s76, %s79
      %p88 = scmp.eq.s32.totalorder %s33, 3
      %p89 = por %p87, %p88
      %p90 = scmp.ne.s32.totalorder %s79, %s80
      %p91 = scmp.eq.s32.totalorder %s33, 0
      %p92 = por %p90, %p91
      %p93 = scmp.ne.s32.totalorder %s79, %s80
      %p94 = scmp.eq.s32.totalorder %s34, 3
      %p95 = por %p93, %p94
      %p97 = scmp.ne.s32.totalorder %s80, %s96
      %p98 = scmp.eq.s32.totalorder %s34, 0
      %p99 = por %p97, %p98
      %p100 = scmp.lt.s32.totalorder %s36, 1
      %s101 = scalar_select %p100, %s36, 1
      %p102 = scmp.lt.s32.totalorder %s43, 1
      %s103 = scalar_select %p102, %s43, 1
      %s104 = ssub.s32 %s101, %s103
      %p105 = scmp.eq.s32.totalorder %s104, 0
      %s107 = sadd.s32 %s106, 1
      %s108 = scalar_select %p105, %s106, %s107
      %p111 = pneg %p105
      %p112 = scmp.eq.s32.totalorder %s28, 3
      %p113 = por %p111, %p112
      %p114 = scmp.ne.s32.totalorder %s106, %s109
      %p115 = scmp.eq.s32.totalorder %s28, 0
      %p116 = por %p114, %p115
      %p117 = scmp.ne.s32.totalorder %s106, %s109
      %p118 = scmp.eq.s32.totalorder %s33, 3
      %p119 = por %p117, %p118
      %p120 = scmp.ne.s32.totalorder %s109, %s110
      %p121 = scmp.eq.s32.totalorder %s33, 0
      %p122 = por %p120, %p121
      %p123 = scmp.ne.s32.totalorder %s109, %s110
      %p124 = scmp.eq.s32.totalorder %s34, 3
      %p125 = por %p123, %p124
      %p127 = scmp.ne.s32.totalorder %s110, %s126
      %p128 = scmp.eq.s32.totalorder %s34, 0
      %p129 = por %p127, %p128
      %s130 = ssub.s32 %s36, 2
      %p131 = scmp.gt.s32.totalorder %s130, 0
      %s132 = scalar_select %p131, %s130, 0
      %s133 = ssub.s32 %s43, 2
      %p134 = scmp.gt.s32.totalorder %s133, 0
      %s135 = scalar_select %p134, %s133, 0
      %s136 = ssub.s32 %s132, %s135
      %p137 = scmp.eq.s32.totalorder %s136, 0
      %s139 = sadd.s32 %s138, 1
      %s140 = scalar_select %p137, %s138, %s139
      %p143 = pneg %p137
      %p144 = scmp.eq.s32.totalorder %s28, 3
      %p145 = por %p143, %p144
      %p146 = scmp.ne.s32.totalorder %s138, %s141
      %p147 = scmp.eq.s32.totalorder %s28, 0
      %p148 = por %p146, %p147
      %p149 = scmp.ne.s32.totalorder %s138, %s141
      %p150 = scmp.eq.s32.totalorder %s33, 3
      %p151 = por %p149, %p150
      %p152 = scmp.ne.s32.totalorder %s141, %s142
      %p153 = scmp.eq.s32.totalorder %s33, 0
      %p154 = por %p152, %p153
      %p155 = scmp.ne.s32.totalorder %s141, %s142
      %p156 = scmp.eq.s32.totalorder %s34, 3
      %p157 = por %p155, %p156
      %p159 = scmp.ne.s32.totalorder %s142, %s158
      %p160 = scmp.eq.s32.totalorder %s34, 0
      %p161 = por %p159, %p160
      %s163 = sadd.s32 %s162, 1
      %p166 = scmp.eq.s32.totalorder %s28, 3
      %p167 = scmp.ne.s32.totalorder %s162, %s164
      %p168 = scmp.eq.s32.totalorder %s28, 0
      %p169 = por %p167, %p168
      %p170 = scmp.ne.s32.totalorder %s162, %s164
      %p171 = scmp.eq.s32.totalorder %s33, 3
      %p172 = por %p170, %p171
      %p173 = scmp.ne.s32.totalorder %s164, %s165
      %p174 = scmp.eq.s32.totalorder %s33, 0
      %p175 = por %p173, %p174
      %p176 = scmp.ne.s32.totalorder %s164, %s165
      %p177 = scmp.eq.s32.totalorder %s34, 3
      %p178 = por %p176, %p177
      %p180 = scmp.ne.s32.totalorder %s165, %s179
      %p181 = scmp.eq.s32.totalorder %s34, 0
      %p182 = por %p180, %p181
      %s184 = sadd.s32 %s183, 1
      %p187 = scmp.eq.s32.totalorder %s28, 3
      %p188 = scmp.ne.s32.totalorder %s183, %s185
      %p189 = scmp.eq.s32.totalorder %s28, 0
      %p190 = por %p188, %p189
      %p191 = scmp.ne.s32.totalorder %s183, %s185
      %p192 = scmp.eq.s32.totalorder %s33, 3
      %p193 = por %p191, %p192
      %p194 = scmp.ne.s32.totalorder %s185, %s186
      %p195 = scmp.eq.s32.totalorder %s33, 0
      %p196 = por %p194, %p195
      %p197 = scmp.ne.s32.totalorder %s185, %s186
      %p198 = scmp.eq.s32.totalorder %s34, 3
      %p199 = por %p197, %p198
      %p201 = scmp.ne.s32.totalorder %s186, %s200
      %p202 = scmp.eq.s32.totalorder %s34, 0
      %p203 = por %p201, %p202
      %s205 = sadd.s32 %s204, 1
      %p208 = scmp.eq.s32.totalorder %s28, 3
      %p209 = scmp.ne.s32.totalorder %s204, %s206
      %p210 = scmp.eq.s32.totalorder %s28, 0
      %p211 = por %p209, %p210
      %p212 = scmp.ne.s32.totalorder %s204, %s206
      %p213 = scmp.eq.s32.totalorder %s33, 3
      %p214 = por %p212, %p213
      %p215 = scmp.ne.s32.totalorder %s206, %s207
      %p216 = scmp.eq.s32.totalorder %s33, 0
      %p217 = por %p215, %p216
      %p218 = scmp.ne.s32.totalorder %s206, %s207
      %p219 = scmp.eq.s32.totalorder %s34, 3
      %p220 = por %p218, %p219
      %p222 = scmp.ne.s32.totalorder %s207, %s221
      %p223 = scmp.eq.s32.totalorder %s34, 0
      %p224 = por %p222, %p223
      %s226 = sadd.s32 %s225, 1
      %p229 = scmp.eq.s32.totalorder %s28, 3
      %p230 = scmp.ne.s32.totalorder %s225, %s227
      %p231 = scmp.eq.s32.totalorder %s28, 0
      %p232 = por %p230, %p231
      %p233 = scmp.ne.s32.totalorder %s225, %s227
      %p234 = scmp.eq.s32.totalorder %s33, 3
      %p235 = por %p233, %p234
      %p236 = scmp.ne.s32.totalorder %s227, %s228
      %p237 = scmp.eq.s32.totalorder %s33, 0
      %p238 = por %p236, %p237
      %p239 = scmp.ne.s32.totalorder %s227, %s228
      %p240 = scmp.eq.s32.totalorder %s34, 3
      %p241 = por %p239, %p240
      %p243 = scmp.ne.s32.totalorder %s228, %s242
      %p244 = scmp.eq.s32.totalorder %s34, 0
      %p245 = por %p243, %p244
      %s247 = sadd.s32 %s246, 1
      %p250 = scmp.eq.s32.totalorder %s28, 3
      %p251 = scmp.ne.s32.totalorder %s246, %s248
      %p252 = scmp.eq.s32.totalorder %s28, 0
      %p253 = por %p251, %p252
      %p254 = scmp.ne.s32.totalorder %s246, %s248
      %p255 = scmp.eq.s32.totalorder %s33, 3
      %p256 = por %p254, %p255
      %p257 = scmp.ne.s32.totalorder %s248, %s249
      %p258 = scmp.eq.s32.totalorder %s33, 0
      %p259 = por %p257, %p258
      %p260 = scmp.ne.s32.totalorder %s248, %s249
      %p261 = scmp.eq.s32.totalorder %s34, 3
      %p262 = por %p260, %p261
      %p264 = scmp.ne.s32.totalorder %s249, %s263
      %p265 = scmp.eq.s32.totalorder %s34, 0
      %p266 = por %p264, %p265
      %s268 = sadd.s32 %s267, 1
      %p271 = scmp.eq.s32.totalorder %s28, 3
      %p272 = scmp.ne.s32.totalorder %s267, %s269
      %p273 = scmp.eq.s32.totalorder %s28, 0
      %p274 = por %p272, %p273
      %p275 = scmp.ne.s32.totalorder %s267, %s269
      %p276 = scmp.eq.s32.totalorder %s33, 3
      %p277 = por %p275, %p276
      %p278 = scmp.ne.s32.totalorder %s269, %s270
      %p279 = scmp.eq.s32.totalorder %s33, 0
      %p280 = por %p278, %p279
      %p281 = scmp.ne.s32.totalorder %s269, %s270
      %p282 = scmp.eq.s32.totalorder %s34, 3
      %p283 = por %p281, %p282
      %p285 = scmp.ne.s32.totalorder %s270, %s284
      %p286 = scmp.eq.s32.totalorder %s34, 0
      %p287 = por %p285, %p286
      %s288 = ssub.s32 %s36, 2
      %p289 = scmp.gt.s32.totalorder %s288, 0
      %s290 = scalar_select %p289, %s288, 0
      %s291 = ssub.s32 %s43, 2
      %p292 = scmp.gt.s32.totalorder %s291, 0
      %s293 = scalar_select %p292, %s291, 0
      %s294 = ssub.s32 %s35, %s47
      %s295 = ssub.s32 %s290, %s293
      %s296 = sor.u32 %s294, %s295
      %p297 = scmp.eq.s32.totalorder %s296, 0
      %s299 = sadd.s32 %s298, 1
      %s300 = scalar_select %p297, %s298, %s299
      %p303 = pneg %p297
      %p304 = scmp.eq.s32.totalorder %s28, 3
      %p305 = por %p303, %p304
      %p306 = scmp.ne.s32.totalorder %s298, %s301
      %p307 = scmp.eq.s32.totalorder %s28, 0
      %p308 = por %p306, %p307
      %p309 = scmp.ne.s32.totalorder %s298, %s301
      %p310 = scmp.eq.s32.totalorder %s33, 3
      %p311 = por %p309, %p310
      %p312 = scmp.ne.s32.totalorder %s301, %s302
      %p313 = scmp.eq.s32.totalorder %s33, 0
      %p314 = por %p312, %p313
      %p315 = scmp.ne.s32.totalorder %s301, %s302
      %p316 = scmp.eq.s32.totalorder %s34, 3
      %p317 = por %p315, %p316
      %p319 = scmp.ne.s32.totalorder %s302, %s318
      %p320 = scmp.eq.s32.totalorder %s34, 0
      %p321 = por %p319, %p320
      %s322 = ssub.s32 %s35, %s47
      %p323 = scmp.eq.s32.totalorder %s322, 0
      %s325 = sadd.s32 %s324, 1
      %s326 = scalar_select %p323, %s324, %s325
      %p329 = pneg %p323
      %p330 = scmp.eq.s32.totalorder %s28, 3
      %p331 = por %p329, %p330
      %p332 = scmp.ne.s32.totalorder %s324, %s327
      %p333 = scmp.eq.s32.totalorder %s28, 0
      %p334 = por %p332, %p333
      %p335 = scmp.ne.s32.totalorder %s324, %s327
      %p336 = scmp.eq.s32.totalorder %s33, 3
      %p337 = por %p335, %p336
      %p338 = scmp.ne.s32.totalorder %s327, %s328
      %p339 = scmp.eq.s32.totalorder %s33, 0
      %p340 = por %p338, %p339
      %p341 = scmp.ne.s32.totalorder %s327, %s328
      %p342 = scmp.eq.s32.totalorder %s34, 3
      %p343 = por %p341, %p342
      %p345 = scmp.ne.s32.totalorder %s328, %s344
      %p346 = scmp.eq.s32.totalorder %s34, 0
      %p347 = por %p345, %p346
      %p348 = scmp.le.s32.totalorder 1, %s28
      %p349 = scmp.lt.s32.totalorder %s28, 5
      %p350 = pnand %p348, %p349
      %p351 = pneg %p350
      // Predicated region
      $region9: #{tpu_custom_call.1} parent=5 // pred_check
        _
      $region10: #{tpu_custom_call.1} parent=5 // pred_check_branch
        %353 = sbr.rel (%p350) target = $region12
      $region11: #{tpu_custom_call.1} parent=5 // pred_region
        %s354 = ssub.s32 %s28, 1
        // Predicated region
        $region13: #{tpu_custom_call.1} parent=11 // pred_check
          %p355 = pneg %p175
        $region14: #{tpu_custom_call.1} parent=11 // pred_check_branch
          %357 = sbr.rel (%p355) target = $region16
        $region15: #{tpu_custom_call.1} parent=11 // pred_region
          _
        $region16: #{tpu_custom_call.1} parent=11 // pred_fallthru
          _
        // Predicated region
        $region17: #{tpu_custom_call.1} parent=11 // pred_check
          %p358 = pneg %p196
        $region18: #{tpu_custom_call.1} parent=11 // pred_check_branch
          %360 = sbr.rel (%p358) target = $region20
        $region19: #{tpu_custom_call.1} parent=11 // pred_region
          %s362 = ssub.s32 1024, 1024
          %363 = vsyncadd [#allocation11], %s362
          %s364 = sshll.u32 [#allocation10], 4
          %s365 = int_to_ptr.vmem [resolvable:$true] %s364
          %370 = dma.hbm_to_vmem [thread:$0]  %s4, 1024, %s365, [#allocation11], 64, 64, 4
        $region20: #{tpu_custom_call.1} parent=11 // pred_fallthru
          _
        // Predicated region
        $region21: #{tpu_custom_call.1} parent=11 // pred_check
          %p371 = pneg %p217
        $region22: #{tpu_custom_call.1} parent=11 // pred_check_branch
          %373 = sbr.rel (%p371) target = $region24
        $region23: #{tpu_custom_call.1} parent=11 // pred_region
          %s375 = ssub.s32 1024, 1024
          %376 = vsyncadd [#allocation11], %s375
          %s377 = sshll.u32 [#allocation12], 4
          %s378 = int_to_ptr.vmem [resolvable:$true] %s377
          %383 = dma.hbm_to_vmem [thread:$0]  %s5, 1024, %s378, [#allocation11], 64, 64, 4
        $region24: #{tpu_custom_call.1} parent=11 // pred_fallthru
          _
        // Predicated region
        $region25: #{tpu_custom_call.1} parent=11 // pred_check
          %p384 = pneg %p238
        $region26: #{tpu_custom_call.1} parent=11 // pred_check_branch
          %386 = sbr.rel (%p384) target = $region28
        $region27: #{tpu_custom_call.1} parent=11 // pred_region
          _
        $region28: #{tpu_custom_call.1} parent=11 // pred_fallthru
          _
        // Predicated region
        $region29: #{tpu_custom_call.1} parent=11 // pred_check
          %p387 = pneg %p259
        $region30: #{tpu_custom_call.1} parent=11 // pred_check_branch
          %389 = sbr.rel (%p387) target = $region32
        $region31: #{tpu_custom_call.1} parent=11 // pred_region
          _
        $region32: #{tpu_custom_call.1} parent=11 // pred_fallthru
          _
        // Predicated region
        $region33: #{tpu_custom_call.1} parent=11 // pred_check
          %p390 = pneg %p280
        $region34: #{tpu_custom_call.1} parent=11 // pred_check_branch
          %392 = sbr.rel (%p390) target = $region36
        $region35: #{tpu_custom_call.1} parent=11 // pred_region
          _
        $region36: #{tpu_custom_call.1} parent=11 // pred_fallthru
          _
      $region12: #{tpu_custom_call.1} parent=5 // pred_fallthru
        _
      %p393 = scmp.lt.s32.totalorder %s28, 4
      // Predicated region
      $region37: #{tpu_custom_call.1} parent=5 // pred_check
        %p394 = pneg %p393
      $region38: #{tpu_custom_call.1} parent=5 // pred_check_branch
        %396 = sbr.rel (%p394) target = $region40
      $region39: #{tpu_custom_call.1} parent=5 // pred_region
        // Predicated region
        $region41: #{tpu_custom_call.1} parent=39 // pred_check
          %p397 = pneg %p86
        $region42: #{tpu_custom_call.1} parent=39 // pred_check_branch
          %399 = sbr.rel (%p397) target = $region44
        $region43: #{tpu_custom_call.1} parent=39 // pred_region
          %s400 = sand.u32 %s76, 1
          %s401 = scalar_lea.sflag [#allocation5], %s400
          %s402 = sand.u32 %s76, 1
          %s403 = smul.addr %s402, 16
          %s404 = scalar_lea.vmem [#allocation4], %s403
          %p405 = scmp.lt.s32.totalorder %s36, 0
          %s406 = ssub.s32 0, %s36
          %s407 = scalar_select %p405, %s406, %s36
          %s408 = sand.u32 %s407, 1
          %s409 = ssub.s32 0, %s408
          %s410 = scalar_select %p405, %s409, %s408
          %p411 = scmp.ne.s32.totalorder %s410, 0
          %p412 = scmp.lt.s32.totalorder %s410, 0
          %p413 = pnand %p412, %p411
          %p414 = pneg %p413
          %s415 = sadd.s32 %s410, 2
          %s416 = scalar_select %p414, %s415, %s410
          %s417 = smul.u32 4, %s416
          %s419 = ssub.s32 256, 256
          %420 = vsyncadd %s401, %s419
          %s421 = smul.addr %s35, 8
          %s422 = sadd.s32 %s417, %s421
          %s423 = smul.addr %s422, 64
          %s424 = scalar_lea.hbm %s0, %s423
          %s426 = sshll.u32 %s404, 4
          %s427 = int_to_ptr.vmem [resolvable:$true] %s426
          %429 = dma.hbm_to_vmem [thread:$0]  %s424, 256, %s427, %s401
        $region44: #{tpu_custom_call.1} parent=39 // pred_fallthru
          _
        // Predicated region
        $region45: #{tpu_custom_call.1} parent=39 // pred_check
          %p430 = pneg %p116
        $region46: #{tpu_custom_call.1} parent=39 // pred_check_branch
          %432 = sbr.rel (%p430) target = $region48
        $region47: #{tpu_custom_call.1} parent=39 // pred_region
          %s433 = sand.u32 %s28, 1
          %s434 = scalar_lea.sflag [#allocation8], %s433
          %s435 = sand.u32 %s106, 1
          %s436 = smul.addr %s435, 256
          %s437 = scalar_lea.vmem [#allocation7], %s436
          %p438 = scmp.lt.s32.totalorder %s36, 1
          %s439 = scalar_select %p438, %s36, 1
          %s440 = smul.u32 64, %s439
          %s442 = ssub.s32 4096, 4096
          %443 = vsyncadd %s434, %s442
          %s444 = smul.addr %s440, 64
          %s445 = scalar_lea.hbm %s1, %s444
          %s446 = sshll.u32 %s437, 4
          %s447 = int_to_ptr.vmem [resolvable:$true] %s446
          %452 = dma.hbm_to_vmem [thread:$0]  %s445, 4096, %s447, %s434, 64, 64, 4
        $region48: #{tpu_custom_call.1} parent=39 // pred_fallthru
          _
        // Predicated region
        $region49: #{tpu_custom_call.1} parent=39 // pred_check
          %p453 = pneg %p148
        $region50: #{tpu_custom_call.1} parent=39 // pred_check_branch
          %455 = sbr.rel (%p453) target = $region52
        $region51: #{tpu_custom_call.1} parent=39 // pred_region
          %s456 = sand.u32 %s28, 1
          %s457 = scalar_lea.sflag [#allocation8], %s456
          %s458 = sand.u32 %s138, 1
          %s459 = smul.addr %s458, 256
          %s460 = scalar_lea.vmem [#allocation9], %s459
          %s461 = ssub.s32 %s36, 2
          %p462 = scmp.gt.s32.totalorder %s461, 0
          %s463 = scalar_select %p462, %s461, 0
          %s464 = smul.u32 4, %s463
          %s466 = ssub.s32 4096, 4096
          %467 = vsyncadd %s457, %s466
          %s468 = smul.addr %s464, 64
          %s469 = scalar_lea.hbm %s2, %s468
          %s470 = sshll.u32 %s460, 4
          %s471 = int_to_ptr.vmem [resolvable:$true] %s470
          %476 = dma.hbm_to_vmem [thread:$0]  %s469, 4096, %s471, %s457, 512, 256, 16
        $region52: #{tpu_custom_call.1} parent=39 // pred_fallthru
          _
      $region40: #{tpu_custom_call.1} parent=5 // pred_fallthru
        _
      %p477 = scmp.le.s32.totalorder 1, %s28
      %p478 = scmp.lt.s32.totalorder %s28, 5
      %p479 = pnand %p477, %p478
      %p480 = pneg %p479
      // Predicated region
      $region53: #{tpu_custom_call.1} parent=5 // pred_check
        _
      $region54: #{tpu_custom_call.1} parent=5 // pred_check_branch
        %482 = sbr.rel (%p479) target = $region56
      $region55: #{tpu_custom_call.1} parent=5 // pred_region
        %s483 = ssub.s32 %s28, 1
        %s484 = sand.u32 %s79, 1
        %s485 = scalar_lea.sflag [#allocation5], %s484
        %s486 = sand.u32 %s79, 1
        %s487 = smul.addr %s486, 16
        %s488 = scalar_lea.vmem [#allocation4], %s487
        // Predicated region
        $region57: #{tpu_custom_call.1} parent=55 // pred_check
          %p489 = pneg %p92
        $region58: #{tpu_custom_call.1} parent=55 // pred_check_branch
          %491 = sbr.rel (%p489) target = $region60
        $region59: #{tpu_custom_call.1} parent=55 // pred_region
          %492 = dma.done %s485, 256
        $region60: #{tpu_custom_call.1} parent=55 // pred_fallthru
          _
        %s493 = sand.u32 %s33, 1
        %s494 = scalar_lea.sflag [#allocation8], %s493
        %s495 = sand.u32 %s109, 1
        %s496 = smul.addr %s495, 256
        %s497 = scalar_lea.vmem [#allocation7], %s496
        // Predicated region
        $region61: #{tpu_custom_call.1} parent=55 // pred_check
          %p498 = pneg %p122
        $region62: #{tpu_custom_call.1} parent=55 // pred_check_branch
          %500 = sbr.rel (%p498) target = $region64
        $region63: #{tpu_custom_call.1} parent=55 // pred_region
          %501 = dma.done %s494, 4096
        $region64: #{tpu_custom_call.1} parent=55 // pred_fallthru
          _
        %s502 = sand.u32 %s33, 1
        %s503 = scalar_lea.sflag [#allocation8], %s502
        %s504 = sand.u32 %s141, 1
        %s505 = smul.addr %s504, 256
        %s506 = scalar_lea.vmem [#allocation9], %s505
        // Predicated region
        $region65: #{tpu_custom_call.1} parent=55 // pred_check
          %p507 = pneg %p154
        $region66: #{tpu_custom_call.1} parent=55 // pred_check_branch
          %509 = sbr.rel (%p507) target = $region68
        $region67: #{tpu_custom_call.1} parent=55 // pred_region
          %510 = dma.done %s503, 4096
        $region68: #{tpu_custom_call.1} parent=55 // pred_fallthru
          _
        // Predicated region
        $region69: #{tpu_custom_call.1} parent=55 // pred_check
          %p511 = pneg %p196
        $region70: #{tpu_custom_call.1} parent=55 // pred_check_branch
          %513 = sbr.rel (%p511) target = $region72
        $region71: #{tpu_custom_call.1} parent=55 // pred_region
          %514 = dma.done [#allocation11], 1024
        $region72: #{tpu_custom_call.1} parent=55 // pred_fallthru
          _
        // Predicated region
        $region73: #{tpu_custom_call.1} parent=55 // pred_check
          %p515 = pneg %p217
        $region74: #{tpu_custom_call.1} parent=55 // pred_check_branch
          %517 = sbr.rel (%p515) target = $region76
        $region75: #{tpu_custom_call.1} parent=55 // pred_region
          %518 = dma.done [#allocation11], 1024
        $region76: #{tpu_custom_call.1} parent=55 // pred_fallthru
          _
        %s519 = sand.u32 %s79, 1
        %s520 = scalar_lea.sflag [#allocation5], %s519
        %s521 = sand.u32 %s79, 1
        %s522 = smul.addr %s521, 16
        %s523 = scalar_lea.vmem [#allocation4], %s522
        %p524 = pneg %p92
        %p525 = pneg %p89
        %s526 = sand.u32 %s33, 1
        %s527 = scalar_lea.sflag [#allocation8], %s526
        %s528 = sand.u32 %s109, 1
        %s529 = smul.addr %s528, 256
        %s530 = scalar_lea.vmem [#allocation7], %s529
        %p531 = pneg %p122
        %p532 = pneg %p119
        %s533 = sand.u32 %s33, 1
        %s534 = scalar_lea.sflag [#allocation8], %s533
        %s535 = sand.u32 %s141, 1
        %s536 = smul.addr %s535, 256
        %s537 = scalar_lea.vmem [#allocation9], %s536
        %p538 = pneg %p154
        %p539 = pneg %p151
        %p540 = pneg %p175
        %p541 = pneg %p172
        %p542 = pneg %p196
        %p543 = pneg %p193
        %p544 = pneg %p217
        %p545 = pneg %p214
        %p546 = pneg %p238
        %p547 = pneg %p235
        %p548 = pneg %p259
        %p549 = pneg %p256
        %p550 = pneg %p280
        %p551 = pneg %p277
        %p552 = pneg %p314
        %p553 = pneg %p311
        %s554 = sand.u32 %s301, 1
        %s555 = scalar_lea.sflag [#allocation6], %s554
        %s556 = sand.u32 %s301, 1
        %s557 = smul.addr %s556, 16
        %s558 = scalar_lea.vmem [#allocation13], %s557
        %p559 = pneg %p340
        %p560 = pneg %p337
        %p561 = scmp.lt.s32.totalorder %s38, 0
        %s562 = ssub.s32 0, %s38
        %s563 = scalar_select %p561, %s562, %s38
        %s564 = sand.u32 %s563, 1
        %s565 = ssub.s32 0, %s564
        %s566 = scalar_select %p561, %s565, %s564
        %p567 = scmp.ne.s32.totalorder %s566, 0
        %p568 = scmp.lt.s32.totalorder %s566, 0
        %p569 = pnand %p568, %p567
        %p570 = pneg %p569
        %s571 = sadd.s32 %s566, 2
        %s572 = scalar_select %p570, %s571, %s566
        %s573 = smul.u32 4, %s572
        %p574 = scmp.lt.s32.totalorder %s38, 1
        %s575 = scalar_select %p574, %s38, 1
        %s576 = smul.u32 64, %s575
        %s577 = ssub.s32 %s38, 2
        %p578 = scmp.gt.s32.totalorder %s577, 0
        %s579 = scalar_select %p578, %s577, 0
        %s580 = smul.u32 4, %s579
        %s581 = ssub.s32 %s38, 2
        %p582 = scmp.gt.s32.totalorder %s581, 0
        %s583 = scalar_select %p582, %s581, 0
        %s584 = smul.u32 4, %s583
        %p586 = scmp.eq.s32.totalorder %s38, 0
        // Predicated region
        $region77: #{tpu_custom_call.1} parent=55 // pred_check
          %p587 = pneg %p586
        $region78: #{tpu_custom_call.1} parent=55 // pred_check_branch
          %589 = sbr.rel (%p587) target = $region80
        $region79: #{tpu_custom_call.1} parent=55 // pred_region
          %590 = vst [vmem:[#allocation2] sm:$0xff] 0.0
        $region80: #{tpu_custom_call.1} parent=55 // pred_fallthru
          _
        %p591 = scmp.lt.s32.totalorder %s38, 2
        // Predicated region
        $region81: #{tpu_custom_call.1} parent=55 // pred_check
          %p592 = pneg %p591
        $region82: #{tpu_custom_call.1} parent=55 // pred_check_branch
          %594 = sbr.rel (%p592) target = $region84
        $region83: #{tpu_custom_call.1} parent=55 // pred_region
          %v595 = vld [vmem:[#allocation2] sm:$0xff]
          %v596 = vld [vmem:[%s488] sm:$0xff]
          %v597 = vld [vmem:[%s488 + $0x8] sm:$0xff]
          %v598 = vld [vmem:[%s497] sm:$0xf]
          %v599 = vld [vmem:[%s497 + $0x4] sm:$0xf]
          %v600 = vld [vmem:[%s497 + $0x8] sm:$0xf]
          %v601 = vld [vmem:[%s497 + $0xc] sm:$0xf]
          %v602 = vld [vmem:[%s497 + $0x10] sm:$0xf]
          %v603 = vld [vmem:[%s497 + $0x14] sm:$0xf]
          %v604 = vld [vmem:[%s497 + $0x18] sm:$0xf]
          %v605 = vld [vmem:[%s497 + $0x1c] sm:$0xf]
          %v606 = vld [vmem:[%s497 + $0x20] sm:$0xf]
          %v607 = vld [vmem:[%s497 + $0x24] sm:$0xf]
          %v608 = vld [vmem:[%s497 + $0x28] sm:$0xf]
          %v609 = vld [vmem:[%s497 + $0x2c] sm:$0xf]
          %v610 = vld [vmem:[%s497 + $0x30] sm:$0xf]
          %v611 = vld [vmem:[%s497 + $0x34] sm:$0xf]
          %v612 = vld [vmem:[%s497 + $0x38] sm:$0xf]
          %v613 = vld [vmem:[%s497 + $0x3c] sm:$0xf]
          %v614 = vld [vmem:[%s497 + $0x40] sm:$0xf]
          %v615 = vld [vmem:[%s497 + $0x44] sm:$0xf]
          %v616 = vld [vmem:[%s497 + $0x48] sm:$0xf]
          %v617 = vld [vmem:[%s497 + $0x4c] sm:$0xf]
          %v618 = vld [vmem:[%s497 + $0x50] sm:$0xf]
          %v619 = vld [vmem:[%s497 + $0x54] sm:$0xf]
          %v620 = vld [vmem:[%s497 + $0x58] sm:$0xf]
          %v621 = vld [vmem:[%s497 + $0x5c] sm:$0xf]
          %v622 = vld [vmem:[%s497 + $0x60] sm:$0xf]
          %v623 = vld [vmem:[%s497 + $0x64] sm:$0xf]
          %v624 = vld [vmem:[%s497 + $0x68] sm:$0xf]
          %v625 = vld [vmem:[%s497 + $0x6c] sm:$0xf]
          %v626 = vld [vmem:[%s497 + $0x70] sm:$0xf]
          %v627 = vld [vmem:[%s497 + $0x74] sm:$0xf]
          %v628 = vld [vmem:[%s497 + $0x78] sm:$0xf]
          %v629 = vld [vmem:[%s497 + $0x7c] sm:$0xf]
          %v630 = vld [vmem:[%s497 + $0x80] sm:$0xf]
          %v631 = vld [vmem:[%s497 + $0x84] sm:$0xf]
          %v632 = vld [vmem:[%s497 + $0x88] sm:$0xf]
          %v633 = vld [vmem:[%s497 + $0x8c] sm:$0xf]
          %v634 = vld [vmem:[%s497 + $0x90] sm:$0xf]
          %v635 = vld [vmem:[%s497 + $0x94] sm:$0xf]
          %v636 = vld [vmem:[%s497 + $0x98] sm:$0xf]
          %v637 = vld [vmem:[%s497 + $0x9c] sm:$0xf]
          %v638 = vld [vmem:[%s497 + $0xa0] sm:$0xf]
          %v639 = vld [vmem:[%s497 + $0xa4] sm:$0xf]
          %v640 = vld [vmem:[%s497 + $0xa8] sm:$0xf]
          %v641 = vld [vmem:[%s497 + $0xac] sm:$0xf]
          %v642 = vld [vmem:[%s497 + $0xb0] sm:$0xf]
          %v643 = vld [vmem:[%s497 + $0xb4] sm:$0xf]
          %v644 = vld [vmem:[%s497 + $0xb8] sm:$0xf]
          %v645 = vld [vmem:[%s497 + $0xbc] sm:$0xf]
          %v646 = vld [vmem:[%s497 + $0xc0] sm:$0xf]
          %v647 = vld [vmem:[%s497 + $0xc4] sm:$0xf]
          %v648 = vld [vmem:[%s497 + $0xc8] sm:$0xf]
          %v649 = vld [vmem:[%s497 + $0xcc] sm:$0xf]
          %v650 = vld [vmem:[%s497 + $0xd0] sm:$0xf]
          %v651 = vld [vmem:[%s497 + $0xd4] sm:$0xf]
          %v652 = vld [vmem:[%s497 + $0xd8] sm:$0xf]
          %v653 = vld [vmem:[%s497 + $0xdc] sm:$0xf]
          %v654 = vld [vmem:[%s497 + $0xe0] sm:$0xf]
          %v655 = vld [vmem:[%s497 + $0xe4] sm:$0xf]
          %v656 = vld [vmem:[%s497 + $0xe8] sm:$0xf]
          %v657 = vld [vmem:[%s497 + $0xec] sm:$0xf]
          %v658 = vld [vmem:[%s497 + $0xf0] sm:$0xf]
          %v659 = vld [vmem:[%s497 + $0xf4] sm:$0xf]
          %v660 = vld [vmem:[%s497 + $0xf8] sm:$0xf]
          %v661 = vld [vmem:[%s497 + $0xfc] sm:$0xf]
          %v664 = vunpack.c.l.b16 %v596
          %v665 = vunpack.c.h.b16 %v596
          %v666 = vunpack.c.l.b16 %v597
          %v667 = vunpack.c.h.b16 %v597
          %v668 = vpack.c.b16 %v664, %v664
          %v669 = vpack.c.b16 %v665, %v665
          %v670 = vpack.c.b16 %v666, %v666
          %v671 = vpack.c.b16 %v667, %v667
          %v740 = vunpack.c.l.b16 %v598
          %v741 = vunpack.c.l.b16 %v599
          %v742 = vunpack.c.l.b16 %v600
          %v743 = vunpack.c.l.b16 %v601
          %v744 = vunpack.c.l.b16 %v602
          %v745 = vunpack.c.l.b16 %v603
          %v746 = vunpack.c.l.b16 %v604
          %v747 = vunpack.c.l.b16 %v605
          %v748 = vunpack.c.l.b16 %v606
          %v749 = vunpack.c.l.b16 %v607
          %v750 = vunpack.c.l.b16 %v608
          %v751 = vunpack.c.l.b16 %v609
          %v752 = vunpack.c.l.b16 %v610
          %v753 = vunpack.c.l.b16 %v611
          %v754 = vunpack.c.l.b16 %v612
          %v755 = vunpack.c.l.b16 %v613
          %v756 = vunpack.c.l.b16 %v614
          %v757 = vunpack.c.l.b16 %v615
          %v758 = vunpack.c.l.b16 %v616
          %v759 = vunpack.c.l.b16 %v617
          %v760 = vunpack.c.l.b16 %v618
          %v761 = vunpack.c.l.b16 %v619
          %v762 = vunpack.c.l.b16 %v620
          %v763 = vunpack.c.l.b16 %v621
          %v764 = vunpack.c.l.b16 %v622
          %v765 = vunpack.c.l.b16 %v623
          %v766 = vunpack.c.l.b16 %v624
          %v767 = vunpack.c.l.b16 %v625
          %v768 = vunpack.c.l.b16 %v626
          %v769 = vunpack.c.l.b16 %v627
          %v770 = vunpack.c.l.b16 %v628
          %v771 = vunpack.c.l.b16 %v629
          %v772 = vunpack.c.l.b16 %v630
          %v773 = vunpack.c.l.b16 %v631
          %v774 = vunpack.c.l.b16 %v632
          %v775 = vunpack.c.l.b16 %v633
          %v776 = vunpack.c.l.b16 %v634
          %v777 = vunpack.c.l.b16 %v635
          %v778 = vunpack.c.l.b16 %v636
          %v779 = vunpack.c.l.b16 %v637
          %v780 = vunpack.c.l.b16 %v638
          %v781 = vunpack.c.l.b16 %v639
          %v782 = vunpack.c.l.b16 %v640
          %v783 = vunpack.c.l.b16 %v641
          %v784 = vunpack.c.l.b16 %v642
          %v785 = vunpack.c.l.b16 %v643
          %v786 = vunpack.c.l.b16 %v644
          %v787 = vunpack.c.l.b16 %v645
          %v788 = vunpack.c.l.b16 %v646
          %v789 = vunpack.c.l.b16 %v647
          %v790 = vunpack.c.l.b16 %v648
          %v791 = vunpack.c.l.b16 %v649
          %v792 = vunpack.c.l.b16 %v650
          %v793 = vunpack.c.l.b16 %v651
          %v794 = vunpack.c.l.b16 %v652
          %v795 = vunpack.c.l.b16 %v653
          %v796 = vunpack.c.l.b16 %v654
          %v797 = vunpack.c.l.b16 %v655
          %v798 = vunpack.c.l.b16 %v656
          %v799 = vunpack.c.l.b16 %v657
          %v800 = vunpack.c.l.b16 %v658
          %v801 = vunpack.c.l.b16 %v659
          %v802 = vunpack.c.l.b16 %v660
          %v803 = vunpack.c.l.b16 %v661
          %v804 = vpack.c.b16 %v741, %v740
          %v805 = vpack.c.b16 %v743, %v742
          %v806 = vpack.c.b16 %v745, %v744
          %v807 = vpack.c.b16 %v747, %v746
          %v808 = vpack.c.b16 %v749, %v748
          %v809 = vpack.c.b16 %v751, %v750
          %v810 = vpack.c.b16 %v753, %v752
          %v811 = vpack.c.b16 %v755, %v754
          %v812 = vpack.c.b16 %v757, %v756
          %v813 = vpack.c.b16 %v759, %v758
          %v814 = vpack.c.b16 %v761, %v760
          %v815 = vpack.c.b16 %v763, %v762
          %v816 = vpack.c.b16 %v765, %v764
          %v817 = vpack.c.b16 %v767, %v766
          %v818 = vpack.c.b16 %v769, %v768
          %v819 = vpack.c.b16 %v771, %v770
          %v820 = vpack.c.b16 %v773, %v772
          %v821 = vpack.c.b16 %v775, %v774
          %v822 = vpack.c.b16 %v777, %v776
          %v823 = vpack.c.b16 %v779, %v778
          %v824 = vpack.c.b16 %v781, %v780
          %v825 = vpack.c.b16 %v783, %v782
          %v826 = vpack.c.b16 %v785, %v784
          %v827 = vpack.c.b16 %v787, %v786
          %v828 = vpack.c.b16 %v789, %v788
          %v829 = vpack.c.b16 %v791, %v790
          %v830 = vpack.c.b16 %v793, %v792
          %v831 = vpack.c.b16 %v795, %v794
          %v832 = vpack.c.b16 %v797, %v796
          %v833 = vpack.c.b16 %v799, %v798
          %v834 = vpack.c.b16 %v801, %v800
          %v835 = vpack.c.b16 %v803, %v802
          %868 = vmatprep.subr.bf16.mxu0 0
          %869 = vmatpush1.bf16.msra.mxu0 %v804
          %870 = vmatprep.subr.bf16.mxu0 0
          %871 = vmatpush1.bf16.msra.mxu0 %v805
          %872 = vmatprep.subr.bf16.mxu0 0
          %873 = vmatpush1.bf16.msra.mxu0 %v806
          %874 = vmatprep.subr.bf16.mxu0 0
          %875 = vmatpush1.bf16.msra.mxu0 %v807
          %876 = vmatprep.subr.bf16.mxu0 0
          %877 = vmatpush1.bf16.msra.mxu0 %v808
          %878 = vmatprep.subr.bf16.mxu0 0
          %879 = vmatpush1.bf16.msra.mxu0 %v809
          %880 = vmatprep.subr.bf16.mxu0 0
          %881 = vmatpush1.bf16.msra.mxu0 %v810
          %882 = vmatprep.subr.bf16.mxu0 0
          %883 = vmatpush1.bf16.msra.mxu0 %v811
          %884 = vmatprep.subr.bf16.mxu0 0
          %885 = vmatpush1.bf16.msra.mxu0 %v812
          %886 = vmatprep.subr.bf16.mxu0 0
          %887 = vmatpush1.bf16.msra.mxu0 %v813
          %888 = vmatprep.subr.bf16.mxu0 0
          %889 = vmatpush1.bf16.msra.mxu0 %v814
          %890 = vmatprep.subr.bf16.mxu0 0
          %891 = vmatpush1.bf16.msra.mxu0 %v815
          %892 = vmatprep.subr.bf16.mxu0 0
          %893 = vmatpush1.bf16.msra.mxu0 %v816
          %894 = vmatprep.subr.bf16.mxu0 0
          %895 = vmatpush1.bf16.msra.mxu0 %v817
          %896 = vmatprep.subr.bf16.mxu0 0
          %897 = vmatpush1.bf16.msra.mxu0 %v818
          %898 = vmatprep.subr.bf16.mxu0 0
          %899 = vmatpush1.bf16.msra.mxu0 %v819
          %900 = vmatprep.mubr.bf16.mxu0 %v669
          %901 = vmatmul.mubr.bf16.gmra.mrb[0].mxu0 %v668
          %v902 = vpop.f32.mrb[0].mxu0
          %v903 = vadd.f32 0.0, %v902
          %v904 = vpop.f32.mrb[0].mxu0
          %v905 = vpop.f32.mrb[0].mxu0
          %v906 = vpop.f32.mrb[0].mxu0
          %907 = vdwg.mxu0
          %908 = vmatprep.subr.bf16.mxu0 0
          %909 = vmatpush1.bf16.msra.mxu0 %v820
          %910 = vmatprep.subr.bf16.mxu0 0
          %911 = vmatpush1.bf16.msra.mxu0 %v821
          %912 = vmatprep.subr.bf16.mxu0 0
          %913 = vmatpush1.bf16.msra.mxu0 %v822
          %914 = vmatprep.subr.bf16.mxu0 0
          %915 = vmatpush1.bf16.msra.mxu0 %v823
          %916 = vmatprep.subr.bf16.mxu0 0
          %917 = vmatpush1.bf16.msra.mxu0 %v824
          %918 = vmatprep.subr.bf16.mxu0 0
          %919 = vmatpush1.bf16.msra.mxu0 %v825
          %920 = vmatprep.subr.bf16.mxu0 0
          %921 = vmatpush1.bf16.msra.mxu0 %v826
          %922 = vmatprep.subr.bf16.mxu0 0
          %923 = vmatpush1.bf16.msra.mxu0 %v827
          %924 = vmatprep.subr.bf16.mxu0 0
          %925 = vmatpush1.bf16.msra.mxu0 %v828
          %926 = vmatprep.subr.bf16.mxu0 0
          %927 = vmatpush1.bf16.msra.mxu0 %v829
          %928 = vmatprep.subr.bf16.mxu0 0
          %929 = vmatpush1.bf16.msra.mxu0 %v830
          %930 = vmatprep.subr.bf16.mxu0 0
          %931 = vmatpush1.bf16.msra.mxu0 %v831
          %932 = vmatprep.subr.bf16.mxu0 0
          %933 = vmatpush1.bf16.msra.mxu0 %v832
          %934 = vmatprep.subr.bf16.mxu0 0
          %935 = vmatpush1.bf16.msra.mxu0 %v833
          %936 = vmatprep.subr.bf16.mxu0 0
          %937 = vmatpush1.bf16.msra.mxu0 %v834
          %938 = vmatprep.subr.bf16.mxu0 0
          %939 = vmatpush1.bf16.msra.mxu0 %v835
          %940 = vmatprep.mubr.bf16.mxu0 %v671
          %941 = vmatmul.mubr.bf16.gmra.mrb[0].mxu0 %v670
          %v942 = vpop.f32.mrb[0].mxu0
          %v943 = vadd.f32 %v903, %v942
          %v944 = vpop.f32.mrb[0].mxu0
          %v945 = vpop.f32.mrb[0].mxu0
          %v946 = vpop.f32.mrb[0].mxu0
          %947 = vdwg.mxu0
          %v948 = vadd.f32 %v595, %v943
          %949 = vst [vmem:[#allocation2] sm:$0xff] %v948
        $region84: #{tpu_custom_call.1} parent=55 // pred_fallthru
          _
        %p950 = scmp.eq.s32.totalorder %s38, 1
        // Predicated region
        $region85: #{tpu_custom_call.1} parent=55 // pred_check
          %p951 = pneg %p950
        $region86: #{tpu_custom_call.1} parent=55 // pred_check_branch
          %953 = sbr.rel (%p951) target = $region88
        $region87: #{tpu_custom_call.1} parent=55 // pred_region
          %v954 = vld [vmem:[%s3] sm:$0x1]
          %v955 = vld [vmem:[#allocation2] sm:$0xff]
          %v957 = vlaneseq
          %v958 = vshrl.u32 %v957, 7
          %v959 = vsub.s32 0, %v958
          %v960 = vrot.slane %v954, %v959
          %v962 = vadd.f32 %v955, %v960
          %v963 = vmax.f32 %v962, 0.0
          %v964 = vpack.c.bf16 %v963, %v963
          %v965 = vld [vmem:[#allocation10] sm:$0xf]
          %v966 = vld [vmem:[#allocation10 + $0x4] sm:$0xf]
          %v967 = vld [vmem:[#allocation10 + $0x8] sm:$0xf]
          %v968 = vld [vmem:[#allocation10 + $0xc] sm:$0xf]
          %v969 = vld [vmem:[#allocation10 + $0x10] sm:$0xf]
          %v970 = vld [vmem:[#allocation10 + $0x14] sm:$0xf]
          %v971 = vld [vmem:[#allocation10 + $0x18] sm:$0xf]
          %v972 = vld [vmem:[#allocation10 + $0x1c] sm:$0xf]
          %v973 = vld [vmem:[#allocation10 + $0x20] sm:$0xf]
          %v974 = vld [vmem:[#allocation10 + $0x24] sm:$0xf]
          %v975 = vld [vmem:[#allocation10 + $0x28] sm:$0xf]
          %v976 = vld [vmem:[#allocation10 + $0x2c] sm:$0xf]
          %v977 = vld [vmem:[#allocation10 + $0x30] sm:$0xf]
          %v978 = vld [vmem:[#allocation10 + $0x34] sm:$0xf]
          %v979 = vld [vmem:[#allocation10 + $0x38] sm:$0xf]
          %v980 = vld [vmem:[#allocation10 + $0x3c] sm:$0xf]
          %v981 = vld [vmem:[%s6] sm:$0x1]
          %v983 = vlaneseq
          %v984 = vshrl.u32 %v983, 7
          %v985 = vsub.s32 0, %v984
          %v986 = vrot.slane %v981, %v985
          %v1004 = vunpack.c.l.b16 %v965
          %v1005 = vunpack.c.l.b16 %v966
          %v1006 = vunpack.c.l.b16 %v967
          %v1007 = vunpack.c.l.b16 %v968
          %v1008 = vunpack.c.l.b16 %v969
          %v1009 = vunpack.c.l.b16 %v970
          %v1010 = vunpack.c.l.b16 %v971
          %v1011 = vunpack.c.l.b16 %v972
          %v1012 = vunpack.c.l.b16 %v973
          %v1013 = vunpack.c.l.b16 %v974
          %v1014 = vunpack.c.l.b16 %v975
          %v1015 = vunpack.c.l.b16 %v976
          %v1016 = vunpack.c.l.b16 %v977
          %v1017 = vunpack.c.l.b16 %v978
          %v1018 = vunpack.c.l.b16 %v979
          %v1019 = vunpack.c.l.b16 %v980
          %v1020 = vpack.c.b16 %v1005, %v1004
          %v1021 = vpack.c.b16 %v1007, %v1006
          %v1022 = vpack.c.b16 %v1009, %v1008
          %v1023 = vpack.c.b16 %v1011, %v1010
          %v1024 = vpack.c.b16 %v1013, %v1012
          %v1025 = vpack.c.b16 %v1015, %v1014
          %v1026 = vpack.c.b16 %v1017, %v1016
          %v1027 = vpack.c.b16 %v1019, %v1018
          %1036 = vmatprep.subr.bf16.mxu0 0
          %1037 = vmatpush1.bf16.msra.mxu0 %v1020
          %1038 = vmatprep.subr.bf16.mxu0 0
          %1039 = vmatpush1.bf16.msra.mxu0 %v1021
          %1040 = vmatprep.subr.bf16.mxu0 0
          %1041 = vmatpush1.bf16.msra.mxu0 %v1022
          %1042 = vmatprep.subr.bf16.mxu0 0
          %1043 = vmatpush1.bf16.msra.mxu0 %v1023
          %1044 = vmatprep.subr.bf16.mxu0 0
          %1045 = vmatpush1.bf16.msra.mxu0 %v1024
          %1046 = vmatprep.subr.bf16.mxu0 0
          %1047 = vmatpush1.bf16.msra.mxu0 %v1025
          %1048 = vmatprep.subr.bf16.mxu0 0
          %1049 = vmatpush1.bf16.msra.mxu0 %v1026
          %1050 = vmatprep.subr.bf16.mxu0 0
          %1051 = vmatpush1.bf16.msra.mxu0 %v1027
          %1052 = vmatprep.subr.bf16.mxu0 0
          %1053 = vmatpush1.bf16.msra.mxu0 0
          %1054 = vmatprep.subr.bf16.mxu0 0
          %1055 = vmatpush1.bf16.msra.mxu0 0
          %1056 = vmatprep.subr.bf16.mxu0 0
          %1057 = vmatpush1.bf16.msra.mxu0 0
          %1058 = vmatprep.subr.bf16.mxu0 0
          %1059 = vmatpush1.bf16.msra.mxu0 0
          %1060 = vmatprep.subr.bf16.mxu0 0
          %1061 = vmatpush1.bf16.msra.mxu0 0
          %1062 = vmatprep.subr.bf16.mxu0 0
          %1063 = vmatpush1.bf16.msra.mxu0 0
          %1064 = vmatprep.subr.bf16.mxu0 0
          %1065 = vmatpush1.bf16.msra.mxu0 0
          %1066 = vmatprep.subr.bf16.mxu0 0
          %1067 = vmatpush1.bf16.msra.mxu0 0
          %1068 = vmatprep.mubr.bf16.mxu0 0
          %1069 = vmatmul.mubr.bf16.gmra.mrb[0].mxu0 %v964
          %v1070 = vpop.f32.mrb[0].mxu0
          %v1071 = vadd.f32 %v986, %v1070
          %v1072 = vpop.f32.mrb[0].mxu0
          %v1073 = vpop.f32.mrb[0].mxu0
          %v1074 = vpop.f32.mrb[0].mxu0
          %1075 = vdwg.mxu0
          %1076 = vmax.xlane.f32.xlu0 %v1071
          %v1077 = vpop.xlane.xlu0 %1076
          %v1078 = vsub.f32 %v1071, %v1077
          %v1079 = vmul.f32 %v1078, 1.442695
          %v1080 = vpow.pop %v1079
          %1081 = vadd.xlane.f32.xlu0 %v1080
          %v1082 = vpop.xlane.xlu0 %1081
          %v1083 = vrcp.pop %v1082
          %v1084 = vmul.f32 %v1080, %v1083
          %1085 = vst [vmem:[#allocation14] sm:$0xff] %v1084
          %v1086 = vlaneseq
          %v1087 = vand.u32 %v1086, 127
          %vm1088 = vcmp.eq.f32.partialorder %v1071, %v1077
          %v1089 = vsel %vm1088, %v1087, 128
          %v1090 = vand.u32 %v1089, 65535
          %v1091 = vshra.s32 %v1089, 16
          %v1092 = vcvt.s32.f32 %v1090
          %v1093 = vcvt.s32.f32 %v1091
          %1094 = vmin.xlane.f32.xlu0 %v1093
          %v1095 = vpop.xlane.xlu0 %1094
          %vm1096 = vcmp.eq.f32.partialorder %v1093, %v1095
          %v1097 = vsel %vm1096, %v1092, inf
          %1098 = vmin.xlane.f32.xlu0 %v1097
          %v1099 = vpop.xlane.xlu0 %1098
          %v1100 = vcvt.f32.s32 %v1099
          %v1101 = vcvt.f32.s32 %v1095
          %v1102 = vshll.u32 %v1101, 16
          %v1103 = vadd.s32 %v1102, %v1100
          %vm1104 = vcmp.eq.s32.totalorder %v1087, %v1103
          %v1105 = vsel %vm1104, 1, 0
          %v1106 = vcvt.s32.f32 %v1105
          %v1107 = vld [vmem:[%s7] sm:$0x1]
          %v1109 = vlaneseq
          %v1110 = vshrl.u32 %v1109, 7
          %v1111 = vsub.s32 0, %v1110
          %v1112 = vrot.slane %v1107, %v1111
          %v1114 = vsub.f32 %v1071, %v1112
          %v1115 = vld [vmem:[%s8] sm:$0x1]
          %v1117 = vlaneseq
          %v1118 = vshrl.u32 %v1117, 7
          %v1119 = vsub.s32 0, %v1118
          %v1120 = vrot.slane %v1115, %v1119
          %v1122 = vsub.f32 %v1084, %v1120
          %v1123 = vmul.f32 %v1106, %v1084
          %1124 = vadd.xlane.f32.xlu0 %v1123
          %v1125 = vpop.xlane.xlu0 %1124
          %v1126 = vsub.f32 %v1106, %v1125
          %v1127 = vmul.f32 %v1084, %v1126
          %v1128 = vand.u32 2147483647, %v1114
          %vm1129 = vcmp.lt.f32.partialorder %v1128, 1e-07
          %v1130 = vsel %vm1129, 1.0, %v1114
          %v1131 = vmul.f32 %v1106, %v1122
          %v1132 = vrcp.pop %v1130
          %v1133 = vmul.f32 %v1131, %v1132
          %v1134 = vsel %vm1129, %v1127, %v1133
          %v1135 = vpack.c.bf16 %v1134, %v1134
          %v1136 = vld [vmem:[#allocation12] sm:$0xf]
          %v1137 = vld [vmem:[#allocation12 + $0x4] sm:$0xf]
          %v1138 = vld [vmem:[#allocation12 + $0x8] sm:$0xf]
          %v1139 = vld [vmem:[#allocation12 + $0xc] sm:$0xf]
          %v1140 = vld [vmem:[#allocation12 + $0x10] sm:$0xf]
          %v1141 = vld [vmem:[#allocation12 + $0x14] sm:$0xf]
          %v1142 = vld [vmem:[#allocation12 + $0x18] sm:$0xf]
          %v1143 = vld [vmem:[#allocation12 + $0x1c] sm:$0xf]
          %v1144 = vld [vmem:[#allocation12 + $0x20] sm:$0xf]
          %v1145 = vld [vmem:[#allocation12 + $0x24] sm:$0xf]
          %v1146 = vld [vmem:[#allocation12 + $0x28] sm:$0xf]
          %v1147 = vld [vmem:[#allocation12 + $0x2c] sm:$0xf]
          %v1148 = vld [vmem:[#allocation12 + $0x30] sm:$0xf]
          %v1149 = vld [vmem:[#allocation12 + $0x34] sm:$0xf]
          %v1150 = vld [vmem:[#allocation12 + $0x38] sm:$0xf]
          %v1151 = vld [vmem:[#allocation12 + $0x3c] sm:$0xf]
          %v1168 = vunpack.c.l.b16 %v1136
          %v1169 = vunpack.c.l.b16 %v1137
          %v1170 = vunpack.c.l.b16 %v1138
          %v1171 = vunpack.c.l.b16 %v1139
          %v1172 = vunpack.c.l.b16 %v1140
          %v1173 = vunpack.c.l.b16 %v1141
          %v1174 = vunpack.c.l.b16 %v1142
          %v1175 = vunpack.c.l.b16 %v1143
          %v1176 = vunpack.c.l.b16 %v1144
          %v1177 = vunpack.c.l.b16 %v1145
          %v1178 = vunpack.c.l.b16 %v1146
          %v1179 = vunpack.c.l.b16 %v1147
          %v1180 = vunpack.c.l.b16 %v1148
          %v1181 = vunpack.c.l.b16 %v1149
          %v1182 = vunpack.c.l.b16 %v1150
          %v1183 = vunpack.c.l.b16 %v1151
          %v1184 = vpack.c.b16 %v1169, %v1168
          %v1185 = vpack.c.b16 %v1171, %v1170
          %v1186 = vpack.c.b16 %v1173, %v1172
          %v1187 = vpack.c.b16 %v1175, %v1174
          %v1188 = vpack.c.b16 %v1177, %v1176
          %v1189 = vpack.c.b16 %v1179, %v1178
          %v1190 = vpack.c.b16 %v1181, %v1180
          %v1191 = vpack.c.b16 %v1183, %v1182
          %1200 = vmatprep.subr.bf16.mxu0 0
          %1201 = vmatpush1.bf16.msra.mxu0 %v1184
          %1202 = vmatprep.subr.bf16.mxu0 0
          %1203 = vmatpush1.bf16.msra.mxu0 %v1185
          %1204 = vmatprep.subr.bf16.mxu0 0
          %1205 = vmatpush1.bf16.msra.mxu0 %v1186
          %1206 = vmatprep.subr.bf16.mxu0 0
          %1207 = vmatpush1.bf16.msra.mxu0 %v1187
          %1208 = vmatprep.subr.bf16.mxu0 0
          %1209 = vmatpush1.bf16.msra.mxu0 %v1188
          %1210 = vmatprep.subr.bf16.mxu0 0
          %1211 = vmatpush1.bf16.msra.mxu0 %v1189
          %1212 = vmatprep.subr.bf16.mxu0 0
          %1213 = vmatpush1.bf16.msra.mxu0 %v1190
          %1214 = vmatprep.subr.bf16.mxu0 0
          %1215 = vmatpush1.bf16.msra.mxu0 %v1191
          %1216 = vmatprep.subr.bf16.mxu0 0
          %1217 = vmatpush1.bf16.msra.mxu0 0
          %1218 = vmatprep.subr.bf16.mxu0 0
          %1219 = vmatpush1.bf16.msra.mxu0 0
          %1220 = vmatprep.subr.bf16.mxu0 0
          %1221 = vmatpush1.bf16.msra.mxu0 0
          %1222 = vmatprep.subr.bf16.mxu0 0
          %1223 = vmatpush1.bf16.msra.mxu0 0
          %1224 = vmatprep.subr.bf16.mxu0 0
          %1225 = vmatpush1.bf16.msra.mxu0 0
          %1226 = vmatprep.subr.bf16.mxu0 0
          %1227 = vmatpush1.bf16.msra.mxu0 0
          %1228 = vmatprep.subr.bf16.mxu0 0
          %1229 = vmatpush1.bf16.msra.mxu0 0
          %1230 = vmatprep.subr.bf16.mxu0 0
          %1231 = vmatpush1.bf16.msra.mxu0 0
          %1232 = vmatprep.mubr.bf16.mxu0 0
          %1233 = vmatmul.mubr.bf16.gmra.mrb[0].mxu0 %v1135
          %v1234 = vpop.f32.mrb[0].mxu0
          %v1235 = vadd.f32 0.0, %v1234
          %v1236 = vpop.f32.mrb[0].mxu0
          %v1237 = vpop.f32.mrb[0].mxu0
          %v1238 = vpop.f32.mrb[0].mxu0
          %1239 = vdwg.mxu0
          %v1240 = vmax.f32 %v954, 0.0
          %v1241 = vsub.f32 %v962, %v960
          %v1243 = vlaneseq
          %v1244 = vshrl.u32 %v1243, 7
          %v1245 = vsub.s32 0, %v1244
          %v1246 = vrot.slane %v1240, %v1245
          %v1248 = vsub.f32 %v963, %v1246
          %vm1249 = vcmp.gt.f32.partialorder %v962, 0.0
          %v1250 = vsel %vm1249, 1, 0
          %v1251 = vcvt.s32.f32 %v1250
          %v1252 = vand.u32 2147483647, %v1241
          %vm1253 = vcmp.lt.f32.partialorder %v1252, 1e-07
          %v1254 = vsel %vm1253, 1.0, %v1241
          %v1255 = vmul.f32 %v1235, %v1251
          %v1256 = vmul.f32 %v1235, %v1248
          %v1257 = vrcp.pop %v1254
          %v1258 = vmul.f32 %v1256, %v1257
          %v1259 = vsel %vm1253, %v1255, %v1258
          %1260 = vst [vmem:[#allocation3] sm:$0xff] %v1259
        $region88: #{tpu_custom_call.1} parent=55 // pred_fallthru
          _
        %p1261 = scmp.ge.s32.totalorder %s38, 2
        // Predicated region
        $region89: #{tpu_custom_call.1} parent=55 // pred_check
          %p1262 = pneg %p1261
        $region90: #{tpu_custom_call.1} parent=55 // pred_check_branch
          %1264 = sbr.rel (%p1262) target = $region92
        $region91: #{tpu_custom_call.1} parent=55 // pred_region
          %v1265 = vld [vmem:[#allocation3] sm:$0xff]
          %v1266 = vpack.c.bf16 %v1265, %v1265
          %v1267 = vld [vmem:[%s506] sm:$0xff]
          %v1268 = vld [vmem:[%s506 + $0x8] sm:$0xff]
          %v1269 = vld [vmem:[%s506 + $0x10] sm:$0xff]
          %v1270 = vld [vmem:[%s506 + $0x18] sm:$0xff]
          %v1271 = vld [vmem:[%s506 + $0x20] sm:$0xff]
          %v1272 = vld [vmem:[%s506 + $0x28] sm:$0xff]
          %v1273 = vld [vmem:[%s506 + $0x30] sm:$0xff]
          %v1274 = vld [vmem:[%s506 + $0x38] sm:$0xff]
          %v1275 = vld [vmem:[%s506 + $0x40] sm:$0xff]
          %v1276 = vld [vmem:[%s506 + $0x48] sm:$0xff]
          %v1277 = vld [vmem:[%s506 + $0x50] sm:$0xff]
          %v1278 = vld [vmem:[%s506 + $0x58] sm:$0xff]
          %v1279 = vld [vmem:[%s506 + $0x60] sm:$0xff]
          %v1280 = vld [vmem:[%s506 + $0x68] sm:$0xff]
          %v1281 = vld [vmem:[%s506 + $0x70] sm:$0xff]
          %v1282 = vld [vmem:[%s506 + $0x78] sm:$0xff]
          %v1283 = vld [vmem:[%s506 + $0x80] sm:$0xff]
          %v1284 = vld [vmem:[%s506 + $0x88] sm:$0xff]
          %v1285 = vld [vmem:[%s506 + $0x90] sm:$0xff]
          %v1286 = vld [vmem:[%s506 + $0x98] sm:$0xff]
          %v1287 = vld [vmem:[%s506 + $0xa0] sm:$0xff]
          %v1288 = vld [vmem:[%s506 + $0xa8] sm:$0xff]
          %v1289 = vld [vmem:[%s506 + $0xb0] sm:$0xff]
          %v1290 = vld [vmem:[%s506 + $0xb8] sm:$0xff]
          %v1291 = vld [vmem:[%s506 + $0xc0] sm:$0xff]
          %v1292 = vld [vmem:[%s506 + $0xc8] sm:$0xff]
          %v1293 = vld [vmem:[%s506 + $0xd0] sm:$0xff]
          %v1294 = vld [vmem:[%s506 + $0xd8] sm:$0xff]
          %v1295 = vld [vmem:[%s506 + $0xe0] sm:$0xff]
          %v1296 = vld [vmem:[%s506 + $0xe8] sm:$0xff]
          %v1297 = vld [vmem:[%s506 + $0xf0] sm:$0xff]
          %v1298 = vld [vmem:[%s506 + $0xf8] sm:$0xff]
          %v1331 = vunpack.c.l.b16 %v1267
          %v1332 = vunpack.c.h.b16 %v1267
          %v1333 = vunpack.c.l.b16 %v1268
          %v1334 = vunpack.c.h.b16 %v1268
          %v1335 = vunpack.c.l.b16 %v1269
          %v1336 = vunpack.c.h.b16 %v1269
          %v1337 = vunpack.c.l.b16 %v1270
          %v1338 = vunpack.c.h.b16 %v1270
          %v1339 = vunpack.c.l.b16 %v1271
          %v1340 = vunpack.c.h.b16 %v1271
          %v1341 = vunpack.c.l.b16 %v1272
          %v1342 = vunpack.c.h.b16 %v1272
          %v1343 = vunpack.c.l.b16 %v1273
          %v1344 = vunpack.c.h.b16 %v1273
          %v1345 = vunpack.c.l.b16 %v1274
          %v1346 = vunpack.c.h.b16 %v1274
          %v1347 = vunpack.c.l.b16 %v1275
          %v1348 = vunpack.c.h.b16 %v1275
          %v1349 = vunpack.c.l.b16 %v1276
          %v1350 = vunpack.c.h.b16 %v1276
          %v1351 = vunpack.c.l.b16 %v1277
          %v1352 = vunpack.c.h.b16 %v1277
          %v1353 = vunpack.c.l.b16 %v1278
          %v1354 = vunpack.c.h.b16 %v1278
          %v1355 = vunpack.c.l.b16 %v1279
          %v1356 = vunpack.c.h.b16 %v1279
          %v1357 = vunpack.c.l.b16 %v1280
          %v1358 = vunpack.c.h.b16 %v1280
          %v1359 = vunpack.c.l.b16 %v1281
          %v1360 = vunpack.c.h.b16 %v1281
          %v1361 = vunpack.c.l.b16 %v1282
          %v1362 = vunpack.c.h.b16 %v1282
          %v1363 = vunpack.c.l.b16 %v1283
          %v1364 = vunpack.c.h.b16 %v1283
          %v1365 = vunpack.c.l.b16 %v1284
          %v1366 = vunpack.c.h.b16 %v1284
          %v1367 = vunpack.c.l.b16 %v1285
          %v1368 = vunpack.c.h.b16 %v1285
          %v1369 = vunpack.c.l.b16 %v1286
          %v1370 = vunpack.c.h.b16 %v1286
          %v1371 = vunpack.c.l.b16 %v1287
          %v1372 = vunpack.c.h.b16 %v1287
          %v1373 = vunpack.c.l.b16 %v1288
          %v1374 = vunpack.c.h.b16 %v1288
          %v1375 = vunpack.c.l.b16 %v1289
          %v1376 = vunpack.c.h.b16 %v1289
          %v1377 = vunpack.c.l.b16 %v1290
          %v1378 = vunpack.c.h.b16 %v1290
          %v1379 = vunpack.c.l.b16 %v1291
          %v1380 = vunpack.c.h.b16 %v1291
          %v1381 = vunpack.c.l.b16 %v1292
          %v1382 = vunpack.c.h.b16 %v1292
          %v1383 = vunpack.c.l.b16 %v1293
          %v1384 = vunpack.c.h.b16 %v1293
          %v1385 = vunpack.c.l.b16 %v1294
          %v1386 = vunpack.c.h.b16 %v1294
          %v1387 = vunpack.c.l.b16 %v1295
          %v1388 = vunpack.c.h.b16 %v1295
          %v1389 = vunpack.c.l.b16 %v1296
          %v1390 = vunpack.c.h.b16 %v1296
          %v1391 = vunpack.c.l.b16 %v1297
          %v1392 = vunpack.c.h.b16 %v1297
          %v1393 = vunpack.c.l.b16 %v1298
          %v1394 = vunpack.c.h.b16 %v1298
          %v1395 = vpack.c.b16 %v1335, %v1331
          %v1396 = vpack.c.b16 %v1336, %v1332
          %v1397 = vpack.c.b16 %v1337, %v1333
          %v1398 = vpack.c.b16 %v1338, %v1334
          %v1399 = vpack.c.b16 %v1343, %v1339
          %v1400 = vpack.c.b16 %v1344, %v1340
          %v1401 = vpack.c.b16 %v1345, %v1341
          %v1402 = vpack.c.b16 %v1346, %v1342
          %v1403 = vpack.c.b16 %v1351, %v1347
          %v1404 = vpack.c.b16 %v1352, %v1348
          %v1405 = vpack.c.b16 %v1353, %v1349
          %v1406 = vpack.c.b16 %v1354, %v1350
          %v1407 = vpack.c.b16 %v1359, %v1355
          %v1408 = vpack.c.b16 %v1360, %v1356
          %v1409 = vpack.c.b16 %v1361, %v1357
          %v1410 = vpack.c.b16 %v1362, %v1358
          %v1411 = vpack.c.b16 %v1367, %v1363
          %v1412 = vpack.c.b16 %v1368, %v1364
          %v1413 = vpack.c.b16 %v1369, %v1365
          %v1414 = vpack.c.b16 %v1370, %v1366
          %v1415 = vpack.c.b16 %v1375, %v1371
          %v1416 = vpack.c.b16 %v1376, %v1372
          %v1417 = vpack.c.b16 %v1377, %v1373
          %v1418 = vpack.c.b16 %v1378, %v1374
          %v1419 = vpack.c.b16 %v1383, %v1379
          %v1420 = vpack.c.b16 %v1384, %v1380
          %v1421 = vpack.c.b16 %v1385, %v1381
          %v1422 = vpack.c.b16 %v1386, %v1382
          %v1423 = vpack.c.b16 %v1391, %v1387
          %v1424 = vpack.c.b16 %v1392, %v1388
          %v1425 = vpack.c.b16 %v1393, %v1389
          %v1426 = vpack.c.b16 %v1394, %v1390
          %1459 = vmatprep.subr.bf16.mxu0 %v1396
          %1460 = vmatpush1.bf16.msra.mxu0 %v1395
          %1461 = vmatprep.subr.bf16.mxu0 %v1400
          %1462 = vmatpush1.bf16.msra.mxu0 %v1399
          %1463 = vmatprep.subr.bf16.mxu0 %v1404
          %1464 = vmatpush1.bf16.msra.mxu0 %v1403
          %1465 = vmatprep.subr.bf16.mxu0 %v1408
          %1466 = vmatpush1.bf16.msra.mxu0 %v1407
          %1467 = vmatprep.subr.bf16.mxu0 %v1412
          %1468 = vmatpush1.bf16.msra.mxu0 %v1411
          %1469 = vmatprep.subr.bf16.mxu0 %v1416
          %1470 = vmatpush1.bf16.msra.mxu0 %v1415
          %1471 = vmatprep.subr.bf16.mxu0 %v1420
          %1472 = vmatpush1.bf16.msra.mxu0 %v1419
          %1473 = vmatprep.subr.bf16.mxu0 %v1424
          %1474 = vmatpush1.bf16.msra.mxu0 %v1423
          %1475 = vmatprep.subr.bf16.mxu0 0
          %1476 = vmatpush1.bf16.msra.mxu0 0
          %1477 = vmatprep.subr.bf16.mxu0 0
          %1478 = vmatpush1.bf16.msra.mxu0 0
          %1479 = vmatprep.subr.bf16.mxu0 0
          %1480 = vmatpush1.bf16.msra.mxu0 0
          %1481 = vmatprep.subr.bf16.mxu0 0
          %1482 = vmatpush1.bf16.msra.mxu0 0
          %1483 = vmatprep.subr.bf16.mxu0 0
          %1484 = vmatpush1.bf16.msra.mxu0 0
          %1485 = vmatprep.subr.bf16.mxu0 0
          %1486 = vmatpush1.bf16.msra.mxu0 0
          %1487 = vmatprep.subr.bf16.mxu0 0
          %1488 = vmatpush1.bf16.msra.mxu0 0
          %1489 = vmatprep.subr.bf16.mxu0 0
          %1490 = vmatpush1.bf16.msra.mxu0 0
          %1491 = vmatprep.mubr.bf16.mxu0 0
          %1492 = vmatmul.mubr.bf16.gmra.mrb[0].mxu0 %v1266
          %v1493 = vpop.f32.mrb[0].mxu0
          %v1494 = vadd.f32 0.0, %v1493
          %v1495 = vpop.f32.mrb[0].mxu0
          %v1496 = vadd.f32 0.0, %v1495
          %v1497 = vpop.f32.mrb[0].mxu0
          %v1498 = vpop.f32.mrb[0].mxu0
          %1499 = vdwg.mxu0
          %1500 = vmatprep.subr.bf16.mxu0 %v1398
          %1501 = vmatpush1.bf16.msra.mxu0 %v1397
          %1502 = vmatprep.subr.bf16.mxu0 %v1402
          %1503 = vmatpush1.bf16.msra.mxu0 %v1401
          %1504 = vmatprep.subr.bf16.mxu0 %v1406
          %1505 = vmatpush1.bf16.msra.mxu0 %v1405
          %1506 = vmatprep.subr.bf16.mxu0 %v1410
          %1507 = vmatpush1.bf16.msra.mxu0 %v1409
          %1508 = vmatprep.subr.bf16.mxu0 %v1414
          %1509 = vmatpush1.bf16.msra.mxu0 %v1413
          %1510 = vmatprep.subr.bf16.mxu0 %v1418
          %1511 = vmatpush1.bf16.msra.mxu0 %v1417
          %1512 = vmatprep.subr.bf16.mxu0 %v1422
          %1513 = vmatpush1.bf16.msra.mxu0 %v1421
          %1514 = vmatprep.subr.bf16.mxu0 %v1426
          %1515 = vmatpush1.bf16.msra.mxu0 %v1425
          %1516 = vmatprep.subr.bf16.mxu0 0
          %1517 = vmatpush1.bf16.msra.mxu0 0
          %1518 = vmatprep.subr.bf16.mxu0 0
          %1519 = vmatpush1.bf16.msra.mxu0 0
          %1520 = vmatprep.subr.bf16.mxu0 0
          %1521 = vmatpush1.bf16.msra.mxu0 0
          %1522 = vmatprep.subr.bf16.mxu0 0
          %1523 = vmatpush1.bf16.msra.mxu0 0
          %1524 = vmatprep.subr.bf16.mxu0 0
          %1525 = vmatpush1.bf16.msra.mxu0 0
          %1526 = vmatprep.subr.bf16.mxu0 0
          %1527 = vmatpush1.bf16.msra.mxu0 0
          %1528 = vmatprep.subr.bf16.mxu0 0
          %1529 = vmatpush1.bf16.msra.mxu0 0
          %1530 = vmatprep.subr.bf16.mxu0 0
          %1531 = vmatpush1.bf16.msra.mxu0 0
          %1532 = vmatprep.mubr.bf16.mxu0 0
          %1533 = vmatmul.mubr.bf16.gmra.mrb[0].mxu0 %v1266
          %v1534 = vpop.f32.mrb[0].mxu0
          %v1535 = vadd.f32 0.0, %v1534
          %v1536 = vpop.f32.mrb[0].mxu0
          %v1537 = vadd.f32 0.0, %v1536
          %v1538 = vpop.f32.mrb[0].mxu0
          %v1539 = vpop.f32.mrb[0].mxu0
          %1540 = vdwg.mxu0
          %v1541 = vld [vmem:[%s488] sm:$0xff]
          %v1542 = vld [vmem:[%s488 + $0x8] sm:$0xff]
          %v1543 = vunpack.c.l.bf16 %v1541
          %v1544 = vunpack.c.h.bf16 %v1541
          %v1545 = vunpack.c.l.bf16 %v1542
          %v1546 = vunpack.c.h.bf16 %v1542
          %v1547 = vmul.f32 %v1494, %v1543
          %v1548 = vmul.f32 %v1496, %v1544
          %v1549 = vmul.f32 %v1535, %v1545
          %v1550 = vmul.f32 %v1537, %v1546
          %v1551 = vpack.c.bf16 %v1547, %v1547
          %v1552 = vpack.c.bf16 %v1548, %v1548
          %v1553 = vpack.c.bf16 %v1549, %v1549
          %v1554 = vpack.c.bf16 %v1550, %v1550
          %v1559 = vunpack.c.l.b16 %v1551
          %v1560 = vunpack.c.l.b16 %v1552
          %v1561 = vunpack.c.l.b16 %v1553
          %v1562 = vunpack.c.l.b16 %v1554
          %v1563 = vpack.c.b16 %v1560, %v1559
          %v1564 = vpack.c.b16 %v1562, %v1561
          %1567 = vst [vmem:[%s558] sm:$0xff] %v1563
          %1568 = vst [vmem:[%s558 + $0x8] sm:$0xff] %v1564
        $region92: #{tpu_custom_call.1} parent=55 // pred_fallthru
          _
        %s1569 = sand.u32 %s301, 1
        %s1570 = scalar_lea.sflag [#allocation6], %s1569
        %s1571 = sand.u32 %s301, 1
        %s1572 = smul.addr %s1571, 16
        %s1573 = scalar_lea.vmem [#allocation13], %s1572
        // Predicated region
        $region93: #{tpu_custom_call.1} parent=55 // pred_check
          %p1574 = pneg %p311
        $region94: #{tpu_custom_call.1} parent=55 // pred_check_branch
          %1576 = sbr.rel (%p1574) target = $region96
        $region95: #{tpu_custom_call.1} parent=55 // pred_region
          %s1577 = ssub.s32 %s38, 2
          %p1578 = scmp.gt.s32.totalorder %s1577, 0
          %s1579 = scalar_select %p1578, %s1577, 0
          %s1580 = smul.u32 4, %s1579
          %s1582 = ssub.s32 256, 256
          %1583 = vsyncadd %s1570, %s1582
          %s1584 = smul.addr %s37, 8
          %s1585 = sadd.s32 %s1580, %s1584
          %s1586 = smul.addr %s1585, 64
          %s1587 = scalar_lea.hbm %s9, %s1586
          %s1589 = sshll.u32 %s1573, 4
          %s1590 = int_to_ptr.vmem [resolvable:$true] %s1589
          %1592 = dma.vmem_to_hbm [thread:$0]  %s1590, 256, %s1587, %s1570
        $region96: #{tpu_custom_call.1} parent=55 // pred_fallthru
          _
        // Predicated region
        $region97: #{tpu_custom_call.1} parent=55 // pred_check
          %p1593 = pneg %p337
        $region98: #{tpu_custom_call.1} parent=55 // pred_check_branch
          %1595 = sbr.rel (%p1593) target = $region100
        $region99: #{tpu_custom_call.1} parent=55 // pred_region
          %s1597 = ssub.s32 128, 128
          %1598 = vsyncadd [#allocation15], %s1597
          %s1599 = smul.addr %s37, 128
          %s1600 = scalar_lea.hbm %s10, %s1599
          %s1602 = sshll.u32 [#allocation14], 4
          %s1603 = int_to_ptr.vmem [resolvable:$true] %s1602
          %1605 = dma.vmem_to_hbm [thread:$0]  %s1603, 128, %s1600, [#allocation15]
        $region100: #{tpu_custom_call.1} parent=55 // pred_fallthru
          _
        // Predicated region
        $region101: #{tpu_custom_call.1} parent=55 // pred_check
          %p1606 = pneg %p337
        $region102: #{tpu_custom_call.1} parent=55 // pred_check_branch
          %1608 = sbr.rel (%p1606) target = $region104
        $region103: #{tpu_custom_call.1} parent=55 // pred_region
          %1609 = dma.done [#allocation15], 128
        $region104: #{tpu_custom_call.1} parent=55 // pred_fallthru
          _
      $region56: #{tpu_custom_call.1} parent=5 // pred_fallthru
        _
      %p1610 = scmp.le.s32.totalorder 2, %s28
      // Predicated region
      $region105: #{tpu_custom_call.1} parent=5 // pred_check
        %p1611 = pneg %p1610
      $region106: #{tpu_custom_call.1} parent=5 // pred_check_branch
        %1613 = sbr.rel (%p1611) target = $region108
      $region107: #{tpu_custom_call.1} parent=5 // pred_region
        %s1614 = ssub.s32 %s28, 2
        // Predicated region
        $region109: #{tpu_custom_call.1} parent=107 // pred_check
          %p1615 = pneg %p317
        $region110: #{tpu_custom_call.1} parent=107 // pred_check_branch
          %1617 = sbr.rel (%p1615) target = $region112
        $region111: #{tpu_custom_call.1} parent=107 // pred_region
          %s1618 = sand.u32 %s302, 1
          %s1619 = scalar_lea.sflag [#allocation6], %s1618
          %s1620 = sand.u32 %s302, 1
          %s1621 = smul.addr %s1620, 16
          %s1622 = scalar_lea.vmem [#allocation13], %s1621
          %1623 = dma.done %s1619, 256
        $region112: #{tpu_custom_call.1} parent=107 // pred_fallthru
          _
      $region108: #{tpu_custom_call.1} parent=5 // pred_fallthru
        _
    $region6: #{tpu_custom_call.1} parent=1 // loop_footer
      %s32 = sadd.s32 1, %s28
    $region7: #{tpu_custom_call.1} parent=1 // loop_footer_branch
      %27 = sbr.rel target = $region3
    $region8: #{tpu_custom_call.1} parent=1 // loop_exit
      _
    %1624 = vsyncpa [#allocation5], 1
    %s1625 = scalar_lea.sflag [#allocation5], 1
    %1626 = vsyncpa %s1625, 1
    %1627 = vsyncpa [#allocation8], 1
    %s1628 = scalar_lea.sflag [#allocation8], 1
    %1629 = vsyncpa %s1628, 1
    %1630 = vsyncpa [#allocation11], 1
    %1631 = vsyncpa [#allocation6], 1
    %s1632 = scalar_lea.sflag [#allocation6], 1
    %1633 = vsyncpa %s1632, 1
    %1634 = vsyncpa [#allocation15], 1

</llo_original>
